<compile_context>
chip_gen: v7x
topology: tpu7x:2x2x1
jax: 0.10.0
libtpu: 0.0.40
codegen_flags: <defaults>
</compile_context>

<pallas_src>
import math
from functools import partial

import jax
import jax.numpy as jnp
from jax.experimental import pallas as pl
from jax.experimental.pallas import tpu as pltpu

EPS = 1e-12  # LayerNorm variance epsilon (matches the torch module)

# Indices of the matmul weight matrices inside the flat params list
# (wq, wk, wv, wso, wint, wout, wd1, wd2).  Cast to bf16 host-side.
_MATMUL_WEIGHT_IDX = (2, 4, 6, 8, 12, 14, 18, 20)


def _layer_norm(x, g_ref, b_ref):
    u = jnp.mean(x, axis=-1, keepdims=True)
    s = jnp.mean((x - u) ** 2, axis=-1, keepdims=True)
    xn = (x - u) / jnp.sqrt(s + EPS)
    return g_ref[0] * xn + b_ref[0]


def _linear(x_f32, w_ref, b_ref):
    # bf16 x bf16 MXU dot with f32 accumulation; bias add in f32.
    return jnp.dot(x_f32.astype(jnp.bfloat16), w_ref[...],
                   preferred_element_type=jnp.float32) + b_ref[0]


def encoder_d2c_kernel(num_heads,
                       cell_ref, drug_ref,
                       ln_g, ln_b,
                       wq, bq, wk, bk, wv, bv,
                       wso, bso, so_g, so_b,
                       wint, bint,
                       wout, bout, out_g, out_b,
                       wd1, bd1, wd2, bd2,
                       cell_out_ref, drug_out_ref,
                       cell_probs_ref, drug_probs_ref):
    S, H = cell_ref.shape[1], cell_ref.shape[2]
    hd = H // num_heads
    scale = 1.0 / math.sqrt(hd)

    cell = cell_ref[0].astype(jnp.float32)
    drug = drug_ref[0].astype(jnp.float32)

    # cell_1 = self.LayerNorm(cell)   (outer, shared LayerNorm)
    cell_1 = _layer_norm(cell, ln_g, ln_b)

    # ---- fused Q/K/V projections across both attention directions ----
    # rows [0:S]  -> cell_1 (query of cell-direction, key/value of drug-direction)
    # rows [S:2S] -> drug   (query of drug-direction, key/value of cell-direction)
    ab = jnp.concatenate([cell_1, drug], axis=0)          # (2S, H)
    q_all = _linear(ab, wq, bq)                           # (2S, H) f32
    k_all = _linear(ab, wk, bk)
    v_all = _linear(ab, wv, bv)

    def to_heads(x):                                      # (2S, H) -> (NH, 2S, hd) bf16
        xh = jnp.transpose(x.reshape(2 * S, num_heads, hd), (1, 0, 2))
        return xh.astype(jnp.bfloat16)

    qh, kh, vh = to_heads(q_all), to_heads(k_all), to_heads(v_all)

    def attention(q, k, v, probs_ref):
        # q, k, v: (NH, S, hd) bf16 — head-batched dots, no explicit K^T.
        scores = jnp.einsum('hqd,hkd->hqk', q, k,
                            preferred_element_type=jnp.float32) * scale
        m = jnp.max(scores, axis=-1, keepdims=True)
        e = jnp.exp(scores - m)
        p = e * pl.reciprocal(jnp.sum(e, axis=-1, keepdims=True), approx=True)
        probs_ref[0] = p.astype(probs_ref.dtype)          # single dense store per direction
        return jnp.einsum('hqk,hkd->hqd', p.astype(jnp.bfloat16), v,
                          preferred_element_type=jnp.float32)   # (NH, S, hd)

    # Attention_CA: same CrossAttention module applied in both directions.
    # dropout on attention probs / hidden states is identity (eval mode).
    ctx_c = attention(qh[:, :S], kh[:, S:], vh[:, S:], cell_probs_ref)
    ctx_d = attention(qh[:, S:], kh[:, :S], vh[:, :S], drug_probs_ref)

    # ---- fused SelfOutput (dense + residual LayerNorm) across both directions ----
    ctx = jnp.concatenate([ctx_c, ctx_d], axis=1)         # (NH, 2S, hd)
    so_in = jnp.transpose(ctx, (1, 0, 2)).reshape(2 * S, H)
    attn_out = _layer_norm(_linear(so_in, wso, bso) + ab, so_g, so_b)
    cell_attn, drug_attn = attn_out[:S], attn_out[S:]

    # --- cell branch ---
    cell_2 = cell_1 + cell_attn
    cell_3 = _layer_norm(cell_2, ln_g, ln_b)              # shared outer LayerNorm again
    cell_4 = _linear(jnp.maximum(_linear(cell_3, wd1, bd1), 0.0), wd2, bd2)
    cell_out_ref[0] = (cell_2 + cell_4).astype(cell_out_ref.dtype)

    # --- drug branch ---
    drug_int = jnp.maximum(_linear(drug_attn, wint, bint), 0.0)
    drug_out = _layer_norm(_linear(drug_int, wout, bout) + drug_attn, out_g, out_b)
    drug_out_ref[0] = drug_out.astype(drug_out_ref.dtype)


def encoder_d2c(cell, drug, params, num_heads):
    B, S, H = cell.shape
    assert H % num_heads == 0, "hidden size must be a multiple of num_heads"

    # Matmul weights -> bf16 (halves weight DMA bytes, bf16 MXU operands);
    # biases / LayerNorm params stay f32.
    params = [p.astype(jnp.bfloat16) if i in _MATMUL_WEIGHT_IDX
              else jnp.asarray(p, jnp.float32)
              for i, p in enumerate(params)]

    seq_spec = pl.BlockSpec((1, S, H), lambda b: (b, 0, 0))
    probs_spec = pl.BlockSpec((1, num_heads, S, S), lambda b: (b, 0, 0, 0))

    # Constant-index weight blocks: the pipeliner sees the revisit and only
    # fetches them once across the (tiny) batch grid.
    def full_spec(p):
        return pl.BlockSpec(p.shape, lambda b, nd=p.ndim: (0,) * nd)

    in_specs = [seq_spec, seq_spec] + [full_spec(p) for p in params]
    out_shapes = (
        jax.ShapeDtypeStruct((B, S, H), jnp.float32),               # cell_layer_output
        jax.ShapeDtypeStruct((B, S, H), jnp.float32),               # drug_layer_output
        jax.ShapeDtypeStruct((B, num_heads, S, S), jnp.float32),    # cell_attention_probs_0
        jax.ShapeDtypeStruct((B, num_heads, S, S), jnp.float32),    # drug_attention_probs_0
    )
    out_specs = [seq_spec, seq_spec, probs_spec, probs_spec]

    return pl.pallas_call(
        partial(encoder_d2c_kernel, num_heads),
        out_shape=out_shapes,
        grid_spec=pltpu.PrefetchScalarGridSpec(
            num_scalar_prefetch=0,
            grid=(B,),
            in_specs=in_specs,
            out_specs=out_specs,
        ),
        compiler_params=pltpu.CompilerParams(
            dimension_semantics=("parallel",)),   # one batch per TensorCore on v7x
    )(cell, drug, *params)


def reference(cell, drug, params, num_heads):
    """Pure-JAX (f32) reference mirroring the torch forward (eval mode)."""
    (ln_g, ln_b, wq, bq, wk, bk, wv, bv, wso, bso, so_g, so_b,
     wint, bint, wout, bout, out_g, out_b, wd1, bd1, wd2, bd2) = params
    H = cell.shape[-1]
    hd = H // num_heads

    def ln(x, g, b):
        u = jnp.mean(x, -1, keepdims=True)
        s = jnp.mean((x - u) ** 2, -1, keepdims=True)
        return g[0] * (x - u) / jnp.sqrt(s + EPS) + b[0]

    def lin(x, w, b):
        return x @ w + b[0]

    def attn(a, b):
        q, k, v = lin(a, wq, bq), lin(b, wk, bk), lin(b, wv, bv)
        Bx, Sx, _ = a.shape

        def split(x):
            return x.reshape(Bx, -1, num_heads, hd).transpose(0, 2, 1, 3)

        qh, kh, vh = split(q), split(k), split(v)
        scores = jnp.einsum('bhqd,bhkd->bhqk', qh, kh) / math.sqrt(hd)
        p = jax.nn.softmax(scores, -1)
        ctx = jnp.einsum('bhqk,bhkd->bhqd', p, vh).transpose(0, 2, 1, 3).reshape(Bx, -1, H)
        return ctx, p

    cell_1 = ln(cell, ln_g, ln_b)
    cs, cp = attn(cell_1, drug)
    ds, dp = attn(drug, cell_1)
    cell_attn = ln(lin(cs, wso, bso) + cell_1, so_g, so_b)
    drug_attn = ln(lin(ds, wso, bso) + drug, so_g, so_b)
    cell_2 = cell_1 + cell_attn
    cell_3 = ln(cell_2, ln_g, ln_b)
    cell_4 = lin(jnp.maximum(lin(cell_3, wd1, bd1), 0.0), wd2, bd2)
    cell_out = cell_2 + cell_4
    drug_int = jnp.maximum(lin(drug_attn, wint, bint), 0.0)
    drug_out = ln(lin(drug_int, wout, bout) + drug_attn, out_g, out_b)
    return cell_out, drug_out, cp, dp


if __name__ == "__main__":
    B, S, H, I, NH = 2, 8, 128, 256, 4   # batch, seq, hidden, intermediate, heads

    key = jax.random.PRNGKey(0)
    ks = jax.random.split(key, 28)

    def w(k, shape, scale=0.05):
        return jax.random.normal(k, shape, jnp.float32) * scale

    params = [
        1.0 + 0.1 * jax.random.normal(ks[20], (1, H), jnp.float32),   # outer LayerNorm gamma
        0.05 * jax.random.normal(ks[21], (1, H), jnp.float32),        # outer LayerNorm beta
        w(ks[0], (H, H)), w(ks[1], (1, H)),                           # query W, b
        w(ks[2], (H, H)), w(ks[3], (1, H)),                           # key   W, b
        w(ks[4], (H, H)), w(ks[5], (1, H)),                           # value W, b
        w(ks[6], (H, H)), w(ks[7], (1, H)),                           # SelfOutput.dense W, b
        1.0 + 0.1 * jax.random.normal(ks[22], (1, H), jnp.float32),   # SelfOutput.LayerNorm gamma
        0.05 * jax.random.normal(ks[23], (1, H), jnp.float32),        # SelfOutput.LayerNorm beta
        w(ks[8], (H, I)), w(ks[9], (1, I)),                           # Intermediate.dense W, b
        w(ks[10], (I, H)), w(ks[11], (1, H)),                         # Output.dense W, b
        1.0 + 0.1 * jax.random.normal(ks[24], (1, H), jnp.float32),   # Output.LayerNorm gamma
        0.05 * jax.random.normal(ks[25], (1, H), jnp.float32),        # Output.LayerNorm beta
        w(ks[12], (H, I)), w(ks[13], (1, I)),                         # dense[0] W, b
        w(ks[14], (I, H)), w(ks[15], (1, H)),                         # dense[3] W, b
    ]

    cell = jax.random.normal(ks[16], (B, S, H), jnp.float32)
    drug = jax.random.normal(ks[17], (B, S, H), jnp.float32)

    outs = encoder_d2c(cell, drug, params, NH)
    jax.block_until_ready(outs)

    refs = reference(cell, drug, params, NH)
    # Tolerance accounts for bf16 MXU operands (f32 accumulation) vs f32 ref.
    for o, r in zip(outs, refs):
        err = float(jnp.max(jnp.abs(o - r)))
        assert jnp.allclose(o, r, rtol=2e-2, atol=2e-2), f"max abs err {err}"

    print("KERNEL_OK")
</pallas_src>

<mosaic_0001>
module attributes {stable_mosaic.version = 11 : i64} {
  func.func @encoder_d2c_kernel(%arg0: i32, %arg1: memref<1x8x128xf32, #tpu.memory_space<vmem>>, %arg2: memref<1x8x128xf32, #tpu.memory_space<vmem>>, %arg3: memref<1x128xf32, #tpu.memory_space<vmem>>, %arg4: memref<1x128xf32, #tpu.memory_space<vmem>>, %arg5: memref<128x128xbf16, #tpu.memory_space<vmem>>, %arg6: memref<1x128xf32, #tpu.memory_space<vmem>>, %arg7: memref<128x128xbf16, #tpu.memory_space<vmem>>, %arg8: memref<1x128xf32, #tpu.memory_space<vmem>>, %arg9: memref<128x128xbf16, #tpu.memory_space<vmem>>, %arg10: memref<1x128xf32, #tpu.memory_space<vmem>>, %arg11: memref<128x128xbf16, #tpu.memory_space<vmem>>, %arg12: memref<1x128xf32, #tpu.memory_space<vmem>>, %arg13: memref<1x128xf32, #tpu.memory_space<vmem>>, %arg14: memref<1x128xf32, #tpu.memory_space<vmem>>, %arg15: memref<128x256xbf16, #tpu.memory_space<vmem>>, %arg16: memref<1x256xf32, #tpu.memory_space<vmem>>, %arg17: memref<256x128xbf16, #tpu.memory_space<vmem>>, %arg18: memref<1x128xf32, #tpu.memory_space<vmem>>, %arg19: memref<1x128xf32, #tpu.memory_space<vmem>>, %arg20: memref<1x128xf32, #tpu.memory_space<vmem>>, %arg21: memref<128x256xbf16, #tpu.memory_space<vmem>>, %arg22: memref<1x256xf32, #tpu.memory_space<vmem>>, %arg23: memref<256x128xbf16, #tpu.memory_space<vmem>>, %arg24: memref<1x128xf32, #tpu.memory_space<vmem>>, %arg25: memref<1x8x128xf32, #tpu.memory_space<vmem>>, %arg26: memref<1x8x128xf32, #tpu.memory_space<vmem>>, %arg27: memref<1x4x8x8xf32, #tpu.memory_space<vmem>>, %arg28: memref<1x4x8x8xf32, #tpu.memory_space<vmem>>) attributes {dimension_semantics = [#tpu.dimension_semantics<parallel>], iteration_bounds = array<i64: 2>, scalar_prefetch = 0 : i64, scratch_operands = 0 : i64, tpu.core_type = #tpu.core_type<tc>, window_params = [{transform_indices = @transform_0, window_bounds = array<i64: 1, 8, 128>}, {transform_indices = @transform_1, window_bounds = array<i64: 1, 8, 128>}, {pipeline_mode = #tpu.pipeline_mode<synchronous>, transform_indices = @transform_2, window_bounds = array<i64: 1, 128>}, {pipeline_mode = #tpu.pipeline_mode<synchronous>, transform_indices = @transform_3, window_bounds = array<i64: 1, 128>}, {pipeline_mode = #tpu.pipeline_mode<synchronous>, transform_indices = @transform_4, window_bounds = array<i64: 128, 128>}, {pipeline_mode = #tpu.pipeline_mode<synchronous>, transform_indices = @transform_5, window_bounds = array<i64: 1, 128>}, {pipeline_mode = #tpu.pipeline_mode<synchronous>, transform_indices = @transform_6, window_bounds = array<i64: 128, 128>}, {pipeline_mode = #tpu.pipeline_mode<synchronous>, transform_indices = @transform_7, window_bounds = array<i64: 1, 128>}, {pipeline_mode = #tpu.pipeline_mode<synchronous>, transform_indices = @transform_8, window_bounds = array<i64: 128, 128>}, {pipeline_mode = #tpu.pipeline_mode<synchronous>, transform_indices = @transform_9, window_bounds = array<i64: 1, 128>}, {pipeline_mode = #tpu.pipeline_mode<synchronous>, transform_indices = @transform_10, window_bounds = array<i64: 128, 128>}, {pipeline_mode = #tpu.pipeline_mode<synchronous>, transform_indices = @transform_11, window_bounds = array<i64: 1, 128>}, {pipeline_mode = #tpu.pipeline_mode<synchronous>, transform_indices = @transform_12, window_bounds = array<i64: 1, 128>}, {pipeline_mode = #tpu.pipeline_mode<synchronous>, transform_indices = @transform_13, window_bounds = array<i64: 1, 128>}, {pipeline_mode = #tpu.pipeline_mode<synchronous>, transform_indices = @transform_14, window_bounds = array<i64: 128, 256>}, {pipeline_mode = #tpu.pipeline_mode<synchronous>, transform_indices = @transform_15, window_bounds = array<i64: 1, 256>}, {pipeline_mode = #tpu.pipeline_mode<synchronous>, transform_indices = @transform_16, window_bounds = array<i64: 256, 128>}, {pipeline_mode = #tpu.pipeline_mode<synchronous>, transform_indices = @transform_17, window_bounds = array<i64: 1, 128>}, {pipeline_mode = #tpu.pipeline_mode<synchronous>, transform_indices = @transform_18, window_bounds = array<i64: 1, 128>}, {pipeline_mode = #tpu.pipeline_mode<synchronous>, transform_indices = @transform_19, window_bounds = array<i64: 1, 128>}, {pipeline_mode = #tpu.pipeline_mode<synchronous>, transform_indices = @transform_20, window_bounds = array<i64: 128, 256>}, {pipeline_mode = #tpu.pipeline_mode<synchronous>, transform_indices = @transform_21, window_bounds = array<i64: 1, 256>}, {pipeline_mode = #tpu.pipeline_mode<synchronous>, transform_indices = @transform_22, window_bounds = array<i64: 256, 128>}, {pipeline_mode = #tpu.pipeline_mode<synchronous>, transform_indices = @transform_23, window_bounds = array<i64: 1, 128>}, {transform_indices = @transform_24, window_bounds = array<i64: 1, 8, 128>}, {transform_indices = @transform_25, window_bounds = array<i64: 1, 8, 128>}, {transform_indices = @transform_26, window_bounds = array<i64: 1, 4, 8, 8>}, {transform_indices = @transform_27, window_bounds = array<i64: 1, 4, 8, 8>}]} {
    %c0 = arith.constant 0 : index
    %c0_0 = arith.constant 0 : index
    %c0_1 = arith.constant 0 : index
    %0 = vector.load %arg1[%c0, %c0_0, %c0_1] : memref<1x8x128xf32, #tpu.memory_space<vmem>>, vector<1x8x128xf32>
    %1 = vector.shape_cast %0 : vector<1x8x128xf32> to vector<8x128xf32>
    %c0_2 = arith.constant 0 : index
    %c0_3 = arith.constant 0 : index
    %c0_4 = arith.constant 0 : index
    %2 = vector.load %arg2[%c0_2, %c0_3, %c0_4] : memref<1x8x128xf32, #tpu.memory_space<vmem>>, vector<1x8x128xf32>
    %3 = vector.shape_cast %2 : vector<1x8x128xf32> to vector<8x128xf32>
    %cst = arith.constant dense<0.000000e+00> : vector<8xf32>
    %4 = vector.multi_reduction <add>, %1, %cst [1] : vector<8x128xf32> to vector<8xf32>
    %5 = vector.shape_cast %4 : vector<8xf32> to vector<8x1xf32>
    %cst_5 = arith.constant 1.280000e+02 : f32
    %6 = vector.broadcast %cst_5 : f32 to vector<8x1xf32>
    %7 = arith.divf %5, %6 : vector<8x1xf32>
    %8 = vector.broadcast %7 : vector<8x1xf32> to vector<8x128xf32>
    %9 = arith.subf %1, %8 : vector<8x128xf32>
    %10 = arith.mulf %9, %9 : vector<8x128xf32>
    %cst_6 = arith.constant dense<0.000000e+00> : vector<8xf32>
    %11 = vector.multi_reduction <add>, %10, %cst_6 [1] : vector<8x128xf32> to vector<8xf32>
    %12 = vector.shape_cast %11 : vector<8xf32> to vector<8x1xf32>
    %cst_7 = arith.constant 1.280000e+02 : f32
    %13 = vector.broadcast %cst_7 : f32 to vector<8x1xf32>
    %14 = arith.divf %12, %13 : vector<8x1xf32>
    %15 = vector.broadcast %7 : vector<8x1xf32> to vector<8x128xf32>
    %16 = arith.subf %1, %15 : vector<8x128xf32>
    %cst_8 = arith.constant 9.99999996E-13 : f32
    %17 = vector.broadcast %cst_8 : f32 to vector<8x1xf32>
    %18 = arith.addf %14, %17 : vector<8x1xf32>
    %19 = math.sqrt %18 : vector<8x1xf32>
    %20 = vector.broadcast %19 : vector<8x1xf32> to vector<8x128xf32>
    %21 = arith.divf %16, %20 : vector<8x128xf32>
    %c0_9 = arith.constant 0 : index
    %c0_10 = arith.constant 0 : index
    %22 = vector.load %arg3[%c0_9, %c0_10] : memref<1x128xf32, #tpu.memory_space<vmem>>, vector<1x128xf32>
    %23 = vector.shape_cast %22 : vector<1x128xf32> to vector<128xf32>
    %24 = vector.shape_cast %23 : vector<128xf32> to vector<1x128xf32>
    %25 = vector.broadcast %24 : vector<1x128xf32> to vector<8x128xf32>
    %26 = arith.mulf %25, %21 : vector<8x128xf32>
    %c0_11 = arith.constant 0 : index
    %c0_12 = arith.constant 0 : index
    %27 = vector.load %arg4[%c0_11, %c0_12] : memref<1x128xf32, #tpu.memory_space<vmem>>, vector<1x128xf32>
    %28 = vector.shape_cast %27 : vector<1x128xf32> to vector<128xf32>
    %29 = vector.shape_cast %28 : vector<128xf32> to vector<1x128xf32>
    %30 = vector.broadcast %29 : vector<1x128xf32> to vector<8x128xf32>
    %31 = arith.addf %26, %30 : vector<8x128xf32>
    %32 = tpu.concatenate %31, %3 in 0 : vector<8x128xf32>, vector<8x128xf32> -> vector<16x128xf32>
    %33 = arith.truncf %32 : vector<16x128xf32> to vector<16x128xbf16>
    %c0_13 = arith.constant 0 : index
    %c0_14 = arith.constant 0 : index
    %34 = vector.load %arg5[%c0_13, %c0_14] : memref<128x128xbf16, #tpu.memory_space<vmem>>, vector<128x128xbf16>
    %cst_15 = arith.constant dense<0.000000e+00> : vector<16x128xf32>
    %35 = tpu.matmul %33, %34, %cst_15 {dimension_numbers = #tpu.dot_dimension_numbers<[1], [0], [0], [1], [0, 0, 1, 1], [], []>} : vector<16x128xbf16>, vector<128x128xbf16>, vector<16x128xf32> -> vector<16x128xf32>
    %c0_16 = arith.constant 0 : index
    %c0_17 = arith.constant 0 : index
    %36 = vector.load %arg6[%c0_16, %c0_17] : memref<1x128xf32, #tpu.memory_space<vmem>>, vector<1x128xf32>
    %37 = vector.shape_cast %36 : vector<1x128xf32> to vector<128xf32>
    %38 = vector.shape_cast %37 : vector<128xf32> to vector<1x128xf32>
    %39 = vector.broadcast %38 : vector<1x128xf32> to vector<16x128xf32>
    %40 = arith.addf %35, %39 : vector<16x128xf32>
    %41 = arith.truncf %32 : vector<16x128xf32> to vector<16x128xbf16>
    %c0_18 = arith.constant 0 : index
    %c0_19 = arith.constant 0 : index
    %42 = vector.load %arg7[%c0_18, %c0_19] : memref<128x128xbf16, #tpu.memory_space<vmem>>, vector<128x128xbf16>
    %cst_20 = arith.constant dense<0.000000e+00> : vector<16x128xf32>
    %43 = tpu.matmul %41, %42, %cst_20 {dimension_numbers = #tpu.dot_dimension_numbers<[1], [0], [0], [1], [0, 0, 1, 1], [], []>} : vector<16x128xbf16>, vector<128x128xbf16>, vector<16x128xf32> -> vector<16x128xf32>
    %c0_21 = arith.constant 0 : index
    %c0_22 = arith.constant 0 : index
    %44 = vector.load %arg8[%c0_21, %c0_22] : memref<1x128xf32, #tpu.memory_space<vmem>>, vector<1x128xf32>
    %45 = vector.shape_cast %44 : vector<1x128xf32> to vector<128xf32>
    %46 = vector.shape_cast %45 : vector<128xf32> to vector<1x128xf32>
    %47 = vector.broadcast %46 : vector<1x128xf32> to vector<16x128xf32>
    %48 = arith.addf %43, %47 : vector<16x128xf32>
    %49 = arith.truncf %32 : vector<16x128xf32> to vector<16x128xbf16>
    %c0_23 = arith.constant 0 : index
    %c0_24 = arith.constant 0 : index
    %50 = vector.load %arg9[%c0_23, %c0_24] : memref<128x128xbf16, #tpu.memory_space<vmem>>, vector<128x128xbf16>
    %cst_25 = arith.constant dense<0.000000e+00> : vector<16x128xf32>
    %51 = tpu.matmul %49, %50, %cst_25 {dimension_numbers = #tpu.dot_dimension_numbers<[1], [0], [0], [1], [0, 0, 1, 1], [], []>} : vector<16x128xbf16>, vector<128x128xbf16>, vector<16x128xf32> -> vector<16x128xf32>
    %c0_26 = arith.constant 0 : index
    %c0_27 = arith.constant 0 : index
    %52 = vector.load %arg10[%c0_26, %c0_27] : memref<1x128xf32, #tpu.memory_space<vmem>>, vector<1x128xf32>
    %53 = vector.shape_cast %52 : vector<1x128xf32> to vector<128xf32>
    %54 = vector.shape_cast %53 : vector<128xf32> to vector<1x128xf32>
    %55 = vector.broadcast %54 : vector<1x128xf32> to vector<16x128xf32>
    %56 = arith.addf %51, %55 : vector<16x128xf32>
    %57 = vector.shape_cast %40 : vector<16x128xf32> to vector<16x4x32xf32>
    %58 = tpu.transpose %57, [1, 0, 2] : vector<16x4x32xf32> -> vector<4x16x32xf32>
    %59 = arith.truncf %58 : vector<4x16x32xf32> to vector<4x16x32xbf16>
    %60 = vector.shape_cast %48 : vector<16x128xf32> to vector<16x4x32xf32>
    %61 = tpu.transpose %60, [1, 0, 2] : vector<16x4x32xf32> -> vector<4x16x32xf32>
    %62 = arith.truncf %61 : vector<4x16x32xf32> to vector<4x16x32xbf16>
    %63 = vector.shape_cast %56 : vector<16x128xf32> to vector<16x4x32xf32>
    %64 = tpu.transpose %63, [1, 0, 2] : vector<16x4x32xf32> -> vector<4x16x32xf32>
    %65 = arith.truncf %64 : vector<4x16x32xf32> to vector<4x16x32xbf16>
    %66 = vector.extract_strided_slice %59 {offsets = [0, 0, 0], sizes = [4, 8, 32], strides = [1, 1, 1]} : vector<4x16x32xbf16> to vector<4x8x32xbf16>
    %67 = vector.extract_strided_slice %62 {offsets = [0, 8, 0], sizes = [4, 8, 32], strides = [1, 1, 1]} : vector<4x16x32xbf16> to vector<4x8x32xbf16>
    %68 = vector.extract_strided_slice %65 {offsets = [0, 8, 0], sizes = [4, 8, 32], strides = [1, 1, 1]} : vector<4x16x32xbf16> to vector<4x8x32xbf16>
    "tpu.trace_start"() <{level = 10 : i32, message = "hqd,hkd->hqk"}> : () -> ()
    %cst_28 = arith.constant dense<0.000000e+00> : vector<4x8x8xf32>
    %69 = tpu.matmul %66, %67, %cst_28 {dimension_numbers = #tpu.dot_dimension_numbers<[2], [2], [1], [1], [0, 0, 0, 1, 1, 1], [0], [0]>} : vector<4x8x32xbf16>, vector<4x8x32xbf16>, vector<4x8x8xf32> -> vector<4x8x8xf32>
    "tpu.trace_stop"() : () -> ()
    %cst_29 = arith.constant 0.176776692 : f32
    %70 = vector.broadcast %cst_29 : f32 to vector<4x8x8xf32>
    %71 = arith.mulf %69, %70 : vector<4x8x8xf32>
    %cst_30 = arith.constant dense<0xFF800000> : vector<4x8xf32>
    %72 = vector.multi_reduction <maximumf>, %71, %cst_30 [2] : vector<4x8x8xf32> to vector<4x8xf32>
    %73 = vector.shape_cast %72 : vector<4x8xf32> to vector<4x8x1xf32>
    %74 = vector.broadcast %73 : vector<4x8x1xf32> to vector<4x8x8xf32>
    %75 = arith.subf %71, %74 : vector<4x8x8xf32>
    %76 = math.exp %75 : vector<4x8x8xf32>
    %cst_31 = arith.constant dense<0.000000e+00> : vector<4x8xf32>
    %77 = vector.multi_reduction <add>, %76, %cst_31 [2] : vector<4x8x8xf32> to vector<4x8xf32>
    %78 = vector.shape_cast %77 : vector<4x8xf32> to vector<4x8x1xf32>
    %79 = tpu.reciprocal %78 {approx = true} : vector<4x8x1xf32> -> vector<4x8x1xf32>
    %80 = vector.broadcast %79 : vector<4x8x1xf32> to vector<4x8x8xf32>
    %81 = arith.mulf %76, %80 : vector<4x8x8xf32>
    %c0_32 = arith.constant 0 : index
    %c0_33 = arith.constant 0 : index
    %c0_34 = arith.constant 0 : index
    %c0_35 = arith.constant 0 : index
    %82 = vector.load %arg27[%c0_32, %c0_33, %c0_34, %c0_35] : memref<1x4x8x8xf32, #tpu.memory_space<vmem>>, vector<1x4x8x8xf32>
    %83 = vector.shape_cast %82 : vector<1x4x8x8xf32> to vector<4x8x8xf32>
    %84 = vector.shape_cast %81 : vector<4x8x8xf32> to vector<1x4x8x8xf32>
    tpu.vector_store %arg27[%c0_32, %c0_33, %c0_34, %c0_35], %84 {strides = array<i32>} : memref<1x4x8x8xf32, #tpu.memory_space<vmem>>, vector<1x4x8x8xf32>,
    %85 = arith.truncf %81 : vector<4x8x8xf32> to vector<4x8x8xbf16>
    "tpu.trace_start"() <{level = 10 : i32, message = "hqk,hkd->hqd"}> : () -> ()
    %cst_36 = arith.constant dense<0.000000e+00> : vector<4x8x32xf32>
    %86 = tpu.matmul %85, %68, %cst_36 {dimension_numbers = #tpu.dot_dimension_numbers<[2], [1], [1], [2], [0, 0, 0, 1, 1, 2], [0], [0]>} : vector<4x8x8xbf16>, vector<4x8x32xbf16>, vector<4x8x32xf32> -> vector<4x8x32xf32>
    "tpu.trace_stop"() : () -> ()
    %87 = vector.extract_strided_slice %59 {offsets = [0, 8, 0], sizes = [4, 8, 32], strides = [1, 1, 1]} : vector<4x16x32xbf16> to vector<4x8x32xbf16>
    %88 = vector.extract_strided_slice %62 {offsets = [0, 0, 0], sizes = [4, 8, 32], strides = [1, 1, 1]} : vector<4x16x32xbf16> to vector<4x8x32xbf16>
    %89 = vector.extract_strided_slice %65 {offsets = [0, 0, 0], sizes = [4, 8, 32], strides = [1, 1, 1]} : vector<4x16x32xbf16> to vector<4x8x32xbf16>
    "tpu.trace_start"() <{level = 10 : i32, message = "hqd,hkd->hqk"}> : () -> ()
    %cst_37 = arith.constant dense<0.000000e+00> : vector<4x8x8xf32>
    %90 = tpu.matmul %87, %88, %cst_37 {dimension_numbers = #tpu.dot_dimension_numbers<[2], [2], [1], [1], [0, 0, 0, 1, 1, 1], [0], [0]>} : vector<4x8x32xbf16>, vector<4x8x32xbf16>, vector<4x8x8xf32> -> vector<4x8x8xf32>
    "tpu.trace_stop"() : () -> ()
    %cst_38 = arith.constant 0.176776692 : f32
    %91 = vector.broadcast %cst_38 : f32 to vector<4x8x8xf32>
    %92 = arith.mulf %90, %91 : vector<4x8x8xf32>
    %cst_39 = arith.constant dense<0xFF800000> : vector<4x8xf32>
    %93 = vector.multi_reduction <maximumf>, %92, %cst_39 [2] : vector<4x8x8xf32> to vector<4x8xf32>
    %94 = vector.shape_cast %93 : vector<4x8xf32> to vector<4x8x1xf32>
    %95 = vector.broadcast %94 : vector<4x8x1xf32> to vector<4x8x8xf32>
    %96 = arith.subf %92, %95 : vector<4x8x8xf32>
    %97 = math.exp %96 : vector<4x8x8xf32>
    %cst_40 = arith.constant dense<0.000000e+00> : vector<4x8xf32>
    %98 = vector.multi_reduction <add>, %97, %cst_40 [2] : vector<4x8x8xf32> to vector<4x8xf32>
    %99 = vector.shape_cast %98 : vector<4x8xf32> to vector<4x8x1xf32>
    %100 = tpu.reciprocal %99 {approx = true} : vector<4x8x1xf32> -> vector<4x8x1xf32>
    %101 = vector.broadcast %100 : vector<4x8x1xf32> to vector<4x8x8xf32>
    %102 = arith.mulf %97, %101 : vector<4x8x8xf32>
    %c0_41 = arith.constant 0 : index
    %c0_42 = arith.constant 0 : index
    %c0_43 = arith.constant 0 : index
    %c0_44 = arith.constant 0 : index
    %103 = vector.load %arg28[%c0_41, %c0_42, %c0_43, %c0_44] : memref<1x4x8x8xf32, #tpu.memory_space<vmem>>, vector<1x4x8x8xf32>
    %104 = vector.shape_cast %103 : vector<1x4x8x8xf32> to vector<4x8x8xf32>
    %105 = vector.shape_cast %102 : vector<4x8x8xf32> to vector<1x4x8x8xf32>
    tpu.vector_store %arg28[%c0_41, %c0_42, %c0_43, %c0_44], %105 {strides = array<i32>} : memref<1x4x8x8xf32, #tpu.memory_space<vmem>>, vector<1x4x8x8xf32>,
    %106 = arith.truncf %102 : vector<4x8x8xf32> to vector<4x8x8xbf16>
    "tpu.trace_start"() <{level = 10 : i32, message = "hqk,hkd->hqd"}> : () -> ()
    %cst_45 = arith.constant dense<0.000000e+00> : vector<4x8x32xf32>
    %107 = tpu.matmul %106, %89, %cst_45 {dimension_numbers = #tpu.dot_dimension_numbers<[2], [1], [1], [2], [0, 0, 0, 1, 1, 2], [0], [0]>} : vector<4x8x8xbf16>, vector<4x8x32xbf16>, vector<4x8x32xf32> -> vector<4x8x32xf32>
    "tpu.trace_stop"() : () -> ()
    %108 = tpu.concatenate %86, %107 in 1 : vector<4x8x32xf32>, vector<4x8x32xf32> -> vector<4x16x32xf32>
    %109 = tpu.transpose %108, [1, 0, 2] : vector<4x16x32xf32> -> vector<16x4x32xf32>
    %110 = vector.shape_cast %109 : vector<16x4x32xf32> to vector<16x128xf32>
    %111 = arith.truncf %110 : vector<16x128xf32> to vector<16x128xbf16>
    %c0_46 = arith.constant 0 : index
    %c0_47 = arith.constant 0 : index
    %112 = vector.load %arg11[%c0_46, %c0_47] : memref<128x128xbf16, #tpu.memory_space<vmem>>, vector<128x128xbf16>
    %cst_48 = arith.constant dense<0.000000e+00> : vector<16x128xf32>
    %113 = tpu.matmul %111, %112, %cst_48 {dimension_numbers = #tpu.dot_dimension_numbers<[1], [0], [0], [1], [0, 0, 1, 1], [], []>} : vector<16x128xbf16>, vector<128x128xbf16>, vector<16x128xf32> -> vector<16x128xf32>
    %c0_49 = arith.constant 0 : index
    %c0_50 = arith.constant 0 : index
    %114 = vector.load %arg12[%c0_49, %c0_50] : memref<1x128xf32, #tpu.memory_space<vmem>>, vector<1x128xf32>
    %115 = vector.shape_cast %114 : vector<1x128xf32> to vector<128xf32>
    %116 = vector.shape_cast %115 : vector<128xf32> to vector<1x128xf32>
    %117 = vector.broadcast %116 : vector<1x128xf32> to vector<16x128xf32>
    %118 = arith.addf %113, %117 : vector<16x128xf32>
    %119 = arith.addf %118, %32 : vector<16x128xf32>
    %cst_51 = arith.constant dense<0.000000e+00> : vector<16xf32>
    %120 = vector.multi_reduction <add>, %119, %cst_51 [1] : vector<16x128xf32> to vector<16xf32>
    %121 = vector.shape_cast %120 : vector<16xf32> to vector<16x1xf32>
    %cst_52 = arith.constant 1.280000e+02 : f32
    %122 = vector.broadcast %cst_52 : f32 to vector<16x1xf32>
    %123 = arith.divf %121, %122 : vector<16x1xf32>
    %124 = vector.broadcast %123 : vector<16x1xf32> to vector<16x128xf32>
    %125 = arith.subf %119, %124 : vector<16x128xf32>
    %126 = arith.mulf %125, %125 : vector<16x128xf32>
    %cst_53 = arith.constant dense<0.000000e+00> : vector<16xf32>
    %127 = vector.multi_reduction <add>, %126, %cst_53 [1] : vector<16x128xf32> to vector<16xf32>
    %128 = vector.shape_cast %127 : vector<16xf32> to vector<16x1xf32>
    %cst_54 = arith.constant 1.280000e+02 : f32
    %129 = vector.broadcast %cst_54 : f32 to vector<16x1xf32>
    %130 = arith.divf %128, %129 : vector<16x1xf32>
    %131 = vector.broadcast %123 : vector<16x1xf32> to vector<16x128xf32>
    %132 = arith.subf %119, %131 : vector<16x128xf32>
    %cst_55 = arith.constant 9.99999996E-13 : f32
    %133 = vector.broadcast %cst_55 : f32 to vector<16x1xf32>
    %134 = arith.addf %130, %133 : vector<16x1xf32>
    %135 = math.sqrt %134 : vector<16x1xf32>
    %136 = vector.broadcast %135 : vector<16x1xf32> to vector<16x128xf32>
    %137 = arith.divf %132, %136 : vector<16x128xf32>
    %c0_56 = arith.constant 0 : index
    %c0_57 = arith.constant 0 : index
    %138 = vector.load %arg13[%c0_56, %c0_57] : memref<1x128xf32, #tpu.memory_space<vmem>>, vector<1x128xf32>
    %139 = vector.shape_cast %138 : vector<1x128xf32> to vector<128xf32>
    %140 = vector.shape_cast %139 : vector<128xf32> to vector<1x128xf32>
    %141 = vector.broadcast %140 : vector<1x128xf32> to vector<16x128xf32>
    %142 = arith.mulf %141, %137 : vector<16x128xf32>
    %c0_58 = arith.constant 0 : index
    %c0_59 = arith.constant 0 : index
    %143 = vector.load %arg14[%c0_58, %c0_59] : memref<1x128xf32, #tpu.memory_space<vmem>>, vector<1x128xf32>
    %144 = vector.shape_cast %143 : vector<1x128xf32> to vector<128xf32>
    %145 = vector.shape_cast %144 : vector<128xf32> to vector<1x128xf32>
    %146 = vector.broadcast %145 : vector<1x128xf32> to vector<16x128xf32>
    %147 = arith.addf %142, %146 : vector<16x128xf32>
    %148 = vector.extract_strided_slice %147 {offsets = [0, 0], sizes = [8, 128], strides = [1, 1]} : vector<16x128xf32> to vector<8x128xf32>
    %149 = vector.extract_strided_slice %147 {offsets = [8, 0], sizes = [8, 128], strides = [1, 1]} : vector<16x128xf32> to vector<8x128xf32>
    %150 = arith.addf %31, %148 : vector<8x128xf32>
    %cst_60 = arith.constant dense<0.000000e+00> : vector<8xf32>
    %151 = vector.multi_reduction <add>, %150, %cst_60 [1] : vector<8x128xf32> to vector<8xf32>
    %152 = vector.shape_cast %151 : vector<8xf32> to vector<8x1xf32>
    %cst_61 = arith.constant 1.280000e+02 : f32
    %153 = vector.broadcast %cst_61 : f32 to vector<8x1xf32>
    %154 = arith.divf %152, %153 : vector<8x1xf32>
    %155 = vector.broadcast %154 : vector<8x1xf32> to vector<8x128xf32>
    %156 = arith.subf %150, %155 : vector<8x128xf32>
    %157 = arith.mulf %156, %156 : vector<8x128xf32>
    %cst_62 = arith.constant dense<0.000000e+00> : vector<8xf32>
    %158 = vector.multi_reduction <add>, %157, %cst_62 [1] : vector<8x128xf32> to vector<8xf32>
    %159 = vector.shape_cast %158 : vector<8xf32> to vector<8x1xf32>
    %cst_63 = arith.constant 1.280000e+02 : f32
    %160 = vector.broadcast %cst_63 : f32 to vector<8x1xf32>
    %161 = arith.divf %159, %160 : vector<8x1xf32>
    %162 = vector.broadcast %154 : vector<8x1xf32> to vector<8x128xf32>
    %163 = arith.subf %150, %162 : vector<8x128xf32>
    %cst_64 = arith.constant 9.99999996E-13 : f32
    %164 = vector.broadcast %cst_64 : f32 to vector<8x1xf32>
    %165 = arith.addf %161, %164 : vector<8x1xf32>
    %166 = math.sqrt %165 : vector<8x1xf32>
    %167 = vector.broadcast %166 : vector<8x1xf32> to vector<8x128xf32>
    %168 = arith.divf %163, %167 : vector<8x128xf32>
    %c0_65 = arith.constant 0 : index
    %c0_66 = arith.constant 0 : index
    %169 = vector.load %arg3[%c0_65, %c0_66] : memref<1x128xf32, #tpu.memory_space<vmem>>, vector<1x128xf32>
    %170 = vector.shape_cast %169 : vector<1x128xf32> to vector<128xf32>
    %171 = vector.shape_cast %170 : vector<128xf32> to vector<1x128xf32>
    %172 = vector.broadcast %171 : vector<1x128xf32> to vector<8x128xf32>
    %173 = arith.mulf %172, %168 : vector<8x128xf32>
    %c0_67 = arith.constant 0 : index
    %c0_68 = arith.constant 0 : index
    %174 = vector.load %arg4[%c0_67, %c0_68] : memref<1x128xf32, #tpu.memory_space<vmem>>, vector<1x128xf32>
    %175 = vector.shape_cast %174 : vector<1x128xf32> to vector<128xf32>
    %176 = vector.shape_cast %175 : vector<128xf32> to vector<1x128xf32>
    %177 = vector.broadcast %176 : vector<1x128xf32> to vector<8x128xf32>
    %178 = arith.addf %173, %177 : vector<8x128xf32>
    %179 = arith.truncf %178 : vector<8x128xf32> to vector<8x128xbf16>
    %c0_69 = arith.constant 0 : index
    %c0_70 = arith.constant 0 : index
    %180 = vector.load %arg21[%c0_69, %c0_70] : memref<128x256xbf16, #tpu.memory_space<vmem>>, vector<128x256xbf16>
    %cst_71 = arith.constant dense<0.000000e+00> : vector<8x256xf32>
    %181 = tpu.matmul %179, %180, %cst_71 {dimension_numbers = #tpu.dot_dimension_numbers<[1], [0], [0], [1], [0, 0, 1, 1], [], []>} : vector<8x128xbf16>, vector<128x256xbf16>, vector<8x256xf32> -> vector<8x256xf32>
    %c0_72 = arith.constant 0 : index
    %c0_73 = arith.constant 0 : index
    %182 = vector.load %arg22[%c0_72, %c0_73] : memref<1x256xf32, #tpu.memory_space<vmem>>, vector<1x256xf32>
    %183 = vector.shape_cast %182 : vector<1x256xf32> to vector<256xf32>
    %184 = vector.shape_cast %183 : vector<256xf32> to vector<1x256xf32>
    %185 = vector.broadcast %184 : vector<1x256xf32> to vector<8x256xf32>
    %186 = arith.addf %181, %185 : vector<8x256xf32>
    %cst_74 = arith.constant 0.000000e+00 : f32
    %187 = vector.broadcast %cst_74 : f32 to vector<8x256xf32>
    %188 = arith.maximumf %186, %187 : vector<8x256xf32>
    %189 = arith.truncf %188 : vector<8x256xf32> to vector<8x256xbf16>
    %c0_75 = arith.constant 0 : index
    %c0_76 = arith.constant 0 : index
    %190 = vector.load %arg23[%c0_75, %c0_76] : memref<256x128xbf16, #tpu.memory_space<vmem>>, vector<256x128xbf16>
    %cst_77 = arith.constant dense<0.000000e+00> : vector<8x128xf32>
    %191 = tpu.matmul %189, %190, %cst_77 {dimension_numbers = #tpu.dot_dimension_numbers<[1], [0], [0], [1], [0, 0, 1, 1], [], []>} : vector<8x256xbf16>, vector<256x128xbf16>, vector<8x128xf32> -> vector<8x128xf32>
    %c0_78 = arith.constant 0 : index
    %c0_79 = arith.constant 0 : index
    %192 = vector.load %arg24[%c0_78, %c0_79] : memref<1x128xf32, #tpu.memory_space<vmem>>, vector<1x128xf32>
    %193 = vector.shape_cast %192 : vector<1x128xf32> to vector<128xf32>
    %194 = vector.shape_cast %193 : vector<128xf32> to vector<1x128xf32>
    %195 = vector.broadcast %194 : vector<1x128xf32> to vector<8x128xf32>
    %196 = arith.addf %191, %195 : vector<8x128xf32>
    %197 = arith.addf %150, %196 : vector<8x128xf32>
    %c0_80 = arith.constant 0 : index
    %c0_81 = arith.constant 0 : index
    %c0_82 = arith.constant 0 : index
    %198 = vector.load %arg25[%c0_80, %c0_81, %c0_82] : memref<1x8x128xf32, #tpu.memory_space<vmem>>, vector<1x8x128xf32>
    %199 = vector.shape_cast %198 : vector<1x8x128xf32> to vector<8x128xf32>
    %200 = vector.shape_cast %197 : vector<8x128xf32> to vector<1x8x128xf32>
    tpu.vector_store %arg25[%c0_80, %c0_81, %c0_82], %200 {strides = array<i32>} : memref<1x8x128xf32, #tpu.memory_space<vmem>>, vector<1x8x128xf32>,
    %201 = arith.truncf %149 : vector<8x128xf32> to vector<8x128xbf16>
    %c0_83 = arith.constant 0 : index
    %c0_84 = arith.constant 0 : index
    %202 = vector.load %arg15[%c0_83, %c0_84] : memref<128x256xbf16, #tpu.memory_space<vmem>>, vector<128x256xbf16>
    %cst_85 = arith.constant dense<0.000000e+00> : vector<8x256xf32>
    %203 = tpu.matmul %201, %202, %cst_85 {dimension_numbers = #tpu.dot_dimension_numbers<[1], [0], [0], [1], [0, 0, 1, 1], [], []>} : vector<8x128xbf16>, vector<128x256xbf16>, vector<8x256xf32> -> vector<8x256xf32>
    %c0_86 = arith.constant 0 : index
    %c0_87 = arith.constant 0 : index
    %204 = vector.load %arg16[%c0_86, %c0_87] : memref<1x256xf32, #tpu.memory_space<vmem>>, vector<1x256xf32>
    %205 = vector.shape_cast %204 : vector<1x256xf32> to vector<256xf32>
    %206 = vector.shape_cast %205 : vector<256xf32> to vector<1x256xf32>
    %207 = vector.broadcast %206 : vector<1x256xf32> to vector<8x256xf32>
    %208 = arith.addf %203, %207 : vector<8x256xf32>
    %cst_88 = arith.constant 0.000000e+00 : f32
    %209 = vector.broadcast %cst_88 : f32 to vector<8x256xf32>
    %210 = arith.maximumf %208, %209 : vector<8x256xf32>
    %211 = arith.truncf %210 : vector<8x256xf32> to vector<8x256xbf16>
    %c0_89 = arith.constant 0 : index
    %c0_90 = arith.constant 0 : index
    %212 = vector.load %arg17[%c0_89, %c0_90] : memref<256x128xbf16, #tpu.memory_space<vmem>>, vector<256x128xbf16>
    %cst_91 = arith.constant dense<0.000000e+00> : vector<8x128xf32>
    %213 = tpu.matmul %211, %212, %cst_91 {dimension_numbers = #tpu.dot_dimension_numbers<[1], [0], [0], [1], [0, 0, 1, 1], [], []>} : vector<8x256xbf16>, vector<256x128xbf16>, vector<8x128xf32> -> vector<8x128xf32>
    %c0_92 = arith.constant 0 : index
    %c0_93 = arith.constant 0 : index
    %214 = vector.load %arg18[%c0_92, %c0_93] : memref<1x128xf32, #tpu.memory_space<vmem>>, vector<1x128xf32>
    %215 = vector.shape_cast %214 : vector<1x128xf32> to vector<128xf32>
    %216 = vector.shape_cast %215 : vector<128xf32> to vector<1x128xf32>
    %217 = vector.broadcast %216 : vector<1x128xf32> to vector<8x128xf32>
    %218 = arith.addf %213, %217 : vector<8x128xf32>
    %219 = arith.addf %218, %149 : vector<8x128xf32>
    %cst_94 = arith.constant dense<0.000000e+00> : vector<8xf32>
    %220 = vector.multi_reduction <add>, %219, %cst_94 [1] : vector<8x128xf32> to vector<8xf32>
    %221 = vector.shape_cast %220 : vector<8xf32> to vector<8x1xf32>
    %cst_95 = arith.constant 1.280000e+02 : f32
    %222 = vector.broadcast %cst_95 : f32 to vector<8x1xf32>
    %223 = arith.divf %221, %222 : vector<8x1xf32>
    %224 = vector.broadcast %223 : vector<8x1xf32> to vector<8x128xf32>
    %225 = arith.subf %219, %224 : vector<8x128xf32>
    %226 = arith.mulf %225, %225 : vector<8x128xf32>
    %cst_96 = arith.constant dense<0.000000e+00> : vector<8xf32>
    %227 = vector.multi_reduction <add>, %226, %cst_96 [1] : vector<8x128xf32> to vector<8xf32>
    %228 = vector.shape_cast %227 : vector<8xf32> to vector<8x1xf32>
    %cst_97 = arith.constant 1.280000e+02 : f32
    %229 = vector.broadcast %cst_97 : f32 to vector<8x1xf32>
    %230 = arith.divf %228, %229 : vector<8x1xf32>
    %231 = vector.broadcast %223 : vector<8x1xf32> to vector<8x128xf32>
    %232 = arith.subf %219, %231 : vector<8x128xf32>
    %cst_98 = arith.constant 9.99999996E-13 : f32
    %233 = vector.broadcast %cst_98 : f32 to vector<8x1xf32>
    %234 = arith.addf %230, %233 : vector<8x1xf32>
    %235 = math.sqrt %234 : vector<8x1xf32>
    %236 = vector.broadcast %235 : vector<8x1xf32> to vector<8x128xf32>
    %237 = arith.divf %232, %236 : vector<8x128xf32>
    %c0_99 = arith.constant 0 : index
    %c0_100 = arith.constant 0 : index
    %238 = vector.load %arg19[%c0_99, %c0_100] : memref<1x128xf32, #tpu.memory_space<vmem>>, vector<1x128xf32>
    %239 = vector.shape_cast %238 : vector<1x128xf32> to vector<128xf32>
    %240 = vector.shape_cast %239 : vector<128xf32> to vector<1x128xf32>
    %241 = vector.broadcast %240 : vector<1x128xf32> to vector<8x128xf32>
    %242 = arith.mulf %241, %237 : vector<8x128xf32>
    %c0_101 = arith.constant 0 : index
    %c0_102 = arith.constant 0 : index
    %243 = vector.load %arg20[%c0_101, %c0_102] : memref<1x128xf32, #tpu.memory_space<vmem>>, vector<1x128xf32>
    %244 = vector.shape_cast %243 : vector<1x128xf32> to vector<128xf32>
    %245 = vector.shape_cast %244 : vector<128xf32> to vector<1x128xf32>
    %246 = vector.broadcast %245 : vector<1x128xf32> to vector<8x128xf32>
    %247 = arith.addf %242, %246 : vector<8x128xf32>
    %c0_103 = arith.constant 0 : index
    %c0_104 = arith.constant 0 : index
    %c0_105 = arith.constant 0 : index
    %248 = vector.load %arg26[%c0_103, %c0_104, %c0_105] : memref<1x8x128xf32, #tpu.memory_space<vmem>>, vector<1x8x128xf32>
    %249 = vector.shape_cast %248 : vector<1x8x128xf32> to vector<8x128xf32>
    %250 = vector.shape_cast %247 : vector<8x128xf32> to vector<1x8x128xf32>
    tpu.vector_store %arg26[%c0_103, %c0_104, %c0_105], %250 {strides = array<i32>} : memref<1x8x128xf32, #tpu.memory_space<vmem>>, vector<1x8x128xf32>,
    return
  }
  func.func @transform_0(%arg0: i32) -> (i32, i32, i32) {
    %c0_i32 = arith.constant 0 : i32
    %c0_i32_0 = arith.constant 0 : i32
    %c0_i32_1 = arith.constant 0 : i32
    return %arg0, %c0_i32, %c0_i32_0 : i32, i32, i32
  }
  func.func @transform_1(%arg0: i32) -> (i32, i32, i32) {
    %c0_i32 = arith.constant 0 : i32
    %c0_i32_0 = arith.constant 0 : i32
    %c0_i32_1 = arith.constant 0 : i32
    return %arg0, %c0_i32, %c0_i32_0 : i32, i32, i32
  }
  func.func @transform_2(%arg0: i32) -> (i32, i32) {
    %c0_i32 = arith.constant 0 : i32
    %c0_i32_0 = arith.constant 0 : i32
    %c0_i32_1 = arith.constant 0 : i32
    return %c0_i32, %c0_i32_0 : i32, i32
  }
  func.func @transform_3(%arg0: i32) -> (i32, i32) {
    %c0_i32 = arith.constant 0 : i32
    %c0_i32_0 = arith.constant 0 : i32
    %c0_i32_1 = arith.constant 0 : i32
    return %c0_i32, %c0_i32_0 : i32, i32
  }
  func.func @transform_4(%arg0: i32) -> (i32, i32) {
    %c0_i32 = arith.constant 0 : i32
    %c0_i32_0 = arith.constant 0 : i32
    %c0_i32_1 = arith.constant 0 : i32
    return %c0_i32, %c0_i32_0 : i32, i32
  }
  func.func @transform_5(%arg0: i32) -> (i32, i32) {
    %c0_i32 = arith.constant 0 : i32
    %c0_i32_0 = arith.constant 0 : i32
    %c0_i32_1 = arith.constant 0 : i32
    return %c0_i32, %c0_i32_0 : i32, i32
  }
  func.func @transform_6(%arg0: i32) -> (i32, i32) {
    %c0_i32 = arith.constant 0 : i32
    %c0_i32_0 = arith.constant 0 : i32
    %c0_i32_1 = arith.constant 0 : i32
    return %c0_i32, %c0_i32_0 : i32, i32
  }
  func.func @transform_7(%arg0: i32) -> (i32, i32) {
    %c0_i32 = arith.constant 0 : i32
    %c0_i32_0 = arith.constant 0 : i32
    %c0_i32_1 = arith.constant 0 : i32
    return %c0_i32, %c0_i32_0 : i32, i32
  }
  func.func @transform_8(%arg0: i32) -> (i32, i32) {
    %c0_i32 = arith.constant 0 : i32
    %c0_i32_0 = arith.constant 0 : i32
    %c0_i32_1 = arith.constant 0 : i32
    return %c0_i32, %c0_i32_0 : i32, i32
  }
  func.func @transform_9(%arg0: i32) -> (i32, i32) {
    %c0_i32 = arith.constant 0 : i32
    %c0_i32_0 = arith.constant 0 : i32
    %c0_i32_1 = arith.constant 0 : i32
    return %c0_i32, %c0_i32_0 : i32, i32
  }
  func.func @transform_10(%arg0: i32) -> (i32, i32) {
    %c0_i32 = arith.constant 0 : i32
    %c0_i32_0 = arith.constant 0 : i32
    %c0_i32_1 = arith.constant 0 : i32
    return %c0_i32, %c0_i32_0 : i32, i32
  }
  func.func @transform_11(%arg0: i32) -> (i32, i32) {
    %c0_i32 = arith.constant 0 : i32
    %c0_i32_0 = arith.constant 0 : i32
    %c0_i32_1 = arith.constant 0 : i32
    return %c0_i32, %c0_i32_0 : i32, i32
  }
  func.func @transform_12(%arg0: i32) -> (i32, i32) {
    %c0_i32 = arith.constant 0 : i32
    %c0_i32_0 = arith.constant 0 : i32
    %c0_i32_1 = arith.constant 0 : i32
    return %c0_i32, %c0_i32_0 : i32, i32
  }
  func.func @transform_13(%arg0: i32) -> (i32, i32) {
    %c0_i32 = arith.constant 0 : i32
    %c0_i32_0 = arith.constant 0 : i32
    %c0_i32_1 = arith.constant 0 : i32
    return %c0_i32, %c0_i32_0 : i32, i32
  }
  func.func @transform_14(%arg0: i32) -> (i32, i32) {
    %c0_i32 = arith.constant 0 : i32
    %c0_i32_0 = arith.constant 0 : i32
    %c0_i32_1 = arith.constant 0 : i32
    return %c0_i32, %c0_i32_0 : i32, i32
  }
  func.func @transform_15(%arg0: i32) -> (i32, i32) {
    %c0_i32 = arith.constant 0 : i32
    %c0_i32_0 = arith.constant 0 : i32
    %c0_i32_1 = arith.constant 0 : i32
    return %c0_i32, %c0_i32_0 : i32, i32
  }
  func.func @transform_16(%arg0: i32) -> (i32, i32) {
    %c0_i32 = arith.constant 0 : i32
    %c0_i32_0 = arith.constant 0 : i32
    %c0_i32_1 = arith.constant 0 : i32
    return %c0_i32, %c0_i32_0 : i32, i32
  }
  func.func @transform_17(%arg0: i32) -> (i32, i32) {
    %c0_i32 = arith.constant 0 : i32
    %c0_i32_0 = arith.constant 0 : i32
    %c0_i32_1 = arith.constant 0 : i32
    return %c0_i32, %c0_i32_0 : i32, i32
  }
  func.func @transform_18(%arg0: i32) -> (i32, i32) {
    %c0_i32 = arith.constant 0 : i32
    %c0_i32_0 = arith.constant 0 : i32
    %c0_i32_1 = arith.constant 0 : i32
    return %c0_i32, %c0_i32_0 : i32, i32
  }
  func.func @transform_19(%arg0: i32) -> (i32, i32) {
    %c0_i32 = arith.constant 0 : i32
    %c0_i32_0 = arith.constant 0 : i32
    %c0_i32_1 = arith.constant 0 : i32
    return %c0_i32, %c0_i32_0 : i32, i32
  }
  func.func @transform_20(%arg0: i32) -> (i32, i32) {
    %c0_i32 = arith.constant 0 : i32
    %c0_i32_0 = arith.constant 0 : i32
    %c0_i32_1 = arith.constant 0 : i32
    return %c0_i32, %c0_i32_0 : i32, i32
  }
  func.func @transform_21(%arg0: i32) -> (i32, i32) {
    %c0_i32 = arith.constant 0 : i32
    %c0_i32_0 = arith.constant 0 : i32
    %c0_i32_1 = arith.constant 0 : i32
    return %c0_i32, %c0_i32_0 : i32, i32
  }
  func.func @transform_22(%arg0: i32) -> (i32, i32) {
    %c0_i32 = arith.constant 0 : i32
    %c0_i32_0 = arith.constant 0 : i32
    %c0_i32_1 = arith.constant 0 : i32
    return %c0_i32, %c0_i32_0 : i32, i32
  }
  func.func @transform_23(%arg0: i32) -> (i32, i32) {
    %c0_i32 = arith.constant 0 : i32
    %c0_i32_0 = arith.constant 0 : i32
    %c0_i32_1 = arith.constant 0 : i32
    return %c0_i32, %c0_i32_0 : i32, i32
  }
  func.func @transform_24(%arg0: i32) -> (i32, i32, i32) {
    %c0_i32 = arith.constant 0 : i32
    %c0_i32_0 = arith.constant 0 : i32
    %c0_i32_1 = arith.constant 0 : i32
    return %arg0, %c0_i32, %c0_i32_0 : i32, i32, i32
  }
  func.func @transform_25(%arg0: i32) -> (i32, i32, i32) {
    %c0_i32 = arith.constant 0 : i32
    %c0_i32_0 = arith.constant 0 : i32
    %c0_i32_1 = arith.constant 0 : i32
    return %arg0, %c0_i32, %c0_i32_0 : i32, i32, i32
  }
  func.func @transform_26(%arg0: i32) -> (i32, i32, i32, i32) {
    %c0_i32 = arith.constant 0 : i32
    %c0_i32_0 = arith.constant 0 : i32
    %c0_i32_1 = arith.constant 0 : i32
    %c0_i32_2 = arith.constant 0 : i32
    return %arg0, %c0_i32, %c0_i32_0, %c0_i32_1 : i32, i32, i32, i32
  }
  func.func @transform_27(%arg0: i32) -> (i32, i32, i32, i32) {
    %c0_i32 = arith.constant 0 : i32
    %c0_i32_0 = arith.constant 0 : i32
    %c0_i32_1 = arith.constant 0 : i32
    %c0_i32_2 = arith.constant 0 : i32
    return %arg0, %c0_i32, %c0_i32_0, %c0_i32_1 : i32, i32, i32, i32
  }
}

</mosaic_0001>

<llo_original>
// kernel: tpu_custom_call.1
$region0: #{tpu_custom_call.1}
  #allocation0 [shape = 'u32[]', space=smem, size = 0x4, offset = 0x4, fixed_abs, tag = 'smem constant byte address 0x4 - core index']
  #allocation1 [shape = 'u32[144,128]{1,0:T(1,128)}', space=vmem, size = 0x12000, scoped, tag = 'internal scratch']
  %s0 = inlined_call_operand.hbm [shape: f32[2,8,128], index: 0, kind: input, shape index: {}]
  %s1 = inlined_call_operand.hbm [shape: f32[2,8,128], index: 1, kind: input, shape index: {}]
  %s2 = inlined_call_operand.vmem [shape: f32[1,128], index: 2, kind: input, shape index: {}]
  %s3 = inlined_call_operand.vmem [shape: f32[1,128], index: 3, kind: input, shape index: {}]
  %s4 = inlined_call_operand.hbm [shape: bf16[128,128], index: 4, kind: input, shape index: {}]
  %s5 = inlined_call_operand.vmem [shape: f32[1,128], index: 5, kind: input, shape index: {}]
  %s6 = inlined_call_operand.hbm [shape: bf16[128,128], index: 6, kind: input, shape index: {}]
  %s7 = inlined_call_operand.vmem [shape: f32[1,128], index: 7, kind: input, shape index: {}]
  %s8 = inlined_call_operand.hbm [shape: bf16[128,128], index: 8, kind: input, shape index: {}]
  %s9 = inlined_call_operand.vmem [shape: f32[1,128], index: 9, kind: input, shape index: {}]
  %s10 = inlined_call_operand.hbm [shape: bf16[128,128], index: 10, kind: input, shape index: {}]
  %s11 = inlined_call_operand.vmem [shape: f32[1,128], index: 11, kind: input, shape index: {}]
  %s12 = inlined_call_operand.vmem [shape: f32[1,128], index: 12, kind: input, shape index: {}]
  %s13 = inlined_call_operand.vmem [shape: f32[1,128], index: 13, kind: input, shape index: {}]
  %s14 = inlined_call_operand.hbm [shape: bf16[128,256], index: 14, kind: input, shape index: {}]
  %s15 = inlined_call_operand.vmem [shape: f32[1,256], index: 15, kind: input, shape index: {}]
  %s16 = inlined_call_operand.hbm [shape: bf16[256,128], index: 16, kind: input, shape index: {}]
  %s17 = inlined_call_operand.vmem [shape: f32[1,128], index: 17, kind: input, shape index: {}]
  %s18 = inlined_call_operand.vmem [shape: f32[1,128], index: 18, kind: input, shape index: {}]
  %s19 = inlined_call_operand.vmem [shape: f32[1,128], index: 19, kind: input, shape index: {}]
  %s20 = inlined_call_operand.hbm [shape: bf16[128,256], index: 20, kind: input, shape index: {}]
  %s21 = inlined_call_operand.vmem [shape: f32[1,256], index: 21, kind: input, shape index: {}]
  %s22 = inlined_call_operand.hbm [shape: bf16[256,128], index: 22, kind: input, shape index: {}]
  %s23 = inlined_call_operand.vmem [shape: f32[1,128], index: 23, kind: input, shape index: {}]
  %s24 = inlined_call_operand.hbm [shape: f32[2,8,128], index: 24, kind: output, shape index: {0}]
  %s25 = inlined_call_operand.hbm [shape: f32[2,8,128], index: 25, kind: output, shape index: {1}]
  %s26 = inlined_call_operand.hbm [shape: f32[2,4,8,8], index: 26, kind: output, shape index: {2}]
  %s27 = inlined_call_operand.hbm [shape: f32[2,4,8,8], index: 27, kind: output, shape index: {3}]
  %28 = xla_tuple %s24, %s25, %s26, %s27
  %s29 = sld [smem:[#allocation0]]
  $region193: #{tpu_custom_call.1} parent=0
    _
  %s31 = ssub.s32 1, %s29
  %s32 = scalar_select 0, %s31, %s29
  $region1: #{tpu_custom_call.1} parent=0
    #allocation2 [shape = 'u8[8192]{0}', space=vmem, size = 0x2000, scoped, tag = 'input window, operand 0']
    #allocation3 [shape = 's32[2]{0}', space=sflag, size = 0x8, scoped, tag = 'scoped memory for tpu_custom_call.1']
    #allocation4 [shape = 's32[2]{0}', space=sflag, size = 0x8, scoped, tag = 'scoped memory for tpu_custom_call.1']
    #allocation5 [shape = 'u8[8192]{0}', space=vmem, size = 0x2000, scoped, tag = 'input window, operand 1']
    #allocation6 [shape = 's32[2]{0}', space=sflag, size = 0x8, scoped, tag = 'scoped memory for tpu_custom_call.1']
    #allocation7 [shape = 'u8[32768]{0}', space=vmem, size = 0x8000, scoped, tag = 'input window, operand 4, single buffered']
    #allocation8 [shape = 'u8[32768]{0}', space=vmem, size = 0x8000, scoped, tag = 'input window, operand 6, single buffered']
    #allocation9 [shape = 's32[1]{0}', space=sflag, size = 0x4, scoped, tag = 'scoped memory for tpu_custom_call.1']
    #allocation10 [shape = 'u8[32768]{0}', space=vmem, size = 0x8000, scoped, tag = 'input window, operand 8, single buffered']
    #allocation11 [shape = 'u8[32768]{0}', space=vmem, size = 0x8000, scoped, tag = 'input window, operand 10, single buffered']
    #allocation12 [shape = 's32[1]{0}', space=sflag, size = 0x4, scoped, tag = 'scoped memory for tpu_custom_call.1']
    #allocation13 [shape = 'u8[65536]{0}', space=vmem, size = 0x10000, scoped, tag = 'input window, operand 14, single buffered']
    #allocation14 [shape = 'u8[65536]{0}', space=vmem, size = 0x10000, scoped, tag = 'input window, operand 16, single buffered']
    #allocation15 [shape = 's32[1]{0}', space=sflag, size = 0x4, scoped, tag = 'scoped memory for tpu_custom_call.1']
    #allocation16 [shape = 'u8[65536]{0}', space=vmem, size = 0x10000, scoped, tag = 'input window, operand 20, single buffered']
    #allocation17 [shape = 'u8[65536]{0}', space=vmem, size = 0x10000, scoped, tag = 'input window, operand 22, single buffered']
    #allocation18 [shape = 's32[1]{0}', space=sflag, size = 0x4, scoped, tag = 'scoped memory for tpu_custom_call.1']
    #allocation19 [shape = 'u8[8192]{0}', space=vmem, size = 0x2000, scoped, tag = 'output window, operand 0']
    #allocation20 [shape = 'u8[8192]{0}', space=vmem, size = 0x2000, scoped, tag = 'output window, operand 1']
    #allocation21 [shape = 's32[2]{0}', space=sflag, size = 0x8, scoped, tag = 'scoped memory for tpu_custom_call.1']
    #allocation22 [shape = 'u8[32768]{0}', space=vmem, size = 0x8000, scoped, tag = 'output window, operand 2']
    #allocation23 [shape = 'u8[32768]{0}', space=vmem, size = 0x8000, scoped, tag = 'output window, operand 3']
    #allocation24 [shape = 's32[2]{0}', space=sflag, size = 0x8, scoped, tag = 'scoped memory for tpu_custom_call.1']
    %33 = vsyncpa [#allocation3], 0
    %s34 = scalar_lea.sflag [#allocation3], 1
    %35 = vsyncpa %s34, 0
    %36 = vsyncpa [#allocation6], 0
    %s37 = scalar_lea.sflag [#allocation6], 1
    %38 = vsyncpa %s37, 0
    %39 = vsyncpa [#allocation9], 0
    %40 = vsyncpa [#allocation12], 0
    %41 = vsyncpa [#allocation15], 0
    %42 = vsyncpa [#allocation18], 0
    %43 = vsyncpa [#allocation4], 0
    %s44 = scalar_lea.sflag [#allocation4], 1
    %45 = vsyncpa %s44, 0
    %46 = vsyncpa [#allocation21], 0
    %s47 = scalar_lea.sflag [#allocation21], 1
    %48 = vsyncpa %s47, 0
    %49 = vsyncpa [#allocation24], 0
    %s50 = scalar_lea.sflag [#allocation24], 1
    %51 = vsyncpa %s50, 0
    loop: start=0, step=1, limit=4
    $region2: #{tpu_custom_call.1} parent=1 // loop_pre_header
      _
    $region3: #{tpu_custom_call.1} parent=1 // loop_header
      %s53 = sphi 0, %s57
      %p54 = scmp.ge.s32.totalorder %s53, 4
      %s63 = sphi 0, %s65
      %s66 = sphi 0, %s63
      %s67 = sphi 0, %s66
      %s83 = sphi 0, %s67
      %s89 = sphi 0, %s91
      %s92 = sphi 0, %s89
      %s93 = sphi 0, %s92
      %s109 = sphi 0, %s93
      %s113 = sphi 0, %s113
      %s115 = sphi 0, %s113
      %s116 = sphi 0, %s115
      %s130 = sphi 0, %s116
      %s134 = sphi 0, %s134
      %s136 = sphi 0, %s134
      %s137 = sphi 0, %s136
      %s151 = sphi 0, %s137
      %s155 = sphi 0, %s155
      %s157 = sphi 0, %s155
      %s158 = sphi 0, %s157
      %s172 = sphi 0, %s158
      %s176 = sphi 0, %s176
      %s178 = sphi 0, %s176
      %s179 = sphi 0, %s178
      %s193 = sphi 0, %s179
      %s197 = sphi 0, %s197
      %s199 = sphi 0, %s197
      %s200 = sphi 0, %s199
      %s214 = sphi 0, %s200
      %s218 = sphi 0, %s218
      %s220 = sphi 0, %s218
      %s221 = sphi 0, %s220
      %s235 = sphi 0, %s221
      %s239 = sphi 0, %s239
      %s241 = sphi 0, %s239
      %s242 = sphi 0, %s241
      %s256 = sphi 0, %s242
      %s260 = sphi 0, %s260
      %s262 = sphi 0, %s260
      %s263 = sphi 0, %s262
      %s277 = sphi 0, %s263
      %s281 = sphi 0, %s281
      %s283 = sphi 0, %s281
      %s284 = sphi 0, %s283
      %s298 = sphi 0, %s284
      %s302 = sphi 0, %s302
      %s304 = sphi 0, %s302
      %s305 = sphi 0, %s304
      %s319 = sphi 0, %s305
      %s323 = sphi 0, %s323
      %s325 = sphi 0, %s323
      %s326 = sphi 0, %s325
      %s340 = sphi 0, %s326
      %s344 = sphi 0, %s344
      %s346 = sphi 0, %s344
      %s347 = sphi 0, %s346
      %s361 = sphi 0, %s347
      %s365 = sphi 0, %s365
      %s367 = sphi 0, %s365
      %s368 = sphi 0, %s367
      %s382 = sphi 0, %s368
      %s386 = sphi 0, %s386
      %s388 = sphi 0, %s386
      %s389 = sphi 0, %s388
      %s403 = sphi 0, %s389
      %s407 = sphi 0, %s407
      %s409 = sphi 0, %s407
      %s410 = sphi 0, %s409
      %s424 = sphi 0, %s410
      %s428 = sphi 0, %s428
      %s430 = sphi 0, %s428
      %s431 = sphi 0, %s430
      %s445 = sphi 0, %s431
      %s449 = sphi 0, %s449
      %s451 = sphi 0, %s449
      %s452 = sphi 0, %s451
      %s466 = sphi 0, %s452
      %s470 = sphi 0, %s470
      %s472 = sphi 0, %s470
      %s473 = sphi 0, %s472
      %s487 = sphi 0, %s473
      %s491 = sphi 0, %s491
      %s493 = sphi 0, %s491
      %s494 = sphi 0, %s493
      %s508 = sphi 0, %s494
      %s512 = sphi 0, %s512
      %s514 = sphi 0, %s512
      %s515 = sphi 0, %s514
      %s529 = sphi 0, %s515
      %s533 = sphi 0, %s533
      %s535 = sphi 0, %s533
      %s536 = sphi 0, %s535
      %s550 = sphi 0, %s536
      %s554 = sphi 0, %s554
      %s556 = sphi 0, %s554
      %s557 = sphi 0, %s556
      %s571 = sphi 0, %s557
      %s577 = sphi 0, %s579
      %s580 = sphi 0, %s577
      %s581 = sphi 0, %s580
      %s597 = sphi 0, %s581
      %s603 = sphi 0, %s605
      %s606 = sphi 0, %s603
      %s607 = sphi 0, %s606
      %s623 = sphi 0, %s607
      %s629 = sphi 0, %s631
      %s632 = sphi 0, %s629
      %s633 = sphi 0, %s632
      %s649 = sphi 0, %s633
      %s655 = sphi 0, %s657
      %s658 = sphi 0, %s655
      %s659 = sphi 0, %s658
      %s675 = sphi 0, %s659
    $region4: #{tpu_custom_call.1} parent=1 // loop_header_branch
      %56 = sbr.rel (%p54) target = $region8
    $region5: #{tpu_custom_call.1} parent=1 // loop_body
      %s58 = ssub.s32 %s53, 1
      %s59 = ssub.s32 %s53, 2
      %s60 = sadd.s32 %s53, 1
      %s61 = ssub.s32 %s53, %s60
      %p62 = scmp.eq.s32.totalorder %s61, 0
      %s64 = sadd.s32 %s63, 1
      %s65 = scalar_select %p62, %s63, %s64
      %p68 = pneg %p62
      %p69 = scmp.eq.s32.totalorder %s53, 1
      %p70 = por %p68, %p69
      %p71 = scmp.ne.s32.totalorder %s63, %s66
      %p72 = scmp.eq.s32.totalorder %s53, 0
      %p73 = por %p71, %p72
      %p74 = scmp.ne.s32.totalorder %s63, %s66
      %p75 = scmp.eq.s32.totalorder %s58, 1
      %p76 = por %p74, %p75
      %p77 = scmp.ne.s32.totalorder %s66, %s67
      %p78 = scmp.eq.s32.totalorder %s58, 0
      %p79 = por %p77, %p78
      %p80 = scmp.ne.s32.totalorder %s66, %s67
      %p81 = scmp.eq.s32.totalorder %s59, 1
      %p82 = por %p80, %p81
      %p84 = scmp.ne.s32.totalorder %s67, %s83
      %p85 = scmp.eq.s32.totalorder %s59, 0
      %p86 = por %p84, %p85
      %s87 = ssub.s32 %s53, %s60
      %p88 = scmp.eq.s32.totalorder %s87, 0
      %s90 = sadd.s32 %s89, 1
      %s91 = scalar_select %p88, %s89, %s90
      %p94 = pneg %p88
      %p95 = scmp.eq.s32.totalorder %s53, 1
      %p96 = por %p94, %p95
      %p97 = scmp.ne.s32.totalorder %s89, %s92
      %p98 = scmp.eq.s32.totalorder %s53, 0
      %p99 = por %p97, %p98
      %p100 = scmp.ne.s32.totalorder %s89, %s92
      %p101 = scmp.eq.s32.totalorder %s58, 1
      %p102 = por %p100, %p101
      %p103 = scmp.ne.s32.totalorder %s92, %s93
      %p104 = scmp.eq.s32.totalorder %s58, 0
      %p105 = por %p103, %p104
      %p106 = scmp.ne.s32.totalorder %s92, %s93
      %p107 = scmp.eq.s32.totalorder %s59, 1
      %p108 = por %p106, %p107
      %p110 = scmp.ne.s32.totalorder %s93, %s109
      %p111 = scmp.eq.s32.totalorder %s59, 0
      %p112 = por %p110, %p111
      %s114 = sadd.s32 %s113, 1
      %p117 = scmp.eq.s32.totalorder %s53, 1
      %p118 = scmp.ne.s32.totalorder %s113, %s115
      %p119 = scmp.eq.s32.totalorder %s53, 0
      %p120 = por %p118, %p119
      %p121 = scmp.ne.s32.totalorder %s113, %s115
      %p122 = scmp.eq.s32.totalorder %s58, 1
      %p123 = por %p121, %p122
      %p124 = scmp.ne.s32.totalorder %s115, %s116
      %p125 = scmp.eq.s32.totalorder %s58, 0
      %p126 = por %p124, %p125
      %p127 = scmp.ne.s32.totalorder %s115, %s116
      %p128 = scmp.eq.s32.totalorder %s59, 1
      %p129 = por %p127, %p128
      %p131 = scmp.ne.s32.totalorder %s116, %s130
      %p132 = scmp.eq.s32.totalorder %s59, 0
      %p133 = por %p131, %p132
      %s135 = sadd.s32 %s134, 1
      %p138 = scmp.eq.s32.totalorder %s53, 1
      %p139 = scmp.ne.s32.totalorder %s134, %s136
      %p140 = scmp.eq.s32.totalorder %s53, 0
      %p141 = por %p139, %p140
      %p142 = scmp.ne.s32.totalorder %s134, %s136
      %p143 = scmp.eq.s32.totalorder %s58, 1
      %p144 = por %p142, %p143
      %p145 = scmp.ne.s32.totalorder %s136, %s137
      %p146 = scmp.eq.s32.totalorder %s58, 0
      %p147 = por %p145, %p146
      %p148 = scmp.ne.s32.totalorder %s136, %s137
      %p149 = scmp.eq.s32.totalorder %s59, 1
      %p150 = por %p148, %p149
      %p152 = scmp.ne.s32.totalorder %s137, %s151
      %p153 = scmp.eq.s32.totalorder %s59, 0
      %p154 = por %p152, %p153
      %s156 = sadd.s32 %s155, 1
      %p159 = scmp.eq.s32.totalorder %s53, 1
      %p160 = scmp.ne.s32.totalorder %s155, %s157
      %p161 = scmp.eq.s32.totalorder %s53, 0
      %p162 = por %p160, %p161
      %p163 = scmp.ne.s32.totalorder %s155, %s157
      %p164 = scmp.eq.s32.totalorder %s58, 1
      %p165 = por %p163, %p164
      %p166 = scmp.ne.s32.totalorder %s157, %s158
      %p167 = scmp.eq.s32.totalorder %s58, 0
      %p168 = por %p166, %p167
      %p169 = scmp.ne.s32.totalorder %s157, %s158
      %p170 = scmp.eq.s32.totalorder %s59, 1
      %p171 = por %p169, %p170
      %p173 = scmp.ne.s32.totalorder %s158, %s172
      %p174 = scmp.eq.s32.totalorder %s59, 0
      %p175 = por %p173, %p174
      %s177 = sadd.s32 %s176, 1
      %p180 = scmp.eq.s32.totalorder %s53, 1
      %p181 = scmp.ne.s32.totalorder %s176, %s178
      %p182 = scmp.eq.s32.totalorder %s53, 0
      %p183 = por %p181, %p182
      %p184 = scmp.ne.s32.totalorder %s176, %s178
      %p185 = scmp.eq.s32.totalorder %s58, 1
      %p186 = por %p184, %p185
      %p187 = scmp.ne.s32.totalorder %s178, %s179
      %p188 = scmp.eq.s32.totalorder %s58, 0
      %p189 = por %p187, %p188
      %p190 = scmp.ne.s32.totalorder %s178, %s179
      %p191 = scmp.eq.s32.totalorder %s59, 1
      %p192 = por %p190, %p191
      %p194 = scmp.ne.s32.totalorder %s179, %s193
      %p195 = scmp.eq.s32.totalorder %s59, 0
      %p196 = por %p194, %p195
      %s198 = sadd.s32 %s197, 1
      %p201 = scmp.eq.s32.totalorder %s53, 1
      %p202 = scmp.ne.s32.totalorder %s197, %s199
      %p203 = scmp.eq.s32.totalorder %s53, 0
      %p204 = por %p202, %p203
      %p205 = scmp.ne.s32.totalorder %s197, %s199
      %p206 = scmp.eq.s32.totalorder %s58, 1
      %p207 = por %p205, %p206
      %p208 = scmp.ne.s32.totalorder %s199, %s200
      %p209 = scmp.eq.s32.totalorder %s58, 0
      %p210 = por %p208, %p209
      %p211 = scmp.ne.s32.totalorder %s199, %s200
      %p212 = scmp.eq.s32.totalorder %s59, 1
      %p213 = por %p211, %p212
      %p215 = scmp.ne.s32.totalorder %s200, %s214
      %p216 = scmp.eq.s32.totalorder %s59, 0
      %p217 = por %p215, %p216
      %s219 = sadd.s32 %s218, 1
      %p222 = scmp.eq.s32.totalorder %s53, 1
      %p223 = scmp.ne.s32.totalorder %s218, %s220
      %p224 = scmp.eq.s32.totalorder %s53, 0
      %p225 = por %p223, %p224
      %p226 = scmp.ne.s32.totalorder %s218, %s220
      %p227 = scmp.eq.s32.totalorder %s58, 1
      %p228 = por %p226, %p227
      %p229 = scmp.ne.s32.totalorder %s220, %s221
      %p230 = scmp.eq.s32.totalorder %s58, 0
      %p231 = por %p229, %p230
      %p232 = scmp.ne.s32.totalorder %s220, %s221
      %p233 = scmp.eq.s32.totalorder %s59, 1
      %p234 = por %p232, %p233
      %p236 = scmp.ne.s32.totalorder %s221, %s235
      %p237 = scmp.eq.s32.totalorder %s59, 0
      %p238 = por %p236, %p237
      %s240 = sadd.s32 %s239, 1
      %p243 = scmp.eq.s32.totalorder %s53, 1
      %p244 = scmp.ne.s32.totalorder %s239, %s241
      %p245 = scmp.eq.s32.totalorder %s53, 0
      %p246 = por %p244, %p245
      %p247 = scmp.ne.s32.totalorder %s239, %s241
      %p248 = scmp.eq.s32.totalorder %s58, 1
      %p249 = por %p247, %p248
      %p250 = scmp.ne.s32.totalorder %s241, %s242
      %p251 = scmp.eq.s32.totalorder %s58, 0
      %p252 = por %p250, %p251
      %p253 = scmp.ne.s32.totalorder %s241, %s242
      %p254 = scmp.eq.s32.totalorder %s59, 1
      %p255 = por %p253, %p254
      %p257 = scmp.ne.s32.totalorder %s242, %s256
      %p258 = scmp.eq.s32.totalorder %s59, 0
      %p259 = por %p257, %p258
      %s261 = sadd.s32 %s260, 1
      %p264 = scmp.eq.s32.totalorder %s53, 1
      %p265 = scmp.ne.s32.totalorder %s260, %s262
      %p266 = scmp.eq.s32.totalorder %s53, 0
      %p267 = por %p265, %p266
      %p268 = scmp.ne.s32.totalorder %s260, %s262
      %p269 = scmp.eq.s32.totalorder %s58, 1
      %p270 = por %p268, %p269
      %p271 = scmp.ne.s32.totalorder %s262, %s263
      %p272 = scmp.eq.s32.totalorder %s58, 0
      %p273 = por %p271, %p272
      %p274 = scmp.ne.s32.totalorder %s262, %s263
      %p275 = scmp.eq.s32.totalorder %s59, 1
      %p276 = por %p274, %p275
      %p278 = scmp.ne.s32.totalorder %s263, %s277
      %p279 = scmp.eq.s32.totalorder %s59, 0
      %p280 = por %p278, %p279
      %s282 = sadd.s32 %s281, 1
      %p285 = scmp.eq.s32.totalorder %s53, 1
      %p286 = scmp.ne.s32.totalorder %s281, %s283
      %p287 = scmp.eq.s32.totalorder %s53, 0
      %p288 = por %p286, %p287
      %p289 = scmp.ne.s32.totalorder %s281, %s283
      %p290 = scmp.eq.s32.totalorder %s58, 1
      %p291 = por %p289, %p290
      %p292 = scmp.ne.s32.totalorder %s283, %s284
      %p293 = scmp.eq.s32.totalorder %s58, 0
      %p294 = por %p292, %p293
      %p295 = scmp.ne.s32.totalorder %s283, %s284
      %p296 = scmp.eq.s32.totalorder %s59, 1
      %p297 = por %p295, %p296
      %p299 = scmp.ne.s32.totalorder %s284, %s298
      %p300 = scmp.eq.s32.totalorder %s59, 0
      %p301 = por %p299, %p300
      %s303 = sadd.s32 %s302, 1
      %p306 = scmp.eq.s32.totalorder %s53, 1
      %p307 = scmp.ne.s32.totalorder %s302, %s304
      %p308 = scmp.eq.s32.totalorder %s53, 0
      %p309 = por %p307, %p308
      %p310 = scmp.ne.s32.totalorder %s302, %s304
      %p311 = scmp.eq.s32.totalorder %s58, 1
      %p312 = por %p310, %p311
      %p313 = scmp.ne.s32.totalorder %s304, %s305
      %p314 = scmp.eq.s32.totalorder %s58, 0
      %p315 = por %p313, %p314
      %p316 = scmp.ne.s32.totalorder %s304, %s305
      %p317 = scmp.eq.s32.totalorder %s59, 1
      %p318 = por %p316, %p317
      %p320 = scmp.ne.s32.totalorder %s305, %s319
      %p321 = scmp.eq.s32.totalorder %s59, 0
      %p322 = por %p320, %p321
      %s324 = sadd.s32 %s323, 1
      %p327 = scmp.eq.s32.totalorder %s53, 1
      %p328 = scmp.ne.s32.totalorder %s323, %s325
      %p329 = scmp.eq.s32.totalorder %s53, 0
      %p330 = por %p328, %p329
      %p331 = scmp.ne.s32.totalorder %s323, %s325
      %p332 = scmp.eq.s32.totalorder %s58, 1
      %p333 = por %p331, %p332
      %p334 = scmp.ne.s32.totalorder %s325, %s326
      %p335 = scmp.eq.s32.totalorder %s58, 0
      %p336 = por %p334, %p335
      %p337 = scmp.ne.s32.totalorder %s325, %s326
      %p338 = scmp.eq.s32.totalorder %s59, 1
      %p339 = por %p337, %p338
      %p341 = scmp.ne.s32.totalorder %s326, %s340
      %p342 = scmp.eq.s32.totalorder %s59, 0
      %p343 = por %p341, %p342
      %s345 = sadd.s32 %s344, 1
      %p348 = scmp.eq.s32.totalorder %s53, 1
      %p349 = scmp.ne.s32.totalorder %s344, %s346
      %p350 = scmp.eq.s32.totalorder %s53, 0
      %p351 = por %p349, %p350
      %p352 = scmp.ne.s32.totalorder %s344, %s346
      %p353 = scmp.eq.s32.totalorder %s58, 1
      %p354 = por %p352, %p353
      %p355 = scmp.ne.s32.totalorder %s346, %s347
      %p356 = scmp.eq.s32.totalorder %s58, 0
      %p357 = por %p355, %p356
      %p358 = scmp.ne.s32.totalorder %s346, %s347
      %p359 = scmp.eq.s32.totalorder %s59, 1
      %p360 = por %p358, %p359
      %p362 = scmp.ne.s32.totalorder %s347, %s361
      %p363 = scmp.eq.s32.totalorder %s59, 0
      %p364 = por %p362, %p363
      %s366 = sadd.s32 %s365, 1
      %p369 = scmp.eq.s32.totalorder %s53, 1
      %p370 = scmp.ne.s32.totalorder %s365, %s367
      %p371 = scmp.eq.s32.totalorder %s53, 0
      %p372 = por %p370, %p371
      %p373 = scmp.ne.s32.totalorder %s365, %s367
      %p374 = scmp.eq.s32.totalorder %s58, 1
      %p375 = por %p373, %p374
      %p376 = scmp.ne.s32.totalorder %s367, %s368
      %p377 = scmp.eq.s32.totalorder %s58, 0
      %p378 = por %p376, %p377
      %p379 = scmp.ne.s32.totalorder %s367, %s368
      %p380 = scmp.eq.s32.totalorder %s59, 1
      %p381 = por %p379, %p380
      %p383 = scmp.ne.s32.totalorder %s368, %s382
      %p384 = scmp.eq.s32.totalorder %s59, 0
      %p385 = por %p383, %p384
      %s387 = sadd.s32 %s386, 1
      %p390 = scmp.eq.s32.totalorder %s53, 1
      %p391 = scmp.ne.s32.totalorder %s386, %s388
      %p392 = scmp.eq.s32.totalorder %s53, 0
      %p393 = por %p391, %p392
      %p394 = scmp.ne.s32.totalorder %s386, %s388
      %p395 = scmp.eq.s32.totalorder %s58, 1
      %p396 = por %p394, %p395
      %p397 = scmp.ne.s32.totalorder %s388, %s389
      %p398 = scmp.eq.s32.totalorder %s58, 0
      %p399 = por %p397, %p398
      %p400 = scmp.ne.s32.totalorder %s388, %s389
      %p401 = scmp.eq.s32.totalorder %s59, 1
      %p402 = por %p400, %p401
      %p404 = scmp.ne.s32.totalorder %s389, %s403
      %p405 = scmp.eq.s32.totalorder %s59, 0
      %p406 = por %p404, %p405
      %s408 = sadd.s32 %s407, 1
      %p411 = scmp.eq.s32.totalorder %s53, 1
      %p412 = scmp.ne.s32.totalorder %s407, %s409
      %p413 = scmp.eq.s32.totalorder %s53, 0
      %p414 = por %p412, %p413
      %p415 = scmp.ne.s32.totalorder %s407, %s409
      %p416 = scmp.eq.s32.totalorder %s58, 1
      %p417 = por %p415, %p416
      %p418 = scmp.ne.s32.totalorder %s409, %s410
      %p419 = scmp.eq.s32.totalorder %s58, 0
      %p420 = por %p418, %p419
      %p421 = scmp.ne.s32.totalorder %s409, %s410
      %p422 = scmp.eq.s32.totalorder %s59, 1
      %p423 = por %p421, %p422
      %p425 = scmp.ne.s32.totalorder %s410, %s424
      %p426 = scmp.eq.s32.totalorder %s59, 0
      %p427 = por %p425, %p426
      %s429 = sadd.s32 %s428, 1
      %p432 = scmp.eq.s32.totalorder %s53, 1
      %p433 = scmp.ne.s32.totalorder %s428, %s430
      %p434 = scmp.eq.s32.totalorder %s53, 0
      %p435 = por %p433, %p434
      %p436 = scmp.ne.s32.totalorder %s428, %s430
      %p437 = scmp.eq.s32.totalorder %s58, 1
      %p438 = por %p436, %p437
      %p439 = scmp.ne.s32.totalorder %s430, %s431
      %p440 = scmp.eq.s32.totalorder %s58, 0
      %p441 = por %p439, %p440
      %p442 = scmp.ne.s32.totalorder %s430, %s431
      %p443 = scmp.eq.s32.totalorder %s59, 1
      %p444 = por %p442, %p443
      %p446 = scmp.ne.s32.totalorder %s431, %s445
      %p447 = scmp.eq.s32.totalorder %s59, 0
      %p448 = por %p446, %p447
      %s450 = sadd.s32 %s449, 1
      %p453 = scmp.eq.s32.totalorder %s53, 1
      %p454 = scmp.ne.s32.totalorder %s449, %s451
      %p455 = scmp.eq.s32.totalorder %s53, 0
      %p456 = por %p454, %p455
      %p457 = scmp.ne.s32.totalorder %s449, %s451
      %p458 = scmp.eq.s32.totalorder %s58, 1
      %p459 = por %p457, %p458
      %p460 = scmp.ne.s32.totalorder %s451, %s452
      %p461 = scmp.eq.s32.totalorder %s58, 0
      %p462 = por %p460, %p461
      %p463 = scmp.ne.s32.totalorder %s451, %s452
      %p464 = scmp.eq.s32.totalorder %s59, 1
      %p465 = por %p463, %p464
      %p467 = scmp.ne.s32.totalorder %s452, %s466
      %p468 = scmp.eq.s32.totalorder %s59, 0
      %p469 = por %p467, %p468
      %s471 = sadd.s32 %s470, 1
      %p474 = scmp.eq.s32.totalorder %s53, 1
      %p475 = scmp.ne.s32.totalorder %s470, %s472
      %p476 = scmp.eq.s32.totalorder %s53, 0
      %p477 = por %p475, %p476
      %p478 = scmp.ne.s32.totalorder %s470, %s472
      %p479 = scmp.eq.s32.totalorder %s58, 1
      %p480 = por %p478, %p479
      %p481 = scmp.ne.s32.totalorder %s472, %s473
      %p482 = scmp.eq.s32.totalorder %s58, 0
      %p483 = por %p481, %p482
      %p484 = scmp.ne.s32.totalorder %s472, %s473
      %p485 = scmp.eq.s32.totalorder %s59, 1
      %p486 = por %p484, %p485
      %p488 = scmp.ne.s32.totalorder %s473, %s487
      %p489 = scmp.eq.s32.totalorder %s59, 0
      %p490 = por %p488, %p489
      %s492 = sadd.s32 %s491, 1
      %p495 = scmp.eq.s32.totalorder %s53, 1
      %p496 = scmp.ne.s32.totalorder %s491, %s493
      %p497 = scmp.eq.s32.totalorder %s53, 0
      %p498 = por %p496, %p497
      %p499 = scmp.ne.s32.totalorder %s491, %s493
      %p500 = scmp.eq.s32.totalorder %s58, 1
      %p501 = por %p499, %p500
      %p502 = scmp.ne.s32.totalorder %s493, %s494
      %p503 = scmp.eq.s32.totalorder %s58, 0
      %p504 = por %p502, %p503
      %p505 = scmp.ne.s32.totalorder %s493, %s494
      %p506 = scmp.eq.s32.totalorder %s59, 1
      %p507 = por %p505, %p506
      %p509 = scmp.ne.s32.totalorder %s494, %s508
      %p510 = scmp.eq.s32.totalorder %s59, 0
      %p511 = por %p509, %p510
      %s513 = sadd.s32 %s512, 1
      %p516 = scmp.eq.s32.totalorder %s53, 1
      %p517 = scmp.ne.s32.totalorder %s512, %s514
      %p518 = scmp.eq.s32.totalorder %s53, 0
      %p519 = por %p517, %p518
      %p520 = scmp.ne.s32.totalorder %s512, %s514
      %p521 = scmp.eq.s32.totalorder %s58, 1
      %p522 = por %p520, %p521
      %p523 = scmp.ne.s32.totalorder %s514, %s515
      %p524 = scmp.eq.s32.totalorder %s58, 0
      %p525 = por %p523, %p524
      %p526 = scmp.ne.s32.totalorder %s514, %s515
      %p527 = scmp.eq.s32.totalorder %s59, 1
      %p528 = por %p526, %p527
      %p530 = scmp.ne.s32.totalorder %s515, %s529
      %p531 = scmp.eq.s32.totalorder %s59, 0
      %p532 = por %p530, %p531
      %s534 = sadd.s32 %s533, 1
      %p537 = scmp.eq.s32.totalorder %s53, 1
      %p538 = scmp.ne.s32.totalorder %s533, %s535
      %p539 = scmp.eq.s32.totalorder %s53, 0
      %p540 = por %p538, %p539
      %p541 = scmp.ne.s32.totalorder %s533, %s535
      %p542 = scmp.eq.s32.totalorder %s58, 1
      %p543 = por %p541, %p542
      %p544 = scmp.ne.s32.totalorder %s535, %s536
      %p545 = scmp.eq.s32.totalorder %s58, 0
      %p546 = por %p544, %p545
      %p547 = scmp.ne.s32.totalorder %s535, %s536
      %p548 = scmp.eq.s32.totalorder %s59, 1
      %p549 = por %p547, %p548
      %p551 = scmp.ne.s32.totalorder %s536, %s550
      %p552 = scmp.eq.s32.totalorder %s59, 0
      %p553 = por %p551, %p552
      %s555 = sadd.s32 %s554, 1
      %p558 = scmp.eq.s32.totalorder %s53, 1
      %p559 = scmp.ne.s32.totalorder %s554, %s556
      %p560 = scmp.eq.s32.totalorder %s53, 0
      %p561 = por %p559, %p560
      %p562 = scmp.ne.s32.totalorder %s554, %s556
      %p563 = scmp.eq.s32.totalorder %s58, 1
      %p564 = por %p562, %p563
      %p565 = scmp.ne.s32.totalorder %s556, %s557
      %p566 = scmp.eq.s32.totalorder %s58, 0
      %p567 = por %p565, %p566
      %p568 = scmp.ne.s32.totalorder %s556, %s557
      %p569 = scmp.eq.s32.totalorder %s59, 1
      %p570 = por %p568, %p569
      %p572 = scmp.ne.s32.totalorder %s557, %s571
      %p573 = scmp.eq.s32.totalorder %s59, 0
      %p574 = por %p572, %p573
      %s575 = ssub.s32 %s53, %s60
      %p576 = scmp.eq.s32.totalorder %s575, 0
      %s578 = sadd.s32 %s577, 1
      %s579 = scalar_select %p576, %s577, %s578
      %p582 = pneg %p576
      %p583 = scmp.eq.s32.totalorder %s53, 1
      %p584 = por %p582, %p583
      %p585 = scmp.ne.s32.totalorder %s577, %s580
      %p586 = scmp.eq.s32.totalorder %s53, 0
      %p587 = por %p585, %p586
      %p588 = scmp.ne.s32.totalorder %s577, %s580
      %p589 = scmp.eq.s32.totalorder %s58, 1
      %p590 = por %p588, %p589
      %p591 = scmp.ne.s32.totalorder %s580, %s581
      %p592 = scmp.eq.s32.totalorder %s58, 0
      %p593 = por %p591, %p592
      %p594 = scmp.ne.s32.totalorder %s580, %s581
      %p595 = scmp.eq.s32.totalorder %s59, 1
      %p596 = por %p594, %p595
      %p598 = scmp.ne.s32.totalorder %s581, %s597
      %p599 = scmp.eq.s32.totalorder %s59, 0
      %p600 = por %p598, %p599
      %s601 = ssub.s32 %s53, %s60
      %p602 = scmp.eq.s32.totalorder %s601, 0
      %s604 = sadd.s32 %s603, 1
      %s605 = scalar_select %p602, %s603, %s604
      %p608 = pneg %p602
      %p609 = scmp.eq.s32.totalorder %s53, 1
      %p610 = por %p608, %p609
      %p611 = scmp.ne.s32.totalorder %s603, %s606
      %p612 = scmp.eq.s32.totalorder %s53, 0
      %p613 = por %p611, %p612
      %p614 = scmp.ne.s32.totalorder %s603, %s606
      %p615 = scmp.eq.s32.totalorder %s58, 1
      %p616 = por %p614, %p615
      %p617 = scmp.ne.s32.totalorder %s606, %s607
      %p618 = scmp.eq.s32.totalorder %s58, 0
      %p619 = por %p617, %p618
      %p620 = scmp.ne.s32.totalorder %s606, %s607
      %p621 = scmp.eq.s32.totalorder %s59, 1
      %p622 = por %p620, %p621
      %p624 = scmp.ne.s32.totalorder %s607, %s623
      %p625 = scmp.eq.s32.totalorder %s59, 0
      %p626 = por %p624, %p625
      %s627 = ssub.s32 %s53, %s60
      %p628 = scmp.eq.s32.totalorder %s627, 0
      %s630 = sadd.s32 %s629, 1
      %s631 = scalar_select %p628, %s629, %s630
      %p634 = pneg %p628
      %p635 = scmp.eq.s32.totalorder %s53, 1
      %p636 = por %p634, %p635
      %p637 = scmp.ne.s32.totalorder %s629, %s632
      %p638 = scmp.eq.s32.totalorder %s53, 0
      %p639 = por %p637, %p638
      %p640 = scmp.ne.s32.totalorder %s629, %s632
      %p641 = scmp.eq.s32.totalorder %s58, 1
      %p642 = por %p640, %p641
      %p643 = scmp.ne.s32.totalorder %s632, %s633
      %p644 = scmp.eq.s32.totalorder %s58, 0
      %p645 = por %p643, %p644
      %p646 = scmp.ne.s32.totalorder %s632, %s633
      %p647 = scmp.eq.s32.totalorder %s59, 1
      %p648 = por %p646, %p647
      %p650 = scmp.ne.s32.totalorder %s633, %s649
      %p651 = scmp.eq.s32.totalorder %s59, 0
      %p652 = por %p650, %p651
      %s653 = ssub.s32 %s53, %s60
      %p654 = scmp.eq.s32.totalorder %s653, 0
      %s656 = sadd.s32 %s655, 1
      %s657 = scalar_select %p654, %s655, %s656
      %p660 = pneg %p654
      %p661 = scmp.eq.s32.totalorder %s53, 1
      %p662 = por %p660, %p661
      %p663 = scmp.ne.s32.totalorder %s655, %s658
      %p664 = scmp.eq.s32.totalorder %s53, 0
      %p665 = por %p663, %p664
      %p666 = scmp.ne.s32.totalorder %s655, %s658
      %p667 = scmp.eq.s32.totalorder %s58, 1
      %p668 = por %p666, %p667
      %p669 = scmp.ne.s32.totalorder %s658, %s659
      %p670 = scmp.eq.s32.totalorder %s58, 0
      %p671 = por %p669, %p670
      %p672 = scmp.ne.s32.totalorder %s658, %s659
      %p673 = scmp.eq.s32.totalorder %s59, 1
      %p674 = por %p672, %p673
      %p676 = scmp.ne.s32.totalorder %s659, %s675
      %p677 = scmp.eq.s32.totalorder %s59, 0
      %p678 = por %p676, %p677
      %p679 = scmp.le.s32.totalorder 1, %s53
      %p680 = scmp.lt.s32.totalorder %s53, 3
      %p681 = pnand %p679, %p680
      %p682 = pneg %p681
      // Predicated region
      $region9: #{tpu_custom_call.1} parent=5 // pred_check
        _
      $region10: #{tpu_custom_call.1} parent=5 // pred_check_branch
        %684 = sbr.rel (%p681) target = $region12
      $region11: #{tpu_custom_call.1} parent=5 // pred_region
        %s685 = ssub.s32 %s53, 1
        // Predicated region
        $region13: #{tpu_custom_call.1} parent=11 // pred_check
          %p686 = pneg %p126
        $region14: #{tpu_custom_call.1} parent=11 // pred_check_branch
          %688 = sbr.rel (%p686) target = $region16
        $region15: #{tpu_custom_call.1} parent=11 // pred_region
          _
        $region16: #{tpu_custom_call.1} parent=11 // pred_fallthru
          _
        // Predicated region
        $region17: #{tpu_custom_call.1} parent=11 // pred_check
          %p689 = pneg %p147
        $region18: #{tpu_custom_call.1} parent=11 // pred_check_branch
          %691 = sbr.rel (%p689) target = $region20
        $region19: #{tpu_custom_call.1} parent=11 // pred_region
          _
        $region20: #{tpu_custom_call.1} parent=11 // pred_fallthru
          _
        // Predicated region
        $region21: #{tpu_custom_call.1} parent=11 // pred_check
          %p692 = pneg %p168
        $region22: #{tpu_custom_call.1} parent=11 // pred_check_branch
          %694 = sbr.rel (%p692) target = $region24
        $region23: #{tpu_custom_call.1} parent=11 // pred_region
          %s696 = ssub.s32 1024, 1024
          %697 = vsyncadd [#allocation6], %s696
          %s698 = sshll.u32 [#allocation7], 4
          %s699 = int_to_ptr.vmem [resolvable:$true] %s698
          %704 = dma.hbm_to_vmem [thread:$0]  %s4, 1024, %s699, [#allocation6], 64, 64, 4
        $region24: #{tpu_custom_call.1} parent=11 // pred_fallthru
          _
        // Predicated region
        $region25: #{tpu_custom_call.1} parent=11 // pred_check
          %p705 = pneg %p189
        $region26: #{tpu_custom_call.1} parent=11 // pred_check_branch
          %707 = sbr.rel (%p705) target = $region28
        $region27: #{tpu_custom_call.1} parent=11 // pred_region
          _
        $region28: #{tpu_custom_call.1} parent=11 // pred_fallthru
          _
        // Predicated region
        $region29: #{tpu_custom_call.1} parent=11 // pred_check
          %p708 = pneg %p210
        $region30: #{tpu_custom_call.1} parent=11 // pred_check_branch
          %710 = sbr.rel (%p708) target = $region32
        $region31: #{tpu_custom_call.1} parent=11 // pred_region
          %s712 = ssub.s32 1024, 1024
          %713 = vsyncadd [#allocation9], %s712
          %s714 = sshll.u32 [#allocation8], 4
          %s715 = int_to_ptr.vmem [resolvable:$true] %s714
          %720 = dma.hbm_to_vmem [thread:$0]  %s6, 1024, %s715, [#allocation9], 64, 64, 4
        $region32: #{tpu_custom_call.1} parent=11 // pred_fallthru
          _
        // Predicated region
        $region33: #{tpu_custom_call.1} parent=11 // pred_check
          %p721 = pneg %p231
        $region34: #{tpu_custom_call.1} parent=11 // pred_check_branch
          %723 = sbr.rel (%p721) target = $region36
        $region35: #{tpu_custom_call.1} parent=11 // pred_region
          _
        $region36: #{tpu_custom_call.1} parent=11 // pred_fallthru
          _
        // Predicated region
        $region37: #{tpu_custom_call.1} parent=11 // pred_check
          %p724 = pneg %p252
        $region38: #{tpu_custom_call.1} parent=11 // pred_check_branch
          %726 = sbr.rel (%p724) target = $region40
        $region39: #{tpu_custom_call.1} parent=11 // pred_region
          %s728 = ssub.s32 1024, 1024
          %729 = vsyncadd [#allocation9], %s728
          %s730 = sshll.u32 [#allocation10], 4
          %s731 = int_to_ptr.vmem [resolvable:$true] %s730
          %736 = dma.hbm_to_vmem [thread:$0]  %s8, 1024, %s731, [#allocation9], 64, 64, 4
        $region40: #{tpu_custom_call.1} parent=11 // pred_fallthru
          _
        // Predicated region
        $region41: #{tpu_custom_call.1} parent=11 // pred_check
          %p737 = pneg %p273
        $region42: #{tpu_custom_call.1} parent=11 // pred_check_branch
          %739 = sbr.rel (%p737) target = $region44
        $region43: #{tpu_custom_call.1} parent=11 // pred_region
          _
        $region44: #{tpu_custom_call.1} parent=11 // pred_fallthru
          _
        // Predicated region
        $region45: #{tpu_custom_call.1} parent=11 // pred_check
          %p740 = pneg %p294
        $region46: #{tpu_custom_call.1} parent=11 // pred_check_branch
          %742 = sbr.rel (%p740) target = $region48
        $region47: #{tpu_custom_call.1} parent=11 // pred_region
          %s744 = ssub.s32 1024, 1024
          %745 = vsyncadd [#allocation12], %s744
          %s746 = sshll.u32 [#allocation11], 4
          %s747 = int_to_ptr.vmem [resolvable:$true] %s746
          %752 = dma.hbm_to_vmem [thread:$0]  %s10, 1024, %s747, [#allocation12], 64, 64, 4
        $region48: #{tpu_custom_call.1} parent=11 // pred_fallthru
          _
        // Predicated region
        $region49: #{tpu_custom_call.1} parent=11 // pred_check
          %p753 = pneg %p315
        $region50: #{tpu_custom_call.1} parent=11 // pred_check_branch
          %755 = sbr.rel (%p753) target = $region52
        $region51: #{tpu_custom_call.1} parent=11 // pred_region
          _
        $region52: #{tpu_custom_call.1} parent=11 // pred_fallthru
          _
        // Predicated region
        $region53: #{tpu_custom_call.1} parent=11 // pred_check
          %p756 = pneg %p336
        $region54: #{tpu_custom_call.1} parent=11 // pred_check_branch
          %758 = sbr.rel (%p756) target = $region56
        $region55: #{tpu_custom_call.1} parent=11 // pred_region
          _
        $region56: #{tpu_custom_call.1} parent=11 // pred_fallthru
          _
        // Predicated region
        $region57: #{tpu_custom_call.1} parent=11 // pred_check
          %p759 = pneg %p357
        $region58: #{tpu_custom_call.1} parent=11 // pred_check_branch
          %761 = sbr.rel (%p759) target = $region60
        $region59: #{tpu_custom_call.1} parent=11 // pred_region
          _
        $region60: #{tpu_custom_call.1} parent=11 // pred_fallthru
          _
        // Predicated region
        $region61: #{tpu_custom_call.1} parent=11 // pred_check
          %p762 = pneg %p378
        $region62: #{tpu_custom_call.1} parent=11 // pred_check_branch
          %764 = sbr.rel (%p762) target = $region64
        $region63: #{tpu_custom_call.1} parent=11 // pred_region
          %s766 = ssub.s32 2048, 2048
          %767 = vsyncadd [#allocation12], %s766
          %s768 = sshll.u32 [#allocation13], 4
          %s769 = int_to_ptr.vmem [resolvable:$true] %s768
          %774 = dma.hbm_to_vmem [thread:$0]  %s14, 2048, %s769, [#allocation12], 128, 128, 8
        $region64: #{tpu_custom_call.1} parent=11 // pred_fallthru
          _
        // Predicated region
        $region65: #{tpu_custom_call.1} parent=11 // pred_check
          %p775 = pneg %p399
        $region66: #{tpu_custom_call.1} parent=11 // pred_check_branch
          %777 = sbr.rel (%p775) target = $region68
        $region67: #{tpu_custom_call.1} parent=11 // pred_region
          _
        $region68: #{tpu_custom_call.1} parent=11 // pred_fallthru
          _
        // Predicated region
        $region69: #{tpu_custom_call.1} parent=11 // pred_check
          %p778 = pneg %p420
        $region70: #{tpu_custom_call.1} parent=11 // pred_check_branch
          %780 = sbr.rel (%p778) target = $region72
        $region71: #{tpu_custom_call.1} parent=11 // pred_region
          %s782 = ssub.s32 2048, 2048
          %783 = vsyncadd [#allocation15], %s782
          %s784 = sshll.u32 [#allocation14], 4
          %s785 = int_to_ptr.vmem [resolvable:$true] %s784
          %790 = dma.hbm_to_vmem [thread:$0]  %s16, 2048, %s785, [#allocation15], 64, 64, 4
        $region72: #{tpu_custom_call.1} parent=11 // pred_fallthru
          _
        // Predicated region
        $region73: #{tpu_custom_call.1} parent=11 // pred_check
          %p791 = pneg %p441
        $region74: #{tpu_custom_call.1} parent=11 // pred_check_branch
          %793 = sbr.rel (%p791) target = $region76
        $region75: #{tpu_custom_call.1} parent=11 // pred_region
          _
        $region76: #{tpu_custom_call.1} parent=11 // pred_fallthru
          _
        // Predicated region
        $region77: #{tpu_custom_call.1} parent=11 // pred_check
          %p794 = pneg %p462
        $region78: #{tpu_custom_call.1} parent=11 // pred_check_branch
          %796 = sbr.rel (%p794) target = $region80
        $region79: #{tpu_custom_call.1} parent=11 // pred_region
          _
        $region80: #{tpu_custom_call.1} parent=11 // pred_fallthru
          _
        // Predicated region
        $region81: #{tpu_custom_call.1} parent=11 // pred_check
          %p797 = pneg %p483
        $region82: #{tpu_custom_call.1} parent=11 // pred_check_branch
          %799 = sbr.rel (%p797) target = $region84
        $region83: #{tpu_custom_call.1} parent=11 // pred_region
          _
        $region84: #{tpu_custom_call.1} parent=11 // pred_fallthru
          _
        // Predicated region
        $region85: #{tpu_custom_call.1} parent=11 // pred_check
          %p800 = pneg %p504
        $region86: #{tpu_custom_call.1} parent=11 // pred_check_branch
          %802 = sbr.rel (%p800) target = $region88
        $region87: #{tpu_custom_call.1} parent=11 // pred_region
          %s804 = ssub.s32 2048, 2048
          %805 = vsyncadd [#allocation15], %s804
          %s806 = sshll.u32 [#allocation16], 4
          %s807 = int_to_ptr.vmem [resolvable:$true] %s806
          %812 = dma.hbm_to_vmem [thread:$0]  %s20, 2048, %s807, [#allocation15], 128, 128, 8
        $region88: #{tpu_custom_call.1} parent=11 // pred_fallthru
          _
        // Predicated region
        $region89: #{tpu_custom_call.1} parent=11 // pred_check
          %p813 = pneg %p525
        $region90: #{tpu_custom_call.1} parent=11 // pred_check_branch
          %815 = sbr.rel (%p813) target = $region92
        $region91: #{tpu_custom_call.1} parent=11 // pred_region
          _
        $region92: #{tpu_custom_call.1} parent=11 // pred_fallthru
          _
        // Predicated region
        $region93: #{tpu_custom_call.1} parent=11 // pred_check
          %p816 = pneg %p546
        $region94: #{tpu_custom_call.1} parent=11 // pred_check_branch
          %818 = sbr.rel (%p816) target = $region96
        $region95: #{tpu_custom_call.1} parent=11 // pred_region
          %s820 = ssub.s32 2048, 2048
          %821 = vsyncadd [#allocation18], %s820
          %s822 = sshll.u32 [#allocation17], 4
          %s823 = int_to_ptr.vmem [resolvable:$true] %s822
          %828 = dma.hbm_to_vmem [thread:$0]  %s22, 2048, %s823, [#allocation18], 64, 64, 4
        $region96: #{tpu_custom_call.1} parent=11 // pred_fallthru
          _
        // Predicated region
        $region97: #{tpu_custom_call.1} parent=11 // pred_check
          %p829 = pneg %p567
        $region98: #{tpu_custom_call.1} parent=11 // pred_check_branch
          %831 = sbr.rel (%p829) target = $region100
        $region99: #{tpu_custom_call.1} parent=11 // pred_region
          _
        $region100: #{tpu_custom_call.1} parent=11 // pred_fallthru
          _
      $region12: #{tpu_custom_call.1} parent=5 // pred_fallthru
        _
      %p832 = scmp.lt.s32.totalorder %s53, 2
      // Predicated region
      $region101: #{tpu_custom_call.1} parent=5 // pred_check
        %p833 = pneg %p832
      $region102: #{tpu_custom_call.1} parent=5 // pred_check_branch
        %835 = sbr.rel (%p833) target = $region104
      $region103: #{tpu_custom_call.1} parent=5 // pred_region
        // Predicated region
        $region105: #{tpu_custom_call.1} parent=103 // pred_check
          %p836 = pneg %p73
        $region106: #{tpu_custom_call.1} parent=103 // pred_check_branch
          %838 = sbr.rel (%p836) target = $region108
        $region107: #{tpu_custom_call.1} parent=103 // pred_region
          %s839 = sand.u32 %s63, 1
          %s840 = scalar_lea.sflag [#allocation3], %s839
          %s841 = sand.u32 %s63, 1
          %s842 = smul.addr %s841, 8
          %s843 = scalar_lea.vmem [#allocation2], %s842
          %s845 = ssub.s32 128, 128
          %846 = vsyncadd %s840, %s845
          %s847 = smul.addr %s53, 128
          %s848 = scalar_lea.hbm %s0, %s847
          %s850 = sshll.u32 %s843, 4
          %s851 = int_to_ptr.vmem [resolvable:$true] %s850
          %853 = dma.hbm_to_vmem [thread:$0]  %s848, 128, %s851, %s840
        $region108: #{tpu_custom_call.1} parent=103 // pred_fallthru
          _
        // Predicated region
        $region109: #{tpu_custom_call.1} parent=103 // pred_check
          %p854 = pneg %p99
        $region110: #{tpu_custom_call.1} parent=103 // pred_check_branch
          %856 = sbr.rel (%p854) target = $region112
        $region111: #{tpu_custom_call.1} parent=103 // pred_region
          %s857 = sand.u32 %s53, 1
          %s858 = scalar_lea.sflag [#allocation6], %s857
          %s859 = sand.u32 %s89, 1
          %s860 = smul.addr %s859, 8
          %s861 = scalar_lea.vmem [#allocation5], %s860
          %s863 = ssub.s32 128, 128
          %864 = vsyncadd %s858, %s863
          %s865 = smul.addr %s53, 128
          %s866 = scalar_lea.hbm %s1, %s865
          %s868 = sshll.u32 %s861, 4
          %s869 = int_to_ptr.vmem [resolvable:$true] %s868
          %871 = dma.hbm_to_vmem [thread:$0]  %s866, 128, %s869, %s858
        $region112: #{tpu_custom_call.1} parent=103 // pred_fallthru
          _
      $region104: #{tpu_custom_call.1} parent=5 // pred_fallthru
        _
      %p872 = scmp.le.s32.totalorder 1, %s53
      %p873 = scmp.lt.s32.totalorder %s53, 3
      %p874 = pnand %p872, %p873
      %p875 = pneg %p874
      // Predicated region
      $region113: #{tpu_custom_call.1} parent=5 // pred_check
        _
      $region114: #{tpu_custom_call.1} parent=5 // pred_check_branch
        %877 = sbr.rel (%p874) target = $region116
      $region115: #{tpu_custom_call.1} parent=5 // pred_region
        %s878 = ssub.s32 %s53, 1
        %s879 = sand.u32 %s66, 1
        %s880 = scalar_lea.sflag [#allocation3], %s879
        %s881 = sand.u32 %s66, 1
        %s882 = smul.addr %s881, 8
        %s883 = scalar_lea.vmem [#allocation2], %s882
        // Predicated region
        $region117: #{tpu_custom_call.1} parent=115 // pred_check
          %p884 = pneg %p79
        $region118: #{tpu_custom_call.1} parent=115 // pred_check_branch
          %886 = sbr.rel (%p884) target = $region120
        $region119: #{tpu_custom_call.1} parent=115 // pred_region
          %887 = dma.done %s880, 128
        $region120: #{tpu_custom_call.1} parent=115 // pred_fallthru
          _
        %s888 = sand.u32 %s58, 1
        %s889 = scalar_lea.sflag [#allocation6], %s888
        %s890 = sand.u32 %s92, 1
        %s891 = smul.addr %s890, 8
        %s892 = scalar_lea.vmem [#allocation5], %s891
        // Predicated region
        $region121: #{tpu_custom_call.1} parent=115 // pred_check
          %p893 = pneg %p105
        $region122: #{tpu_custom_call.1} parent=115 // pred_check_branch
          %895 = sbr.rel (%p893) target = $region124
        $region123: #{tpu_custom_call.1} parent=115 // pred_region
          %896 = dma.done %s889, 128
        $region124: #{tpu_custom_call.1} parent=115 // pred_fallthru
          _
        // Predicated region
        $region125: #{tpu_custom_call.1} parent=115 // pred_check
          %p897 = pneg %p168
        $region126: #{tpu_custom_call.1} parent=115 // pred_check_branch
          %899 = sbr.rel (%p897) target = $region128
        $region127: #{tpu_custom_call.1} parent=115 // pred_region
          %900 = dma.done [#allocation6], 1024
        $region128: #{tpu_custom_call.1} parent=115 // pred_fallthru
          _
        // Predicated region
        $region129: #{tpu_custom_call.1} parent=115 // pred_check
          %p901 = pneg %p210
        $region130: #{tpu_custom_call.1} parent=115 // pred_check_branch
          %903 = sbr.rel (%p901) target = $region132
        $region131: #{tpu_custom_call.1} parent=115 // pred_region
          %904 = dma.done [#allocation9], 1024
        $region132: #{tpu_custom_call.1} parent=115 // pred_fallthru
          _
        // Predicated region
        $region133: #{tpu_custom_call.1} parent=115 // pred_check
          %p905 = pneg %p252
        $region134: #{tpu_custom_call.1} parent=115 // pred_check_branch
          %907 = sbr.rel (%p905) target = $region136
        $region135: #{tpu_custom_call.1} parent=115 // pred_region
          %908 = dma.done [#allocation9], 1024
        $region136: #{tpu_custom_call.1} parent=115 // pred_fallthru
          _
        // Predicated region
        $region137: #{tpu_custom_call.1} parent=115 // pred_check
          %p909 = pneg %p294
        $region138: #{tpu_custom_call.1} parent=115 // pred_check_branch
          %911 = sbr.rel (%p909) target = $region140
        $region139: #{tpu_custom_call.1} parent=115 // pred_region
          %912 = dma.done [#allocation12], 1024
        $region140: #{tpu_custom_call.1} parent=115 // pred_fallthru
          _
        // Predicated region
        $region141: #{tpu_custom_call.1} parent=115 // pred_check
          %p913 = pneg %p378
        $region142: #{tpu_custom_call.1} parent=115 // pred_check_branch
          %915 = sbr.rel (%p913) target = $region144
        $region143: #{tpu_custom_call.1} parent=115 // pred_region
          %916 = dma.done [#allocation12], 2048
        $region144: #{tpu_custom_call.1} parent=115 // pred_fallthru
          _
        // Predicated region
        $region145: #{tpu_custom_call.1} parent=115 // pred_check
          %p917 = pneg %p420
        $region146: #{tpu_custom_call.1} parent=115 // pred_check_branch
          %919 = sbr.rel (%p917) target = $region148
        $region147: #{tpu_custom_call.1} parent=115 // pred_region
          %920 = dma.done [#allocation15], 2048
        $region148: #{tpu_custom_call.1} parent=115 // pred_fallthru
          _
        // Predicated region
        $region149: #{tpu_custom_call.1} parent=115 // pred_check
          %p921 = pneg %p504
        $region150: #{tpu_custom_call.1} parent=115 // pred_check_branch
          %923 = sbr.rel (%p921) target = $region152
        $region151: #{tpu_custom_call.1} parent=115 // pred_region
          %924 = dma.done [#allocation15], 2048
        $region152: #{tpu_custom_call.1} parent=115 // pred_fallthru
          _
        // Predicated region
        $region153: #{tpu_custom_call.1} parent=115 // pred_check
          %p925 = pneg %p546
        $region154: #{tpu_custom_call.1} parent=115 // pred_check_branch
          %927 = sbr.rel (%p925) target = $region156
        $region155: #{tpu_custom_call.1} parent=115 // pred_region
          %928 = dma.done [#allocation18], 2048
        $region156: #{tpu_custom_call.1} parent=115 // pred_fallthru
          _
        %s929 = sand.u32 %s66, 1
        %s930 = scalar_lea.sflag [#allocation3], %s929
        %s931 = sand.u32 %s66, 1
        %s932 = smul.addr %s931, 8
        %s933 = scalar_lea.vmem [#allocation2], %s932
        %p934 = pneg %p79
        %p935 = pneg %p76
        %s936 = sand.u32 %s58, 1
        %s937 = scalar_lea.sflag [#allocation6], %s936
        %s938 = sand.u32 %s92, 1
        %s939 = smul.addr %s938, 8
        %s940 = scalar_lea.vmem [#allocation5], %s939
        %p941 = pneg %p105
        %p942 = pneg %p102
        %p943 = pneg %p126
        %p944 = pneg %p123
        %p945 = pneg %p147
        %p946 = pneg %p144
        %p947 = pneg %p168
        %p948 = pneg %p165
        %p949 = pneg %p189
        %p950 = pneg %p186
        %p951 = pneg %p210
        %p952 = pneg %p207
        %p953 = pneg %p231
        %p954 = pneg %p228
        %p955 = pneg %p252
        %p956 = pneg %p249
        %p957 = pneg %p273
        %p958 = pneg %p270
        %p959 = pneg %p294
        %p960 = pneg %p291
        %p961 = pneg %p315
        %p962 = pneg %p312
        %p963 = pneg %p336
        %p964 = pneg %p333
        %p965 = pneg %p357
        %p966 = pneg %p354
        %p967 = pneg %p378
        %p968 = pneg %p375
        %p969 = pneg %p399
        %p970 = pneg %p396
        %p971 = pneg %p420
        %p972 = pneg %p417
        %p973 = pneg %p441
        %p974 = pneg %p438
        %p975 = pneg %p462
        %p976 = pneg %p459
        %p977 = pneg %p483
        %p978 = pneg %p480
        %p979 = pneg %p504
        %p980 = pneg %p501
        %p981 = pneg %p525
        %p982 = pneg %p522
        %p983 = pneg %p546
        %p984 = pneg %p543
        %p985 = pneg %p567
        %p986 = pneg %p564
        %p987 = pneg %p593
        %p988 = pneg %p590
        %s989 = sand.u32 %s580, 1
        %s990 = scalar_lea.sflag [#allocation4], %s989
        %s991 = sand.u32 %s580, 1
        %s992 = smul.addr %s991, 8
        %s993 = scalar_lea.vmem [#allocation19], %s992
        %p994 = pneg %p619
        %p995 = pneg %p616
        %s996 = sand.u32 %s58, 1
        %s997 = scalar_lea.sflag [#allocation21], %s996
        %s998 = sand.u32 %s606, 1
        %s999 = smul.addr %s998, 8
        %s1000 = scalar_lea.vmem [#allocation20], %s999
        %p1001 = pneg %p645
        %p1002 = pneg %p642
        %s1003 = sand.u32 %s58, 1
        %s1004 = scalar_lea.sflag [#allocation21], %s1003
        %s1005 = sand.u32 %s632, 1
        %s1006 = smul.addr %s1005, 32
        %s1007 = scalar_lea.vmem [#allocation22], %s1006
        %p1008 = pneg %p671
        %p1009 = pneg %p668
        %s1010 = sand.u32 %s658, 1
        %s1011 = scalar_lea.sflag [#allocation24], %s1010
        %s1012 = sand.u32 %s658, 1
        %s1013 = smul.addr %s1012, 32
        %s1014 = scalar_lea.vmem [#allocation23], %s1013
        %v1016 = vld [vmem:[%s883] sm:$0xff]
        %v1017 = vld [vmem:[%s892] sm:$0xff]
        %1018 = vadd.xlane.f32.xlu0 %v1016
        %v1019 = vpop.xlane.xlu0 %1018
        %v1020 = vrcp.pop 128.0
        %v1021 = vmul.f32 %v1019, %v1020
        %v1022 = vsub.f32 %v1016, %v1021
        %v1023 = vmul.f32 %v1022, %v1022
        %1024 = vadd.xlane.f32.xlu0 %v1023
        %v1025 = vpop.xlane.xlu0 %1024
        %v1026 = vmul.f32 %v1025, %v1020
        %v1027 = vadd.f32 %v1026, 1e-12
        %v1028 = vrsqrt.pop %v1027
        %v1029 = vmul.f32 %v1027, %v1028
        %vm1030 = vcmp.eq.f32.partialorder %v1027, inf
        %v1031 = vsel %vm1030, %v1027, %v1029
        %vm1032 = vcmp.eq.f32.partialorder %v1027, 0.0
        %v1033 = vand.u32 %v1027, 2147483648
        %v1034 = vsel %vm1032, %v1033, %v1031
        %v1035 = vrcp.pop %v1034
        %v1036 = vmul.f32 %v1022, %v1035
        %v1037 = vld [vmem:[%s2] sm:$0x1]
        %v1039 = vlaneseq
        %v1040 = vshrl.u32 %v1039, 7
        %v1041 = vsub.s32 0, %v1040
        %v1042 = vrot.slane %v1037, %v1041
        %v1044 = vmul.f32 %v1042, %v1036
        %v1045 = vld [vmem:[%s3] sm:$0x1]
        %v1047 = vlaneseq
        %v1048 = vshrl.u32 %v1047, 7
        %v1049 = vsub.s32 0, %v1048
        %v1050 = vrot.slane %v1045, %v1049
        %v1052 = vadd.f32 %v1044, %v1050
        %v1053 = vpack.c.bf16 %v1017, %v1052
        %v1054 = vld [vmem:[#allocation7] sm:$0xf]
        %v1055 = vld [vmem:[#allocation7 + $0x4] sm:$0xf]
        %v1056 = vld [vmem:[#allocation7 + $0x8] sm:$0xf]
        %v1057 = vld [vmem:[#allocation7 + $0xc] sm:$0xf]
        %v1058 = vld [vmem:[#allocation7 + $0x10] sm:$0xf]
        %v1059 = vld [vmem:[#allocation7 + $0x14] sm:$0xf]
        %v1060 = vld [vmem:[#allocation7 + $0x18] sm:$0xf]
        %v1061 = vld [vmem:[#allocation7 + $0x1c] sm:$0xf]
        %v1062 = vld [vmem:[#allocation7 + $0x20] sm:$0xf]
        %v1063 = vld [vmem:[#allocation7 + $0x24] sm:$0xf]
        %v1064 = vld [vmem:[#allocation7 + $0x28] sm:$0xf]
        %v1065 = vld [vmem:[#allocation7 + $0x2c] sm:$0xf]
        %v1066 = vld [vmem:[#allocation7 + $0x30] sm:$0xf]
        %v1067 = vld [vmem:[#allocation7 + $0x34] sm:$0xf]
        %v1068 = vld [vmem:[#allocation7 + $0x38] sm:$0xf]
        %v1069 = vld [vmem:[#allocation7 + $0x3c] sm:$0xf]
        %v1070 = vld [vmem:[%s5] sm:$0x1]
        %v1072 = vlaneseq
        %v1073 = vshrl.u32 %v1072, 7
        %v1074 = vsub.s32 0, %v1073
        %v1075 = vrot.slane %v1070, %v1074
        %v1093 = vunpack.c.l.b16 %v1054
        %v1094 = vunpack.c.l.b16 %v1055
        %v1095 = vunpack.c.l.b16 %v1056
        %v1096 = vunpack.c.l.b16 %v1057
        %v1097 = vunpack.c.l.b16 %v1058
        %v1098 = vunpack.c.l.b16 %v1059
        %v1099 = vunpack.c.l.b16 %v1060
        %v1100 = vunpack.c.l.b16 %v1061
        %v1101 = vunpack.c.l.b16 %v1062
        %v1102 = vunpack.c.l.b16 %v1063
        %v1103 = vunpack.c.l.b16 %v1064
        %v1104 = vunpack.c.l.b16 %v1065
        %v1105 = vunpack.c.l.b16 %v1066
        %v1106 = vunpack.c.l.b16 %v1067
        %v1107 = vunpack.c.l.b16 %v1068
        %v1108 = vunpack.c.l.b16 %v1069
        %v1109 = vpack.c.b16 %v1094, %v1093
        %v1110 = vpack.c.b16 %v1096, %v1095
        %v1111 = vpack.c.b16 %v1098, %v1097
        %v1112 = vpack.c.b16 %v1100, %v1099
        %v1113 = vpack.c.b16 %v1102, %v1101
        %v1114 = vpack.c.b16 %v1104, %v1103
        %v1115 = vpack.c.b16 %v1106, %v1105
        %v1116 = vpack.c.b16 %v1108, %v1107
        %1125 = vmatprep.subr.bf16.mxu0 0
        %1126 = vmatpush1.bf16.msra.mxu0 %v1109
        %1127 = vmatprep.subr.bf16.mxu0 0
        %1128 = vmatpush1.bf16.msra.mxu0 %v1110
        %1129 = vmatprep.subr.bf16.mxu0 0
        %1130 = vmatpush1.bf16.msra.mxu0 %v1111
        %1131 = vmatprep.subr.bf16.mxu0 0
        %1132 = vmatpush1.bf16.msra.mxu0 %v1112
        %1133 = vmatprep.subr.bf16.mxu0 0
        %1134 = vmatpush1.bf16.msra.mxu0 %v1113
        %1135 = vmatprep.subr.bf16.mxu0 0
        %1136 = vmatpush1.bf16.msra.mxu0 %v1114
        %1137 = vmatprep.subr.bf16.mxu0 0
        %1138 = vmatpush1.bf16.msra.mxu0 %v1115
        %1139 = vmatprep.subr.bf16.mxu0 0
        %1140 = vmatpush1.bf16.msra.mxu0 %v1116
        %1141 = vmatprep.subr.bf16.mxu0 0
        %1142 = vmatpush1.bf16.msra.mxu0 0
        %1143 = vmatprep.subr.bf16.mxu0 0
        %1144 = vmatpush1.bf16.msra.mxu0 0
        %1145 = vmatprep.subr.bf16.mxu0 0
        %1146 = vmatpush1.bf16.msra.mxu0 0
        %1147 = vmatprep.subr.bf16.mxu0 0
        %1148 = vmatpush1.bf16.msra.mxu0 0
        %1149 = vmatprep.subr.bf16.mxu0 0
        %1150 = vmatpush1.bf16.msra.mxu0 0
        %1151 = vmatprep.subr.bf16.mxu0 0
        %1152 = vmatpush1.bf16.msra.mxu0 0
        %1153 = vmatprep.subr.bf16.mxu0 0
        %1154 = vmatpush1.bf16.msra.mxu0 0
        %1155 = vmatprep.subr.bf16.mxu0 0
        %1156 = vmatpush1.bf16.msra.mxu0 0
        %1157 = vmatprep.mubr.bf16.mxu0 0
        %1158 = vmatmul.mubr.bf16.gmra.mrb[0].mxu0 %v1053
        %v1159 = vpop.f32.mrb[0].mxu0
        %v1160 = vadd.f32 %v1075, %v1159
        %v1161 = vpop.f32.mrb[0].mxu0
        %v1162 = vpop.f32.mrb[0].mxu0
        %v1163 = vadd.f32 %v1075, %v1162
        %v1164 = vpop.f32.mrb[0].mxu0
        %1165 = vdwg.mxu0
        %v1166 = vld [vmem:[#allocation8] sm:$0xf]
        %v1167 = vld [vmem:[#allocation8 + $0x4] sm:$0xf]
        %v1168 = vld [vmem:[#allocation8 + $0x8] sm:$0xf]
        %v1169 = vld [vmem:[#allocation8 + $0xc] sm:$0xf]
        %v1170 = vld [vmem:[#allocation8 + $0x10] sm:$0xf]
        %v1171 = vld [vmem:[#allocation8 + $0x14] sm:$0xf]
        %v1172 = vld [vmem:[#allocation8 + $0x18] sm:$0xf]
        %v1173 = vld [vmem:[#allocation8 + $0x1c] sm:$0xf]
        %v1174 = vld [vmem:[#allocation8 + $0x20] sm:$0xf]
        %v1175 = vld [vmem:[#allocation8 + $0x24] sm:$0xf]
        %v1176 = vld [vmem:[#allocation8 + $0x28] sm:$0xf]
        %v1177 = vld [vmem:[#allocation8 + $0x2c] sm:$0xf]
        %v1178 = vld [vmem:[#allocation8 + $0x30] sm:$0xf]
        %v1179 = vld [vmem:[#allocation8 + $0x34] sm:$0xf]
        %v1180 = vld [vmem:[#allocation8 + $0x38] sm:$0xf]
        %v1181 = vld [vmem:[#allocation8 + $0x3c] sm:$0xf]
        %v1182 = vld [vmem:[%s7] sm:$0x1]
        %v1184 = vlaneseq
        %v1185 = vshrl.u32 %v1184, 7
        %v1186 = vsub.s32 0, %v1185
        %v1187 = vrot.slane %v1182, %v1186
        %v1205 = vunpack.c.l.b16 %v1166
        %v1206 = vunpack.c.l.b16 %v1167
        %v1207 = vunpack.c.l.b16 %v1168
        %v1208 = vunpack.c.l.b16 %v1169
        %v1209 = vunpack.c.l.b16 %v1170
        %v1210 = vunpack.c.l.b16 %v1171
        %v1211 = vunpack.c.l.b16 %v1172
        %v1212 = vunpack.c.l.b16 %v1173
        %v1213 = vunpack.c.l.b16 %v1174
        %v1214 = vunpack.c.l.b16 %v1175
        %v1215 = vunpack.c.l.b16 %v1176
        %v1216 = vunpack.c.l.b16 %v1177
        %v1217 = vunpack.c.l.b16 %v1178
        %v1218 = vunpack.c.l.b16 %v1179
        %v1219 = vunpack.c.l.b16 %v1180
        %v1220 = vunpack.c.l.b16 %v1181
        %v1221 = vpack.c.b16 %v1206, %v1205
        %v1222 = vpack.c.b16 %v1208, %v1207
        %v1223 = vpack.c.b16 %v1210, %v1209
        %v1224 = vpack.c.b16 %v1212, %v1211
        %v1225 = vpack.c.b16 %v1214, %v1213
        %v1226 = vpack.c.b16 %v1216, %v1215
        %v1227 = vpack.c.b16 %v1218, %v1217
        %v1228 = vpack.c.b16 %v1220, %v1219
        %1237 = vmatprep.subr.bf16.mxu0 0
        %1238 = vmatpush1.bf16.msra.mxu0 %v1221
        %1239 = vmatprep.subr.bf16.mxu0 0
        %1240 = vmatpush1.bf16.msra.mxu0 %v1222
        %1241 = vmatprep.subr.bf16.mxu0 0
        %1242 = vmatpush1.bf16.msra.mxu0 %v1223
        %1243 = vmatprep.subr.bf16.mxu0 0
        %1244 = vmatpush1.bf16.msra.mxu0 %v1224
        %1245 = vmatprep.subr.bf16.mxu0 0
        %1246 = vmatpush1.bf16.msra.mxu0 %v1225
        %1247 = vmatprep.subr.bf16.mxu0 0
        %1248 = vmatpush1.bf16.msra.mxu0 %v1226
        %1249 = vmatprep.subr.bf16.mxu0 0
        %1250 = vmatpush1.bf16.msra.mxu0 %v1227
        %1251 = vmatprep.subr.bf16.mxu0 0
        %1252 = vmatpush1.bf16.msra.mxu0 %v1228
        %1253 = vmatprep.subr.bf16.mxu0 0
        %1254 = vmatpush1.bf16.msra.mxu0 0
        %1255 = vmatprep.subr.bf16.mxu0 0
        %1256 = vmatpush1.bf16.msra.mxu0 0
        %1257 = vmatprep.subr.bf16.mxu0 0
        %1258 = vmatpush1.bf16.msra.mxu0 0
        %1259 = vmatprep.subr.bf16.mxu0 0
        %1260 = vmatpush1.bf16.msra.mxu0 0
        %1261 = vmatprep.subr.bf16.mxu0 0
        %1262 = vmatpush1.bf16.msra.mxu0 0
        %1263 = vmatprep.subr.bf16.mxu0 0
        %1264 = vmatpush1.bf16.msra.mxu0 0
        %1265 = vmatprep.subr.bf16.mxu0 0
        %1266 = vmatpush1.bf16.msra.mxu0 0
        %1267 = vmatprep.subr.bf16.mxu0 0
        %1268 = vmatpush1.bf16.msra.mxu0 0
        %1269 = vmatprep.mubr.bf16.mxu0 0
        %1270 = vmatmul.mubr.bf16.gmra.mrb[0].mxu0 %v1053
        %v1271 = vpop.f32.mrb[0].mxu0
        %v1272 = vadd.f32 %v1187, %v1271
        %v1273 = vpop.f32.mrb[0].mxu0
        %v1274 = vpop.f32.mrb[0].mxu0
        %v1275 = vadd.f32 %v1187, %v1274
        %v1276 = vpop.f32.mrb[0].mxu0
        %1277 = vdwg.mxu0
        %v1278 = vld [vmem:[#allocation10] sm:$0xf]
        %v1279 = vld [vmem:[#allocation10 + $0x4] sm:$0xf]
        %v1280 = vld [vmem:[#allocation10 + $0x8] sm:$0xf]
        %v1281 = vld [vmem:[#allocation10 + $0xc] sm:$0xf]
        %v1282 = vld [vmem:[#allocation10 + $0x10] sm:$0xf]
        %v1283 = vld [vmem:[#allocation10 + $0x14] sm:$0xf]
        %v1284 = vld [vmem:[#allocation10 + $0x18] sm:$0xf]
        %v1285 = vld [vmem:[#allocation10 + $0x1c] sm:$0xf]
        %v1286 = vld [vmem:[#allocation10 + $0x20] sm:$0xf]
        %v1287 = vld [vmem:[#allocation10 + $0x24] sm:$0xf]
        %v1288 = vld [vmem:[#allocation10 + $0x28] sm:$0xf]
        %v1289 = vld [vmem:[#allocation10 + $0x2c] sm:$0xf]
        %v1290 = vld [vmem:[#allocation10 + $0x30] sm:$0xf]
        %v1291 = vld [vmem:[#allocation10 + $0x34] sm:$0xf]
        %v1292 = vld [vmem:[#allocation10 + $0x38] sm:$0xf]
        %v1293 = vld [vmem:[#allocation10 + $0x3c] sm:$0xf]
        %v1294 = vld [vmem:[%s9] sm:$0x1]
        %v1296 = vlaneseq
        %v1297 = vshrl.u32 %v1296, 7
        %v1298 = vsub.s32 0, %v1297
        %v1299 = vrot.slane %v1294, %v1298
        %v1317 = vunpack.c.l.b16 %v1278
        %v1318 = vunpack.c.l.b16 %v1279
        %v1319 = vunpack.c.l.b16 %v1280
        %v1320 = vunpack.c.l.b16 %v1281
        %v1321 = vunpack.c.l.b16 %v1282
        %v1322 = vunpack.c.l.b16 %v1283
        %v1323 = vunpack.c.l.b16 %v1284
        %v1324 = vunpack.c.l.b16 %v1285
        %v1325 = vunpack.c.l.b16 %v1286
        %v1326 = vunpack.c.l.b16 %v1287
        %v1327 = vunpack.c.l.b16 %v1288
        %v1328 = vunpack.c.l.b16 %v1289
        %v1329 = vunpack.c.l.b16 %v1290
        %v1330 = vunpack.c.l.b16 %v1291
        %v1331 = vunpack.c.l.b16 %v1292
        %v1332 = vunpack.c.l.b16 %v1293
        %v1333 = vpack.c.b16 %v1318, %v1317
        %v1334 = vpack.c.b16 %v1320, %v1319
        %v1335 = vpack.c.b16 %v1322, %v1321
        %v1336 = vpack.c.b16 %v1324, %v1323
        %v1337 = vpack.c.b16 %v1326, %v1325
        %v1338 = vpack.c.b16 %v1328, %v1327
        %v1339 = vpack.c.b16 %v1330, %v1329
        %v1340 = vpack.c.b16 %v1332, %v1331
        %1349 = vmatprep.subr.bf16.mxu0 0
        %1350 = vmatpush1.bf16.msra.mxu0 %v1333
        %1351 = vmatprep.subr.bf16.mxu0 0
        %1352 = vmatpush1.bf16.msra.mxu0 %v1334
        %1353 = vmatprep.subr.bf16.mxu0 0
        %1354 = vmatpush1.bf16.msra.mxu0 %v1335
        %1355 = vmatprep.subr.bf16.mxu0 0
        %1356 = vmatpush1.bf16.msra.mxu0 %v1336
        %1357 = vmatprep.subr.bf16.mxu0 0
        %1358 = vmatpush1.bf16.msra.mxu0 %v1337
        %1359 = vmatprep.subr.bf16.mxu0 0
        %1360 = vmatpush1.bf16.msra.mxu0 %v1338
        %1361 = vmatprep.subr.bf16.mxu0 0
        %1362 = vmatpush1.bf16.msra.mxu0 %v1339
        %1363 = vmatprep.subr.bf16.mxu0 0
        %1364 = vmatpush1.bf16.msra.mxu0 %v1340
        %1365 = vmatprep.subr.bf16.mxu0 0
        %1366 = vmatpush1.bf16.msra.mxu0 0
        %1367 = vmatprep.subr.bf16.mxu0 0
        %1368 = vmatpush1.bf16.msra.mxu0 0
        %1369 = vmatprep.subr.bf16.mxu0 0
        %1370 = vmatpush1.bf16.msra.mxu0 0
        %1371 = vmatprep.subr.bf16.mxu0 0
        %1372 = vmatpush1.bf16.msra.mxu0 0
        %1373 = vmatprep.subr.bf16.mxu0 0
        %1374 = vmatpush1.bf16.msra.mxu0 0
        %1375 = vmatprep.subr.bf16.mxu0 0
        %1376 = vmatpush1.bf16.msra.mxu0 0
        %1377 = vmatprep.subr.bf16.mxu0 0
        %1378 = vmatpush1.bf16.msra.mxu0 0
        %1379 = vmatprep.subr.bf16.mxu0 0
        %1380 = vmatpush1.bf16.msra.mxu0 0
        %1381 = vmatprep.mubr.bf16.mxu0 0
        %1382 = vmatmul.mubr.bf16.gmra.mrb[0].mxu0 %v1053
        %v1383 = vpop.f32.mrb[0].mxu0
        %v1384 = vadd.f32 %v1299, %v1383
        %v1385 = vpop.f32.mrb[0].mxu0
        %v1386 = vpop.f32.mrb[0].mxu0
        %v1387 = vadd.f32 %v1299, %v1386
        %v1388 = vpop.f32.mrb[0].mxu0
        %1389 = vdwg.mxu0
        %1392 = vrot.lane.b32.xlu0 %v1160, 96
        %v1393 = vpop.permute.xlu0 %1392
        %1394 = vrot.lane.b32.xlu0 %v1163, 96
        %v1395 = vpop.permute.xlu0 %1394
        %1398 = vrot.lane.b32.xlu0 %v1160, 64
        %v1399 = vpop.permute.xlu0 %1398
        %1400 = vrot.lane.b32.xlu0 %v1163, 64
        %v1401 = vpop.permute.xlu0 %1400
        %1404 = vrot.lane.b32.xlu0 %v1160, 32
        %v1405 = vpop.permute.xlu0 %1404
        %1406 = vrot.lane.b32.xlu0 %v1163, 32
        %v1407 = vpop.permute.xlu0 %1406
        %v1410 = vcombine.low %v1160, %v1399
        %v1411 = vcombine.high %v1160, %v1399
        %v1413 = vunpack.c.l.s4 1983009808
        %v1414 = vunpack.c.0.s8 %v1413
        %v1415 = vlaneseq
        %v1416 = vshrl.u32 %v1415, 7
        %v1417 = vsub.s32 %v1414, %v1416
        %v1418 = vrot.slane %v1410, %v1417
        %v1420 = vunpack.c.l.s4 1983009808
        %v1421 = vunpack.c.0.s8 %v1420
        %v1422 = vlaneseq
        %v1423 = vshrl.u32 %v1422, 7
        %v1424 = vsub.s32 %v1421, %v1423
        %v1425 = vrot.slane %v1411, %v1424
        %v1426 = vcombine.low %v1393, %v1405
        %v1427 = vcombine.high %v1393, %v1405
        %v1429 = vunpack.c.l.s4 1983009808
        %v1430 = vunpack.c.0.s8 %v1429
        %v1431 = vlaneseq
        %v1432 = vshrl.u32 %v1431, 7
        %v1433 = vsub.s32 %v1430, %v1432
        %v1434 = vrot.slane %v1426, %v1433
        %v1436 = vunpack.c.l.s4 1983009808
        %v1437 = vunpack.c.0.s8 %v1436
        %v1438 = vlaneseq
        %v1439 = vshrl.u32 %v1438, 7
        %v1440 = vsub.s32 %v1437, %v1439
        %v1441 = vrot.slane %v1427, %v1440
        %v1442 = vcombine.low %v1418, %v1434
        %v1443 = vcombine.high %v1418, %v1434
        %v1445 = vunpack.c.l.s4 1934713408
        %v1446 = vunpack.c.0.s8 %v1445
        %v1447 = vlaneseq
        %v1448 = vshrl.u32 %v1447, 7
        %v1449 = vsub.s32 %v1446, %v1448
        %v1450 = vrot.slane %v1442, %v1449
        %v1452 = vunpack.c.l.s4 1934713408
        %v1453 = vunpack.c.0.s8 %v1452
        %v1454 = vlaneseq
        %v1455 = vshrl.u32 %v1454, 7
        %v1456 = vsub.s32 %v1453, %v1455
        %v1457 = vrot.slane %v1443, %v1456
        %v1458 = vcombine.low %v1425, %v1441
        %v1459 = vcombine.high %v1425, %v1441
        %v1461 = vunpack.c.l.s4 1934713408
        %v1462 = vunpack.c.0.s8 %v1461
        %v1463 = vlaneseq
        %v1464 = vshrl.u32 %v1463, 7
        %v1465 = vsub.s32 %v1462, %v1464
        %v1466 = vrot.slane %v1458, %v1465
        %v1468 = vunpack.c.l.s4 1934713408
        %v1469 = vunpack.c.0.s8 %v1468
        %v1470 = vlaneseq
        %v1471 = vshrl.u32 %v1470, 7
        %v1472 = vsub.s32 %v1469, %v1471
        %v1473 = vrot.slane %v1459, %v1472
        %v1474 = vcombine.high %v1450, 0.0
        %v1475 = vcombine.high %v1457, 0.0
        %v1476 = vcombine.high %v1466, 0.0
        %v1477 = vcombine.high %v1473, 0.0
        %v1478 = vcombine.low %v1163, %v1401
        %v1479 = vcombine.high %v1163, %v1401
        %v1481 = vunpack.c.l.s4 1983009808
        %v1482 = vunpack.c.0.s8 %v1481
        %v1483 = vlaneseq
        %v1484 = vshrl.u32 %v1483, 7
        %v1485 = vsub.s32 %v1482, %v1484
        %v1486 = vrot.slane %v1478, %v1485
        %v1488 = vunpack.c.l.s4 1983009808
        %v1489 = vunpack.c.0.s8 %v1488
        %v1490 = vlaneseq
        %v1491 = vshrl.u32 %v1490, 7
        %v1492 = vsub.s32 %v1489, %v1491
        %v1493 = vrot.slane %v1479, %v1492
        %v1494 = vcombine.low %v1395, %v1407
        %v1495 = vcombine.high %v1395, %v1407
        %v1497 = vunpack.c.l.s4 1983009808
        %v1498 = vunpack.c.0.s8 %v1497
        %v1499 = vlaneseq
        %v1500 = vshrl.u32 %v1499, 7
        %v1501 = vsub.s32 %v1498, %v1500
        %v1502 = vrot.slane %v1494, %v1501
        %v1504 = vunpack.c.l.s4 1983009808
        %v1505 = vunpack.c.0.s8 %v1504
        %v1506 = vlaneseq
        %v1507 = vshrl.u32 %v1506, 7
        %v1508 = vsub.s32 %v1505, %v1507
        %v1509 = vrot.slane %v1495, %v1508
        %v1510 = vcombine.low %v1486, %v1502
        %v1511 = vcombine.high %v1486, %v1502
        %v1513 = vunpack.c.l.s4 1934713408
        %v1514 = vunpack.c.0.s8 %v1513
        %v1515 = vlaneseq
        %v1516 = vshrl.u32 %v1515, 7
        %v1517 = vsub.s32 %v1514, %v1516
        %v1518 = vrot.slane %v1510, %v1517
        %v1520 = vunpack.c.l.s4 1934713408
        %v1521 = vunpack.c.0.s8 %v1520
        %v1522 = vlaneseq
        %v1523 = vshrl.u32 %v1522, 7
        %v1524 = vsub.s32 %v1521, %v1523
        %v1525 = vrot.slane %v1511, %v1524
        %v1526 = vcombine.low %v1493, %v1509
        %v1527 = vcombine.high %v1493, %v1509
        %v1529 = vunpack.c.l.s4 1934713408
        %v1530 = vunpack.c.0.s8 %v1529
        %v1531 = vlaneseq
        %v1532 = vshrl.u32 %v1531, 7
        %v1533 = vsub.s32 %v1530, %v1532
        %v1534 = vrot.slane %v1526, %v1533
        %v1536 = vunpack.c.l.s4 1934713408
        %v1537 = vunpack.c.0.s8 %v1536
        %v1538 = vlaneseq
        %v1539 = vshrl.u32 %v1538, 7
        %v1540 = vsub.s32 %v1537, %v1539
        %v1541 = vrot.slane %v1527, %v1540
        %v1542 = vcombine.high %v1518, 0.0
        %v1543 = vcombine.high %v1525, 0.0
        %v1544 = vcombine.high %v1534, 0.0
        %v1545 = vcombine.high %v1541, 0.0
        %v1546 = vcombine.low %v1450, %v1457
        %v1548 = vunpack.c.l.s4 1983009808
        %v1549 = vunpack.c.0.s8 %v1548
        %v1550 = vlaneseq
        %v1551 = vshrl.u32 %v1550, 7
        %v1552 = vsub.s32 %v1549, %v1551
        %v1553 = vrot.slane %v1546, %v1552
        %v1554 = vcombine.low %v1474, %v1475
        %v1556 = vunpack.c.l.s4 1983009808
        %v1557 = vunpack.c.0.s8 %v1556
        %v1558 = vlaneseq
        %v1559 = vshrl.u32 %v1558, 7
        %v1560 = vsub.s32 %v1557, %v1559
        %v1561 = vrot.slane %v1554, %v1560
        %v1562 = vcombine.low %v1466, %v1473
        %v1564 = vunpack.c.l.s4 1983009808
        %v1565 = vunpack.c.0.s8 %v1564
        %v1566 = vlaneseq
        %v1567 = vshrl.u32 %v1566, 7
        %v1568 = vsub.s32 %v1565, %v1567
        %v1569 = vrot.slane %v1562, %v1568
        %v1570 = vcombine.low %v1476, %v1477
        %v1572 = vunpack.c.l.s4 1983009808
        %v1573 = vunpack.c.0.s8 %v1572
        %v1574 = vlaneseq
        %v1575 = vshrl.u32 %v1574, 7
        %v1576 = vsub.s32 %v1573, %v1575
        %v1577 = vrot.slane %v1570, %v1576
        %v1578 = vcombine.low %v1553, %v1561
        %v1579 = vcombine.high %v1553, %v1561
        %v1581 = vunpack.c.l.s4 1934713408
        %v1582 = vunpack.c.0.s8 %v1581
        %v1583 = vlaneseq
        %v1584 = vshrl.u32 %v1583, 7
        %v1585 = vsub.s32 %v1582, %v1584
        %v1586 = vrot.slane %v1578, %v1585
        %v1588 = vunpack.c.l.s4 1934713408
        %v1589 = vunpack.c.0.s8 %v1588
        %v1590 = vlaneseq
        %v1591 = vshrl.u32 %v1590, 7
        %v1592 = vsub.s32 %v1589, %v1591
        %v1593 = vrot.slane %v1579, %v1592
        %v1594 = vcombine.low %v1569, %v1577
        %v1595 = vcombine.high %v1569, %v1577
        %v1597 = vunpack.c.l.s4 1934713408
        %v1598 = vunpack.c.0.s8 %v1597
        %v1599 = vlaneseq
        %v1600 = vshrl.u32 %v1599, 7
        %v1601 = vsub.s32 %v1598, %v1600
        %v1602 = vrot.slane %v1594, %v1601
        %v1604 = vunpack.c.l.s4 1934713408
        %v1605 = vunpack.c.0.s8 %v1604
        %v1606 = vlaneseq
        %v1607 = vshrl.u32 %v1606, 7
        %v1608 = vsub.s32 %v1605, %v1607
        %v1609 = vrot.slane %v1595, %v1608
        %v1610 = vcombine.low %v1586, %v1602
        %v1611 = vcombine.high %v1586, %v1602
        %v1612 = vcombine.low %v1593, %v1609
        %v1613 = vcombine.high %v1593, %v1609
        %v1614 = vcombine.low %v1518, %v1525
        %v1616 = vunpack.c.l.s4 1983009808
        %v1617 = vunpack.c.0.s8 %v1616
        %v1618 = vlaneseq
        %v1619 = vshrl.u32 %v1618, 7
        %v1620 = vsub.s32 %v1617, %v1619
        %v1621 = vrot.slane %v1614, %v1620
        %v1622 = vcombine.low %v1542, %v1543
        %v1624 = vunpack.c.l.s4 1983009808
        %v1625 = vunpack.c.0.s8 %v1624
        %v1626 = vlaneseq
        %v1627 = vshrl.u32 %v1626, 7
        %v1628 = vsub.s32 %v1625, %v1627
        %v1629 = vrot.slane %v1622, %v1628
        %v1630 = vcombine.low %v1534, %v1541
        %v1632 = vunpack.c.l.s4 1983009808
        %v1633 = vunpack.c.0.s8 %v1632
        %v1634 = vlaneseq
        %v1635 = vshrl.u32 %v1634, 7
        %v1636 = vsub.s32 %v1633, %v1635
        %v1637 = vrot.slane %v1630, %v1636
        %v1638 = vcombine.low %v1544, %v1545
        %v1640 = vunpack.c.l.s4 1983009808
        %v1641 = vunpack.c.0.s8 %v1640
        %v1642 = vlaneseq
        %v1643 = vshrl.u32 %v1642, 7
        %v1644 = vsub.s32 %v1641, %v1643
        %v1645 = vrot.slane %v1638, %v1644
        %v1646 = vcombine.low %v1621, %v1629
        %v1647 = vcombine.high %v1621, %v1629
        %v1649 = vunpack.c.l.s4 1934713408
        %v1650 = vunpack.c.0.s8 %v1649
        %v1651 = vlaneseq
        %v1652 = vshrl.u32 %v1651, 7
        %v1653 = vsub.s32 %v1650, %v1652
        %v1654 = vrot.slane %v1646, %v1653
        %v1656 = vunpack.c.l.s4 1934713408
        %v1657 = vunpack.c.0.s8 %v1656
        %v1658 = vlaneseq
        %v1659 = vshrl.u32 %v1658, 7
        %v1660 = vsub.s32 %v1657, %v1659
        %v1661 = vrot.slane %v1647, %v1660
        %v1662 = vcombine.low %v1637, %v1645
        %v1663 = vcombine.high %v1637, %v1645
        %v1665 = vunpack.c.l.s4 1934713408
        %v1666 = vunpack.c.0.s8 %v1665
        %v1667 = vlaneseq
        %v1668 = vshrl.u32 %v1667, 7
        %v1669 = vsub.s32 %v1666, %v1668
        %v1670 = vrot.slane %v1662, %v1669
        %v1672 = vunpack.c.l.s4 1934713408
        %v1673 = vunpack.c.0.s8 %v1672
        %v1674 = vlaneseq
        %v1675 = vshrl.u32 %v1674, 7
        %v1676 = vsub.s32 %v1673, %v1675
        %v1677 = vrot.slane %v1663, %v1676
        %v1678 = vcombine.low %v1654, %v1670
        %v1679 = vcombine.high %v1654, %v1670
        %v1680 = vcombine.low %v1661, %v1677
        %v1681 = vcombine.high %v1661, %v1677
        %v1682 = vpack.c.bf16 %v1678, %v1610
        %v1683 = vpack.c.bf16 %v1679, %v1611
        %v1684 = vpack.c.bf16 %v1680, %v1612
        %v1685 = vpack.c.bf16 %v1681, %v1613
        %1688 = vrot.lane.b32.xlu0 %v1272, 96
        %v1689 = vpop.permute.xlu0 %1688
        %1690 = vrot.lane.b32.xlu0 %v1275, 96
        %v1691 = vpop.permute.xlu0 %1690
        %1694 = vrot.lane.b32.xlu0 %v1272, 64
        %v1695 = vpop.permute.xlu0 %1694
        %1696 = vrot.lane.b32.xlu0 %v1275, 64
        %v1697 = vpop.permute.xlu0 %1696
        %1700 = vrot.lane.b32.xlu0 %v1272, 32
        %v1701 = vpop.permute.xlu0 %1700
        %1702 = vrot.lane.b32.xlu0 %v1275, 32
        %v1703 = vpop.permute.xlu0 %1702
        %v1706 = vcombine.low %v1272, %v1695
        %v1707 = vcombine.high %v1272, %v1695
        %v1709 = vunpack.c.l.s4 1983009808
        %v1710 = vunpack.c.0.s8 %v1709
        %v1711 = vlaneseq
        %v1712 = vshrl.u32 %v1711, 7
        %v1713 = vsub.s32 %v1710, %v1712
        %v1714 = vrot.slane %v1706, %v1713
        %v1716 = vunpack.c.l.s4 1983009808
        %v1717 = vunpack.c.0.s8 %v1716
        %v1718 = vlaneseq
        %v1719 = vshrl.u32 %v1718, 7
        %v1720 = vsub.s32 %v1717, %v1719
        %v1721 = vrot.slane %v1707, %v1720
        %v1722 = vcombine.low %v1689, %v1701
        %v1723 = vcombine.high %v1689, %v1701
        %v1725 = vunpack.c.l.s4 1983009808
        %v1726 = vunpack.c.0.s8 %v1725
        %v1727 = vlaneseq
        %v1728 = vshrl.u32 %v1727, 7
        %v1729 = vsub.s32 %v1726, %v1728
        %v1730 = vrot.slane %v1722, %v1729
        %v1732 = vunpack.c.l.s4 1983009808
        %v1733 = vunpack.c.0.s8 %v1732
        %v1734 = vlaneseq
        %v1735 = vshrl.u32 %v1734, 7
        %v1736 = vsub.s32 %v1733, %v1735
        %v1737 = vrot.slane %v1723, %v1736
        %v1738 = vcombine.low %v1714, %v1730
        %v1739 = vcombine.high %v1714, %v1730
        %v1741 = vunpack.c.l.s4 1934713408
        %v1742 = vunpack.c.0.s8 %v1741
        %v1743 = vlaneseq
        %v1744 = vshrl.u32 %v1743, 7
        %v1745 = vsub.s32 %v1742, %v1744
        %v1746 = vrot.slane %v1738, %v1745
        %v1748 = vunpack.c.l.s4 1934713408
        %v1749 = vunpack.c.0.s8 %v1748
        %v1750 = vlaneseq
        %v1751 = vshrl.u32 %v1750, 7
        %v1752 = vsub.s32 %v1749, %v1751
        %v1753 = vrot.slane %v1739, %v1752
        %v1754 = vcombine.low %v1721, %v1737
        %v1755 = vcombine.high %v1721, %v1737
        %v1757 = vunpack.c.l.s4 1934713408
        %v1758 = vunpack.c.0.s8 %v1757
        %v1759 = vlaneseq
        %v1760 = vshrl.u32 %v1759, 7
        %v1761 = vsub.s32 %v1758, %v1760
        %v1762 = vrot.slane %v1754, %v1761
        %v1764 = vunpack.c.l.s4 1934713408
        %v1765 = vunpack.c.0.s8 %v1764
        %v1766 = vlaneseq
        %v1767 = vshrl.u32 %v1766, 7
        %v1768 = vsub.s32 %v1765, %v1767
        %v1769 = vrot.slane %v1755, %v1768
        %v1770 = vcombine.high %v1746, 0.0
        %v1771 = vcombine.high %v1753, 0.0
        %v1772 = vcombine.high %v1762, 0.0
        %v1773 = vcombine.high %v1769, 0.0
        %v1774 = vcombine.low %v1275, %v1697
        %v1775 = vcombine.high %v1275, %v1697
        %v1777 = vunpack.c.l.s4 1983009808
        %v1778 = vunpack.c.0.s8 %v1777
        %v1779 = vlaneseq
        %v1780 = vshrl.u32 %v1779, 7
        %v1781 = vsub.s32 %v1778, %v1780
        %v1782 = vrot.slane %v1774, %v1781
        %v1784 = vunpack.c.l.s4 1983009808
        %v1785 = vunpack.c.0.s8 %v1784
        %v1786 = vlaneseq
        %v1787 = vshrl.u32 %v1786, 7
        %v1788 = vsub.s32 %v1785, %v1787
        %v1789 = vrot.slane %v1775, %v1788
        %v1790 = vcombine.low %v1691, %v1703
        %v1791 = vcombine.high %v1691, %v1703
        %v1793 = vunpack.c.l.s4 1983009808
        %v1794 = vunpack.c.0.s8 %v1793
        %v1795 = vlaneseq
        %v1796 = vshrl.u32 %v1795, 7
        %v1797 = vsub.s32 %v1794, %v1796
        %v1798 = vrot.slane %v1790, %v1797
        %v1800 = vunpack.c.l.s4 1983009808
        %v1801 = vunpack.c.0.s8 %v1800
        %v1802 = vlaneseq
        %v1803 = vshrl.u32 %v1802, 7
        %v1804 = vsub.s32 %v1801, %v1803
        %v1805 = vrot.slane %v1791, %v1804
        %v1806 = vcombine.low %v1782, %v1798
        %v1807 = vcombine.high %v1782, %v1798
        %v1809 = vunpack.c.l.s4 1934713408
        %v1810 = vunpack.c.0.s8 %v1809
        %v1811 = vlaneseq
        %v1812 = vshrl.u32 %v1811, 7
        %v1813 = vsub.s32 %v1810, %v1812
        %v1814 = vrot.slane %v1806, %v1813
        %v1816 = vunpack.c.l.s4 1934713408
        %v1817 = vunpack.c.0.s8 %v1816
        %v1818 = vlaneseq
        %v1819 = vshrl.u32 %v1818, 7
        %v1820 = vsub.s32 %v1817, %v1819
        %v1821 = vrot.slane %v1807, %v1820
        %v1822 = vcombine.low %v1789, %v1805
        %v1823 = vcombine.high %v1789, %v1805
        %v1825 = vunpack.c.l.s4 1934713408
        %v1826 = vunpack.c.0.s8 %v1825
        %v1827 = vlaneseq
        %v1828 = vshrl.u32 %v1827, 7
        %v1829 = vsub.s32 %v1826, %v1828
        %v1830 = vrot.slane %v1822, %v1829
        %v1832 = vunpack.c.l.s4 1934713408
        %v1833 = vunpack.c.0.s8 %v1832
        %v1834 = vlaneseq
        %v1835 = vshrl.u32 %v1834, 7
        %v1836 = vsub.s32 %v1833, %v1835
        %v1837 = vrot.slane %v1823, %v1836
        %v1838 = vcombine.high %v1814, 0.0
        %v1839 = vcombine.high %v1821, 0.0
        %v1840 = vcombine.high %v1830, 0.0
        %v1841 = vcombine.high %v1837, 0.0
        %v1842 = vcombine.low %v1746, %v1753
        %v1844 = vunpack.c.l.s4 1983009808
        %v1845 = vunpack.c.0.s8 %v1844
        %v1846 = vlaneseq
        %v1847 = vshrl.u32 %v1846, 7
        %v1848 = vsub.s32 %v1845, %v1847
        %v1849 = vrot.slane %v1842, %v1848
        %v1850 = vcombine.low %v1770, %v1771
        %v1852 = vunpack.c.l.s4 1983009808
        %v1853 = vunpack.c.0.s8 %v1852
        %v1854 = vlaneseq
        %v1855 = vshrl.u32 %v1854, 7
        %v1856 = vsub.s32 %v1853, %v1855
        %v1857 = vrot.slane %v1850, %v1856
        %v1858 = vcombine.low %v1762, %v1769
        %v1860 = vunpack.c.l.s4 1983009808
        %v1861 = vunpack.c.0.s8 %v1860
        %v1862 = vlaneseq
        %v1863 = vshrl.u32 %v1862, 7
        %v1864 = vsub.s32 %v1861, %v1863
        %v1865 = vrot.slane %v1858, %v1864
        %v1866 = vcombine.low %v1772, %v1773
        %v1868 = vunpack.c.l.s4 1983009808
        %v1869 = vunpack.c.0.s8 %v1868
        %v1870 = vlaneseq
        %v1871 = vshrl.u32 %v1870, 7
        %v1872 = vsub.s32 %v1869, %v1871
        %v1873 = vrot.slane %v1866, %v1872
        %v1874 = vcombine.low %v1849, %v1857
        %v1875 = vcombine.high %v1849, %v1857
        %v1877 = vunpack.c.l.s4 1934713408
        %v1878 = vunpack.c.0.s8 %v1877
        %v1879 = vlaneseq
        %v1880 = vshrl.u32 %v1879, 7
        %v1881 = vsub.s32 %v1878, %v1880
        %v1882 = vrot.slane %v1874, %v1881
        %v1884 = vunpack.c.l.s4 1934713408
        %v1885 = vunpack.c.0.s8 %v1884
        %v1886 = vlaneseq
        %v1887 = vshrl.u32 %v1886, 7
        %v1888 = vsub.s32 %v1885, %v1887
        %v1889 = vrot.slane %v1875, %v1888
        %v1890 = vcombine.low %v1865, %v1873
        %v1891 = vcombine.high %v1865, %v1873
        %v1893 = vunpack.c.l.s4 1934713408
        %v1894 = vunpack.c.0.s8 %v1893
        %v1895 = vlaneseq
        %v1896 = vshrl.u32 %v1895, 7
        %v1897 = vsub.s32 %v1894, %v1896
        %v1898 = vrot.slane %v1890, %v1897
        %v1900 = vunpack.c.l.s4 1934713408
        %v1901 = vunpack.c.0.s8 %v1900
        %v1902 = vlaneseq
        %v1903 = vshrl.u32 %v1902, 7
        %v1904 = vsub.s32 %v1901, %v1903
        %v1905 = vrot.slane %v1891, %v1904
        %v1906 = vcombine.low %v1882, %v1898
        %v1907 = vcombine.high %v1882, %v1898
        %v1908 = vcombine.low %v1889, %v1905
        %v1909 = vcombine.high %v1889, %v1905
        %v1910 = vcombine.low %v1814, %v1821
        %v1912 = vunpack.c.l.s4 1983009808
        %v1913 = vunpack.c.0.s8 %v1912
        %v1914 = vlaneseq
        %v1915 = vshrl.u32 %v1914, 7
        %v1916 = vsub.s32 %v1913, %v1915
        %v1917 = vrot.slane %v1910, %v1916
        %v1918 = vcombine.low %v1838, %v1839
        %v1920 = vunpack.c.l.s4 1983009808
        %v1921 = vunpack.c.0.s8 %v1920
        %v1922 = vlaneseq
        %v1923 = vshrl.u32 %v1922, 7
        %v1924 = vsub.s32 %v1921, %v1923
        %v1925 = vrot.slane %v1918, %v1924
        %v1926 = vcombine.low %v1830, %v1837
        %v1928 = vunpack.c.l.s4 1983009808
        %v1929 = vunpack.c.0.s8 %v1928
        %v1930 = vlaneseq
        %v1931 = vshrl.u32 %v1930, 7
        %v1932 = vsub.s32 %v1929, %v1931
        %v1933 = vrot.slane %v1926, %v1932
        %v1934 = vcombine.low %v1840, %v1841
        %v1936 = vunpack.c.l.s4 1983009808
        %v1937 = vunpack.c.0.s8 %v1936
        %v1938 = vlaneseq
        %v1939 = vshrl.u32 %v1938, 7
        %v1940 = vsub.s32 %v1937, %v1939
        %v1941 = vrot.slane %v1934, %v1940
        %v1942 = vcombine.low %v1917, %v1925
        %v1943 = vcombine.high %v1917, %v1925
        %v1945 = vunpack.c.l.s4 1934713408
        %v1946 = vunpack.c.0.s8 %v1945
        %v1947 = vlaneseq
        %v1948 = vshrl.u32 %v1947, 7
        %v1949 = vsub.s32 %v1946, %v1948
        %v1950 = vrot.slane %v1942, %v1949
        %v1952 = vunpack.c.l.s4 1934713408
        %v1953 = vunpack.c.0.s8 %v1952
        %v1954 = vlaneseq
        %v1955 = vshrl.u32 %v1954, 7
        %v1956 = vsub.s32 %v1953, %v1955
        %v1957 = vrot.slane %v1943, %v1956
        %v1958 = vcombine.low %v1933, %v1941
        %v1959 = vcombine.high %v1933, %v1941
        %v1961 = vunpack.c.l.s4 1934713408
        %v1962 = vunpack.c.0.s8 %v1961
        %v1963 = vlaneseq
        %v1964 = vshrl.u32 %v1963, 7
        %v1965 = vsub.s32 %v1962, %v1964
        %v1966 = vrot.slane %v1958, %v1965
        %v1968 = vunpack.c.l.s4 1934713408
        %v1969 = vunpack.c.0.s8 %v1968
        %v1970 = vlaneseq
        %v1971 = vshrl.u32 %v1970, 7
        %v1972 = vsub.s32 %v1969, %v1971
        %v1973 = vrot.slane %v1959, %v1972
        %v1974 = vcombine.low %v1950, %v1966
        %v1975 = vcombine.high %v1950, %v1966
        %v1976 = vcombine.low %v1957, %v1973
        %v1977 = vcombine.high %v1957, %v1973
        %v1978 = vpack.c.bf16 %v1974, %v1906
        %v1979 = vpack.c.bf16 %v1975, %v1907
        %v1980 = vpack.c.bf16 %v1976, %v1908
        %v1981 = vpack.c.bf16 %v1977, %v1909
        %1984 = vrot.lane.b32.xlu0 %v1384, 96
        %v1985 = vpop.permute.xlu0 %1984
        %1986 = vrot.lane.b32.xlu0 %v1387, 96
        %v1987 = vpop.permute.xlu0 %1986
        %1990 = vrot.lane.b32.xlu0 %v1384, 64
        %v1991 = vpop.permute.xlu0 %1990
        %1992 = vrot.lane.b32.xlu0 %v1387, 64
        %v1993 = vpop.permute.xlu0 %1992
        %1996 = vrot.lane.b32.xlu0 %v1384, 32
        %v1997 = vpop.permute.xlu0 %1996
        %1998 = vrot.lane.b32.xlu0 %v1387, 32
        %v1999 = vpop.permute.xlu0 %1998
        %v2002 = vcombine.low %v1384, %v1991
        %v2003 = vcombine.high %v1384, %v1991
        %v2005 = vunpack.c.l.s4 1983009808
        %v2006 = vunpack.c.0.s8 %v2005
        %v2007 = vlaneseq
        %v2008 = vshrl.u32 %v2007, 7
        %v2009 = vsub.s32 %v2006, %v2008
        %v2010 = vrot.slane %v2002, %v2009
        %v2012 = vunpack.c.l.s4 1983009808
        %v2013 = vunpack.c.0.s8 %v2012
        %v2014 = vlaneseq
        %v2015 = vshrl.u32 %v2014, 7
        %v2016 = vsub.s32 %v2013, %v2015
        %v2017 = vrot.slane %v2003, %v2016
        %v2018 = vcombine.low %v1985, %v1997
        %v2019 = vcombine.high %v1985, %v1997
        %v2021 = vunpack.c.l.s4 1983009808
        %v2022 = vunpack.c.0.s8 %v2021
        %v2023 = vlaneseq
        %v2024 = vshrl.u32 %v2023, 7
        %v2025 = vsub.s32 %v2022, %v2024
        %v2026 = vrot.slane %v2018, %v2025
        %v2028 = vunpack.c.l.s4 1983009808
        %v2029 = vunpack.c.0.s8 %v2028
        %v2030 = vlaneseq
        %v2031 = vshrl.u32 %v2030, 7
        %v2032 = vsub.s32 %v2029, %v2031
        %v2033 = vrot.slane %v2019, %v2032
        %v2034 = vcombine.low %v2010, %v2026
        %v2035 = vcombine.high %v2010, %v2026
        %v2037 = vunpack.c.l.s4 1934713408
        %v2038 = vunpack.c.0.s8 %v2037
        %v2039 = vlaneseq
        %v2040 = vshrl.u32 %v2039, 7
        %v2041 = vsub.s32 %v2038, %v2040
        %v2042 = vrot.slane %v2034, %v2041
        %v2044 = vunpack.c.l.s4 1934713408
        %v2045 = vunpack.c.0.s8 %v2044
        %v2046 = vlaneseq
        %v2047 = vshrl.u32 %v2046, 7
        %v2048 = vsub.s32 %v2045, %v2047
        %v2049 = vrot.slane %v2035, %v2048
        %v2050 = vcombine.low %v2017, %v2033
        %v2051 = vcombine.high %v2017, %v2033
        %v2053 = vunpack.c.l.s4 1934713408
        %v2054 = vunpack.c.0.s8 %v2053
        %v2055 = vlaneseq
        %v2056 = vshrl.u32 %v2055, 7
        %v2057 = vsub.s32 %v2054, %v2056
        %v2058 = vrot.slane %v2050, %v2057
        %v2060 = vunpack.c.l.s4 1934713408
        %v2061 = vunpack.c.0.s8 %v2060
        %v2062 = vlaneseq
        %v2063 = vshrl.u32 %v2062, 7
        %v2064 = vsub.s32 %v2061, %v2063
        %v2065 = vrot.slane %v2051, %v2064
        %v2066 = vcombine.high %v2042, 0.0
        %v2067 = vcombine.high %v2049, 0.0
        %v2068 = vcombine.high %v2058, 0.0
        %v2069 = vcombine.high %v2065, 0.0
        %v2070 = vcombine.low %v1387, %v1993
        %v2071 = vcombine.high %v1387, %v1993
        %v2073 = vunpack.c.l.s4 1983009808
        %v2074 = vunpack.c.0.s8 %v2073
        %v2075 = vlaneseq
        %v2076 = vshrl.u32 %v2075, 7
        %v2077 = vsub.s32 %v2074, %v2076
        %v2078 = vrot.slane %v2070, %v2077
        %v2080 = vunpack.c.l.s4 1983009808
        %v2081 = vunpack.c.0.s8 %v2080
        %v2082 = vlaneseq
        %v2083 = vshrl.u32 %v2082, 7
        %v2084 = vsub.s32 %v2081, %v2083
        %v2085 = vrot.slane %v2071, %v2084
        %v2086 = vcombine.low %v1987, %v1999
        %v2087 = vcombine.high %v1987, %v1999
        %v2089 = vunpack.c.l.s4 1983009808
        %v2090 = vunpack.c.0.s8 %v2089
        %v2091 = vlaneseq
        %v2092 = vshrl.u32 %v2091, 7
        %v2093 = vsub.s32 %v2090, %v2092
        %v2094 = vrot.slane %v2086, %v2093
        %v2096 = vunpack.c.l.s4 1983009808
        %v2097 = vunpack.c.0.s8 %v2096
        %v2098 = vlaneseq
        %v2099 = vshrl.u32 %v2098, 7
        %v2100 = vsub.s32 %v2097, %v2099
        %v2101 = vrot.slane %v2087, %v2100
        %v2102 = vcombine.low %v2078, %v2094
        %v2103 = vcombine.high %v2078, %v2094
        %v2105 = vunpack.c.l.s4 1934713408
        %v2106 = vunpack.c.0.s8 %v2105
        %v2107 = vlaneseq
        %v2108 = vshrl.u32 %v2107, 7
        %v2109 = vsub.s32 %v2106, %v2108
        %v2110 = vrot.slane %v2102, %v2109
        %v2112 = vunpack.c.l.s4 1934713408
        %v2113 = vunpack.c.0.s8 %v2112
        %v2114 = vlaneseq
        %v2115 = vshrl.u32 %v2114, 7
        %v2116 = vsub.s32 %v2113, %v2115
        %v2117 = vrot.slane %v2103, %v2116
        %v2118 = vcombine.low %v2085, %v2101
        %v2119 = vcombine.high %v2085, %v2101
        %v2121 = vunpack.c.l.s4 1934713408
        %v2122 = vunpack.c.0.s8 %v2121
        %v2123 = vlaneseq
        %v2124 = vshrl.u32 %v2123, 7
        %v2125 = vsub.s32 %v2122, %v2124
        %v2126 = vrot.slane %v2118, %v2125
        %v2128 = vunpack.c.l.s4 1934713408
        %v2129 = vunpack.c.0.s8 %v2128
        %v2130 = vlaneseq
        %v2131 = vshrl.u32 %v2130, 7
        %v2132 = vsub.s32 %v2129, %v2131
        %v2133 = vrot.slane %v2119, %v2132
        %v2134 = vcombine.high %v2110, 0.0
        %v2135 = vcombine.high %v2117, 0.0
        %v2136 = vcombine.high %v2126, 0.0
        %v2137 = vcombine.high %v2133, 0.0
        %v2138 = vcombine.low %v2042, %v2049
        %v2140 = vunpack.c.l.s4 1983009808
        %v2141 = vunpack.c.0.s8 %v2140
        %v2142 = vlaneseq
        %v2143 = vshrl.u32 %v2142, 7
        %v2144 = vsub.s32 %v2141, %v2143
        %v2145 = vrot.slane %v2138, %v2144
        %v2146 = vcombine.low %v2066, %v2067
        %v2148 = vunpack.c.l.s4 1983009808
        %v2149 = vunpack.c.0.s8 %v2148
        %v2150 = vlaneseq
        %v2151 = vshrl.u32 %v2150, 7
        %v2152 = vsub.s32 %v2149, %v2151
        %v2153 = vrot.slane %v2146, %v2152
        %v2154 = vcombine.low %v2058, %v2065
        %v2156 = vunpack.c.l.s4 1983009808
        %v2157 = vunpack.c.0.s8 %v2156
        %v2158 = vlaneseq
        %v2159 = vshrl.u32 %v2158, 7
        %v2160 = vsub.s32 %v2157, %v2159
        %v2161 = vrot.slane %v2154, %v2160
        %v2162 = vcombine.low %v2068, %v2069
        %v2164 = vunpack.c.l.s4 1983009808
        %v2165 = vunpack.c.0.s8 %v2164
        %v2166 = vlaneseq
        %v2167 = vshrl.u32 %v2166, 7
        %v2168 = vsub.s32 %v2165, %v2167
        %v2169 = vrot.slane %v2162, %v2168
        %v2170 = vcombine.low %v2145, %v2153
        %v2171 = vcombine.high %v2145, %v2153
        %v2173 = vunpack.c.l.s4 1934713408
        %v2174 = vunpack.c.0.s8 %v2173
        %v2175 = vlaneseq
        %v2176 = vshrl.u32 %v2175, 7
        %v2177 = vsub.s32 %v2174, %v2176
        %v2178 = vrot.slane %v2170, %v2177
        %v2180 = vunpack.c.l.s4 1934713408
        %v2181 = vunpack.c.0.s8 %v2180
        %v2182 = vlaneseq
        %v2183 = vshrl.u32 %v2182, 7
        %v2184 = vsub.s32 %v2181, %v2183
        %v2185 = vrot.slane %v2171, %v2184
        %v2186 = vcombine.low %v2161, %v2169
        %v2187 = vcombine.high %v2161, %v2169
        %v2189 = vunpack.c.l.s4 1934713408
        %v2190 = vunpack.c.0.s8 %v2189
        %v2191 = vlaneseq
        %v2192 = vshrl.u32 %v2191, 7
        %v2193 = vsub.s32 %v2190, %v2192
        %v2194 = vrot.slane %v2186, %v2193
        %v2196 = vunpack.c.l.s4 1934713408
        %v2197 = vunpack.c.0.s8 %v2196
        %v2198 = vlaneseq
        %v2199 = vshrl.u32 %v2198, 7
        %v2200 = vsub.s32 %v2197, %v2199
        %v2201 = vrot.slane %v2187, %v2200
        %v2202 = vcombine.low %v2178, %v2194
        %v2203 = vcombine.high %v2178, %v2194
        %v2204 = vcombine.low %v2185, %v2201
        %v2205 = vcombine.high %v2185, %v2201
        %v2206 = vcombine.low %v2110, %v2117
        %v2208 = vunpack.c.l.s4 1983009808
        %v2209 = vunpack.c.0.s8 %v2208
        %v2210 = vlaneseq
        %v2211 = vshrl.u32 %v2210, 7
        %v2212 = vsub.s32 %v2209, %v2211
        %v2213 = vrot.slane %v2206, %v2212
        %v2214 = vcombine.low %v2134, %v2135
        %v2216 = vunpack.c.l.s4 1983009808
        %v2217 = vunpack.c.0.s8 %v2216
        %v2218 = vlaneseq
        %v2219 = vshrl.u32 %v2218, 7
        %v2220 = vsub.s32 %v2217, %v2219
        %v2221 = vrot.slane %v2214, %v2220
        %v2222 = vcombine.low %v2126, %v2133
        %v2224 = vunpack.c.l.s4 1983009808
        %v2225 = vunpack.c.0.s8 %v2224
        %v2226 = vlaneseq
        %v2227 = vshrl.u32 %v2226, 7
        %v2228 = vsub.s32 %v2225, %v2227
        %v2229 = vrot.slane %v2222, %v2228
        %v2230 = vcombine.low %v2136, %v2137
        %v2232 = vunpack.c.l.s4 1983009808
        %v2233 = vunpack.c.0.s8 %v2232
        %v2234 = vlaneseq
        %v2235 = vshrl.u32 %v2234, 7
        %v2236 = vsub.s32 %v2233, %v2235
        %v2237 = vrot.slane %v2230, %v2236
        %v2238 = vcombine.low %v2213, %v2221
        %v2239 = vcombine.high %v2213, %v2221
        %v2241 = vunpack.c.l.s4 1934713408
        %v2242 = vunpack.c.0.s8 %v2241
        %v2243 = vlaneseq
        %v2244 = vshrl.u32 %v2243, 7
        %v2245 = vsub.s32 %v2242, %v2244
        %v2246 = vrot.slane %v2238, %v2245
        %v2248 = vunpack.c.l.s4 1934713408
        %v2249 = vunpack.c.0.s8 %v2248
        %v2250 = vlaneseq
        %v2251 = vshrl.u32 %v2250, 7
        %v2252 = vsub.s32 %v2249, %v2251
        %v2253 = vrot.slane %v2239, %v2252
        %v2254 = vcombine.low %v2229, %v2237
        %v2255 = vcombine.high %v2229, %v2237
        %v2257 = vunpack.c.l.s4 1934713408
        %v2258 = vunpack.c.0.s8 %v2257
        %v2259 = vlaneseq
        %v2260 = vshrl.u32 %v2259, 7
        %v2261 = vsub.s32 %v2258, %v2260
        %v2262 = vrot.slane %v2254, %v2261
        %v2264 = vunpack.c.l.s4 1934713408
        %v2265 = vunpack.c.0.s8 %v2264
        %v2266 = vlaneseq
        %v2267 = vshrl.u32 %v2266, 7
        %v2268 = vsub.s32 %v2265, %v2267
        %v2269 = vrot.slane %v2255, %v2268
        %v2270 = vcombine.low %v2246, %v2262
        %v2271 = vcombine.high %v2246, %v2262
        %v2272 = vcombine.low %v2253, %v2269
        %v2273 = vcombine.high %v2253, %v2269
        %v2274 = vpack.c.bf16 %v2270, %v2202
        %v2275 = vpack.c.bf16 %v2271, %v2203
        %v2276 = vpack.c.bf16 %v2272, %v2204
        %v2277 = vpack.c.bf16 %v2273, %v2205
        %v2279 = vrot.slane %v1978, 4
        %vm2280 = vcmask 261120
        %v2282 = vsel %vm2280, %v1682, 0
        %v2285 = vsel %vm2280, %v2279, 0
        %2287 = vmatprep.subr.bf16.mxu0 0
        %2288 = vmatpush1.bf16.xpose.msra.mxu0 %v2285
        %2289 = vmatprep.subr.bf16.mxu0 0
        %2290 = vmatpush1.bf16.xpose.msra.mxu0 0
        %2291 = vmatprep.subr.bf16.mxu0 0
        %2292 = vmatpush1.bf16.xpose.msra.mxu0 0
        %2293 = vmatprep.subr.bf16.mxu0 0
        %2294 = vmatpush1.bf16.xpose.msra.mxu0 0
        %2295 = vmatprep.subr.bf16.mxu0 0
        %2296 = vmatpush1.bf16.xpose.msra.mxu0 0
        %2297 = vmatprep.subr.bf16.mxu0 0
        %2298 = vmatpush1.bf16.xpose.msra.mxu0 0
        %2299 = vmatprep.subr.bf16.mxu0 0
        %2300 = vmatpush1.bf16.xpose.msra.mxu0 0
        %2301 = vmatprep.subr.bf16.mxu0 0
        %2302 = vmatpush1.bf16.xpose.msra.mxu0 0
        %2303 = vmatprep.subr.bf16.mxu0 0
        %2304 = vmatpush1.bf16.xpose.msra.mxu0 0
        %2305 = vmatprep.subr.bf16.mxu0 0
        %2306 = vmatpush1.bf16.xpose.msra.mxu0 0
        %2307 = vmatprep.subr.bf16.mxu0 0
        %2308 = vmatpush1.bf16.xpose.msra.mxu0 0
        %2309 = vmatprep.subr.bf16.mxu0 0
        %2310 = vmatpush1.bf16.xpose.msra.mxu0 0
        %2311 = vmatprep.subr.bf16.mxu0 0
        %2312 = vmatpush1.bf16.xpose.msra.mxu0 0
        %2313 = vmatprep.subr.bf16.mxu0 0
        %2314 = vmatpush1.bf16.xpose.msra.mxu0 0
        %2315 = vmatprep.subr.bf16.mxu0 0
        %2316 = vmatpush1.bf16.xpose.msra.mxu0 0
        %2317 = vmatprep.subr.bf16.mxu0 0
        %2318 = vmatpush1.bf16.xpose.msra.mxu0 0
        %2319 = vmatprep.mubr.bf16.mxu0 0
        %2320 = vmatmul.mubr.bf16.gmra.mrb[0].mxu0 %v2282
        %v2321 = vpop.f32.mrb[0].mxu0
        %v2322 = vadd.f32 0.0, %v2321
        %v2323 = vpop.f32.mrb[0].mxu0
        %v2324 = vpop.f32.mrb[0].mxu0
        %v2325 = vpop.f32.mrb[0].mxu0
        %2326 = vdwg.mxu0
        %v2328 = vrot.slane %v1979, 4
        %v2330 = vsel %vm2280, %v1683, 0
        %v2333 = vsel %vm2280, %v2328, 0
        %2335 = vmatprep.subr.bf16.mxu0 0
        %2336 = vmatpush1.bf16.xpose.msra.mxu0 %v2333
        %2337 = vmatprep.subr.bf16.mxu0 0
        %2338 = vmatpush1.bf16.xpose.msra.mxu0 0
        %2339 = vmatprep.subr.bf16.mxu0 0
        %2340 = vmatpush1.bf16.xpose.msra.mxu0 0
        %2341 = vmatprep.subr.bf16.mxu0 0
        %2342 = vmatpush1.bf16.xpose.msra.mxu0 0
        %2343 = vmatprep.subr.bf16.mxu0 0
        %2344 = vmatpush1.bf16.xpose.msra.mxu0 0
        %2345 = vmatprep.subr.bf16.mxu0 0
        %2346 = vmatpush1.bf16.xpose.msra.mxu0 0
        %2347 = vmatprep.subr.bf16.mxu0 0
        %2348 = vmatpush1.bf16.xpose.msra.mxu0 0
        %2349 = vmatprep.subr.bf16.mxu0 0
        %2350 = vmatpush1.bf16.xpose.msra.mxu0 0
        %2351 = vmatprep.subr.bf16.mxu0 0
        %2352 = vmatpush1.bf16.xpose.msra.mxu0 0
        %2353 = vmatprep.subr.bf16.mxu0 0
        %2354 = vmatpush1.bf16.xpose.msra.mxu0 0
        %2355 = vmatprep.subr.bf16.mxu0 0
        %2356 = vmatpush1.bf16.xpose.msra.mxu0 0
        %2357 = vmatprep.subr.bf16.mxu0 0
        %2358 = vmatpush1.bf16.xpose.msra.mxu0 0
        %2359 = vmatprep.subr.bf16.mxu0 0
        %2360 = vmatpush1.bf16.xpose.msra.mxu0 0
        %2361 = vmatprep.subr.bf16.mxu0 0
        %2362 = vmatpush1.bf16.xpose.msra.mxu0 0
        %2363 = vmatprep.subr.bf16.mxu0 0
        %2364 = vmatpush1.bf16.xpose.msra.mxu0 0
        %2365 = vmatprep.subr.bf16.mxu0 0
        %2366 = vmatpush1.bf16.xpose.msra.mxu0 0
        %2367 = vmatprep.mubr.bf16.mxu0 0
        %2368 = vmatmul.mubr.bf16.gmra.mrb[0].mxu0 %v2330
        %v2369 = vpop.f32.mrb[0].mxu0
        %v2370 = vadd.f32 0.0, %v2369
        %v2371 = vpop.f32.mrb[0].mxu0
        %v2372 = vpop.f32.mrb[0].mxu0
        %v2373 = vpop.f32.mrb[0].mxu0
        %2374 = vdwg.mxu0
        %v2376 = vrot.slane %v1980, 4
        %v2378 = vsel %vm2280, %v1684, 0
        %v2381 = vsel %vm2280, %v2376, 0
        %2383 = vmatprep.subr.bf16.mxu0 0
        %2384 = vmatpush1.bf16.xpose.msra.mxu0 %v2381
        %2385 = vmatprep.subr.bf16.mxu0 0
        %2386 = vmatpush1.bf16.xpose.msra.mxu0 0
        %2387 = vmatprep.subr.bf16.mxu0 0
        %2388 = vmatpush1.bf16.xpose.msra.mxu0 0
        %2389 = vmatprep.subr.bf16.mxu0 0
        %2390 = vmatpush1.bf16.xpose.msra.mxu0 0
        %2391 = vmatprep.subr.bf16.mxu0 0
        %2392 = vmatpush1.bf16.xpose.msra.mxu0 0
        %2393 = vmatprep.subr.bf16.mxu0 0
        %2394 = vmatpush1.bf16.xpose.msra.mxu0 0
        %2395 = vmatprep.subr.bf16.mxu0 0
        %2396 = vmatpush1.bf16.xpose.msra.mxu0 0
        %2397 = vmatprep.subr.bf16.mxu0 0
        %2398 = vmatpush1.bf16.xpose.msra.mxu0 0
        %2399 = vmatprep.subr.bf16.mxu0 0
        %2400 = vmatpush1.bf16.xpose.msra.mxu0 0
        %2401 = vmatprep.subr.bf16.mxu0 0
        %2402 = vmatpush1.bf16.xpose.msra.mxu0 0
        %2403 = vmatprep.subr.bf16.mxu0 0
        %2404 = vmatpush1.bf16.xpose.msra.mxu0 0
        %2405 = vmatprep.subr.bf16.mxu0 0
        %2406 = vmatpush1.bf16.xpose.msra.mxu0 0
        %2407 = vmatprep.subr.bf16.mxu0 0
        %2408 = vmatpush1.bf16.xpose.msra.mxu0 0
        %2409 = vmatprep.subr.bf16.mxu0 0
        %2410 = vmatpush1.bf16.xpose.msra.mxu0 0
        %2411 = vmatprep.subr.bf16.mxu0 0
        %2412 = vmatpush1.bf16.xpose.msra.mxu0 0
        %2413 = vmatprep.subr.bf16.mxu0 0
        %2414 = vmatpush1.bf16.xpose.msra.mxu0 0
        %2415 = vmatprep.mubr.bf16.mxu0 0
        %2416 = vmatmul.mubr.bf16.gmra.mrb[0].mxu0 %v2378
        %v2417 = vpop.f32.mrb[0].mxu0
        %v2418 = vadd.f32 0.0, %v2417
        %v2419 = vpop.f32.mrb[0].mxu0
        %v2420 = vpop.f32.mrb[0].mxu0
        %v2421 = vpop.f32.mrb[0].mxu0
        %2422 = vdwg.mxu0
        %v2424 = vrot.slane %v1981, 4
        %v2426 = vsel %vm2280, %v1685, 0
        %v2429 = vsel %vm2280, %v2424, 0
        %2431 = vmatprep.subr.bf16.mxu0 0
        %2432 = vmatpush1.bf16.xpose.msra.mxu0 %v2429
        %2433 = vmatprep.subr.bf16.mxu0 0
        %2434 = vmatpush1.bf16.xpose.msra.mxu0 0
        %2435 = vmatprep.subr.bf16.mxu0 0
        %2436 = vmatpush1.bf16.xpose.msra.mxu0 0
        %2437 = vmatprep.subr.bf16.mxu0 0
        %2438 = vmatpush1.bf16.xpose.msra.mxu0 0
        %2439 = vmatprep.subr.bf16.mxu0 0
        %2440 = vmatpush1.bf16.xpose.msra.mxu0 0
        %2441 = vmatprep.subr.bf16.mxu0 0
        %2442 = vmatpush1.bf16.xpose.msra.mxu0 0
        %2443 = vmatprep.subr.bf16.mxu0 0
        %2444 = vmatpush1.bf16.xpose.msra.mxu0 0
        %2445 = vmatprep.subr.bf16.mxu0 0
        %2446 = vmatpush1.bf16.xpose.msra.mxu0 0
        %2447 = vmatprep.subr.bf16.mxu0 0
        %2448 = vmatpush1.bf16.xpose.msra.mxu0 0
        %2449 = vmatprep.subr.bf16.mxu0 0
        %2450 = vmatpush1.bf16.xpose.msra.mxu0 0
        %2451 = vmatprep.subr.bf16.mxu0 0
        %2452 = vmatpush1.bf16.xpose.msra.mxu0 0
        %2453 = vmatprep.subr.bf16.mxu0 0
        %2454 = vmatpush1.bf16.xpose.msra.mxu0 0
        %2455 = vmatprep.subr.bf16.mxu0 0
        %2456 = vmatpush1.bf16.xpose.msra.mxu0 0
        %2457 = vmatprep.subr.bf16.mxu0 0
        %2458 = vmatpush1.bf16.xpose.msra.mxu0 0
        %2459 = vmatprep.subr.bf16.mxu0 0
        %2460 = vmatpush1.bf16.xpose.msra.mxu0 0
        %2461 = vmatprep.subr.bf16.mxu0 0
        %2462 = vmatpush1.bf16.xpose.msra.mxu0 0
        %2463 = vmatprep.mubr.bf16.mxu0 0
        %2464 = vmatmul.mubr.bf16.gmra.mrb[0].mxu0 %v2426
        %v2465 = vpop.f32.mrb[0].mxu0
        %v2466 = vadd.f32 0.0, %v2465
        %v2467 = vpop.f32.mrb[0].mxu0
        %v2468 = vpop.f32.mrb[0].mxu0
        %v2469 = vpop.f32.mrb[0].mxu0
        %2470 = vdwg.mxu0
        %v2471 = vmul.f32 %v2322, 0.17677669
        %v2472 = vmul.f32 %v2370, 0.17677669
        %v2473 = vmul.f32 %v2418, 0.17677669
        %v2474 = vmul.f32 %v2466, 0.17677669
        %vm2475 = vcmask 64512
        %v2476 = vsel %vm2475, %v2471, -inf
        %2477 = vmax.xlane.f32.xlu0 %v2476
        %v2478 = vpop.xlane.xlu0 %2477
        %v2479 = vsel %vm2475, %v2472, -inf
        %2480 = vmax.xlane.f32.xlu0 %v2479
        %v2481 = vpop.xlane.xlu0 %2480
        %v2482 = vsel %vm2475, %v2473, -inf
        %2483 = vmax.xlane.f32.xlu0 %v2482
        %v2484 = vpop.xlane.xlu0 %2483
        %v2485 = vsel %vm2475, %v2474, -inf
        %2486 = vmax.xlane.f32.xlu0 %v2485
        %v2487 = vpop.xlane.xlu0 %2486
        %v2488 = vsub.f32 %v2471, %v2478
        %v2489 = vsub.f32 %v2472, %v2481
        %v2490 = vsub.f32 %v2473, %v2484
        %v2491 = vsub.f32 %v2474, %v2487
        %v2492 = vmul.f32 %v2488, 1.442695
        %v2493 = vpow.pop %v2492
        %v2494 = vmul.f32 %v2489, 1.442695
        %v2495 = vpow.pop %v2494
        %v2496 = vmul.f32 %v2490, 1.442695
        %v2497 = vpow.pop %v2496
        %v2498 = vmul.f32 %v2491, 1.442695
        %v2499 = vpow.pop %v2498
        %v2500 = vsel %vm2475, %v2493, 0.0
        %2501 = vadd.xlane.f32.xlu0 %v2500
        %v2502 = vpop.xlane.xlu0 %2501
        %v2503 = vsel %vm2475, %v2495, 0.0
        %2504 = vadd.xlane.f32.xlu0 %v2503
        %v2505 = vpop.xlane.xlu0 %2504
        %v2506 = vsel %vm2475, %v2497, 0.0
        %2507 = vadd.xlane.f32.xlu0 %v2506
        %v2508 = vpop.xlane.xlu0 %2507
        %v2509 = vsel %vm2475, %v2499, 0.0
        %2510 = vadd.xlane.f32.xlu0 %v2509
        %v2511 = vpop.xlane.xlu0 %2510
        %v2512 = vrcp.pop %v2502
        %v2513 = vrcp.pop %v2505
        %v2514 = vrcp.pop %v2508
        %v2515 = vrcp.pop %v2511
        %v2516 = vmul.f32 %v2493, %v2512
        %v2517 = vmul.f32 %v2495, %v2513
        %v2518 = vmul.f32 %v2497, %v2514
        %v2519 = vmul.f32 %v2499, %v2515
        %2520 = vst.msk [vmem:[%s1007] sm:$0xff] %vm2475, %v2516
        %2521 = vst.msk [vmem:[%s1007 + $0x8] sm:$0xff] %vm2475, %v2517
        %2522 = vst.msk [vmem:[%s1007 + $0x10] sm:$0xff] %vm2475, %v2518
        %2523 = vst.msk [vmem:[%s1007 + $0x18] sm:$0xff] %vm2475, %v2519
        %v2524 = vpack.c.bf16 %v2516, %v2516
        %v2525 = vpack.c.bf16 %v2517, %v2517
        %v2526 = vpack.c.bf16 %v2518, %v2518
        %v2527 = vpack.c.bf16 %v2519, %v2519
        %v2529 = vrot.slane %v2274, 4
        %v2531 = vsel %vm2475, %v2524, 0
        %vm2533 = vcmask 1043456
        %v2535 = vsel %vm2533, %v2529, 0
        %2537 = vmatprep.subr.bf16.mxu0 0
        %2538 = vmatpush1.bf16.msra.mxu0 %v2535
        %2539 = vmatprep.subr.bf16.mxu0 0
        %2540 = vmatpush1.bf16.msra.mxu0 0
        %2541 = vmatprep.subr.bf16.mxu0 0
        %2542 = vmatpush1.bf16.msra.mxu0 0
        %2543 = vmatprep.subr.bf16.mxu0 0
        %2544 = vmatpush1.bf16.msra.mxu0 0
        %2545 = vmatprep.subr.bf16.mxu0 0
        %2546 = vmatpush1.bf16.msra.mxu0 0
        %2547 = vmatprep.subr.bf16.mxu0 0
        %2548 = vmatpush1.bf16.msra.mxu0 0
        %2549 = vmatprep.subr.bf16.mxu0 0
        %2550 = vmatpush1.bf16.msra.mxu0 0
        %2551 = vmatprep.subr.bf16.mxu0 0
        %2552 = vmatpush1.bf16.msra.mxu0 0
        %2553 = vmatprep.subr.bf16.mxu0 0
        %2554 = vmatpush1.bf16.msra.mxu0 0
        %2555 = vmatprep.subr.bf16.mxu0 0
        %2556 = vmatpush1.bf16.msra.mxu0 0
        %2557 = vmatprep.subr.bf16.mxu0 0
        %2558 = vmatpush1.bf16.msra.mxu0 0
        %2559 = vmatprep.subr.bf16.mxu0 0
        %2560 = vmatpush1.bf16.msra.mxu0 0
        %2561 = vmatprep.subr.bf16.mxu0 0
        %2562 = vmatpush1.bf16.msra.mxu0 0
        %2563 = vmatprep.subr.bf16.mxu0 0
        %2564 = vmatpush1.bf16.msra.mxu0 0
        %2565 = vmatprep.subr.bf16.mxu0 0
        %2566 = vmatpush1.bf16.msra.mxu0 0
        %2567 = vmatprep.subr.bf16.mxu0 0
        %2568 = vmatpush1.bf16.msra.mxu0 0
        %2569 = vmatprep.mubr.bf16.mxu0 0
        %2570 = vmatmul.mubr.bf16.gmra.mrb[0].mxu0 %v2531
        %v2571 = vpop.f32.mrb[0].mxu0
        %v2572 = vadd.f32 0.0, %v2571
        %v2573 = vpop.f32.mrb[0].mxu0
        %v2574 = vpop.f32.mrb[0].mxu0
        %v2575 = vpop.f32.mrb[0].mxu0
        %2576 = vdwg.mxu0
        %v2578 = vrot.slane %v2275, 4
        %v2580 = vsel %vm2475, %v2525, 0
        %v2583 = vsel %vm2533, %v2578, 0
        %2585 = vmatprep.subr.bf16.mxu0 0
        %2586 = vmatpush1.bf16.msra.mxu0 %v2583
        %2587 = vmatprep.subr.bf16.mxu0 0
        %2588 = vmatpush1.bf16.msra.mxu0 0
        %2589 = vmatprep.subr.bf16.mxu0 0
        %2590 = vmatpush1.bf16.msra.mxu0 0
        %2591 = vmatprep.subr.bf16.mxu0 0
        %2592 = vmatpush1.bf16.msra.mxu0 0
        %2593 = vmatprep.subr.bf16.mxu0 0
        %2594 = vmatpush1.bf16.msra.mxu0 0
        %2595 = vmatprep.subr.bf16.mxu0 0
        %2596 = vmatpush1.bf16.msra.mxu0 0
        %2597 = vmatprep.subr.bf16.mxu0 0
        %2598 = vmatpush1.bf16.msra.mxu0 0
        %2599 = vmatprep.subr.bf16.mxu0 0
        %2600 = vmatpush1.bf16.msra.mxu0 0
        %2601 = vmatprep.subr.bf16.mxu0 0
        %2602 = vmatpush1.bf16.msra.mxu0 0
        %2603 = vmatprep.subr.bf16.mxu0 0
        %2604 = vmatpush1.bf16.msra.mxu0 0
        %2605 = vmatprep.subr.bf16.mxu0 0
        %2606 = vmatpush1.bf16.msra.mxu0 0
        %2607 = vmatprep.subr.bf16.mxu0 0
        %2608 = vmatpush1.bf16.msra.mxu0 0
        %2609 = vmatprep.subr.bf16.mxu0 0
        %2610 = vmatpush1.bf16.msra.mxu0 0
        %2611 = vmatprep.subr.bf16.mxu0 0
        %2612 = vmatpush1.bf16.msra.mxu0 0
        %2613 = vmatprep.subr.bf16.mxu0 0
        %2614 = vmatpush1.bf16.msra.mxu0 0
        %2615 = vmatprep.subr.bf16.mxu0 0
        %2616 = vmatpush1.bf16.msra.mxu0 0
        %2617 = vmatprep.mubr.bf16.mxu0 0
        %2618 = vmatmul.mubr.bf16.gmra.mrb[0].mxu0 %v2580
        %v2619 = vpop.f32.mrb[0].mxu0
        %v2620 = vadd.f32 0.0, %v2619
        %v2621 = vpop.f32.mrb[0].mxu0
        %v2622 = vpop.f32.mrb[0].mxu0
        %v2623 = vpop.f32.mrb[0].mxu0
        %2624 = vdwg.mxu0
        %v2626 = vrot.slane %v2276, 4
        %v2628 = vsel %vm2475, %v2526, 0
        %v2631 = vsel %vm2533, %v2626, 0
        %2633 = vmatprep.subr.bf16.mxu0 0
        %2634 = vmatpush1.bf16.msra.mxu0 %v2631
        %2635 = vmatprep.subr.bf16.mxu0 0
        %2636 = vmatpush1.bf16.msra.mxu0 0
        %2637 = vmatprep.subr.bf16.mxu0 0
        %2638 = vmatpush1.bf16.msra.mxu0 0
        %2639 = vmatprep.subr.bf16.mxu0 0
        %2640 = vmatpush1.bf16.msra.mxu0 0
        %2641 = vmatprep.subr.bf16.mxu0 0
        %2642 = vmatpush1.bf16.msra.mxu0 0
        %2643 = vmatprep.subr.bf16.mxu0 0
        %2644 = vmatpush1.bf16.msra.mxu0 0
        %2645 = vmatprep.subr.bf16.mxu0 0
        %2646 = vmatpush1.bf16.msra.mxu0 0
        %2647 = vmatprep.subr.bf16.mxu0 0
        %2648 = vmatpush1.bf16.msra.mxu0 0
        %2649 = vmatprep.subr.bf16.mxu0 0
        %2650 = vmatpush1.bf16.msra.mxu0 0
        %2651 = vmatprep.subr.bf16.mxu0 0
        %2652 = vmatpush1.bf16.msra.mxu0 0
        %2653 = vmatprep.subr.bf16.mxu0 0
        %2654 = vmatpush1.bf16.msra.mxu0 0
        %2655 = vmatprep.subr.bf16.mxu0 0
        %2656 = vmatpush1.bf16.msra.mxu0 0
        %2657 = vmatprep.subr.bf16.mxu0 0
        %2658 = vmatpush1.bf16.msra.mxu0 0
        %2659 = vmatprep.subr.bf16.mxu0 0
        %2660 = vmatpush1.bf16.msra.mxu0 0
        %2661 = vmatprep.subr.bf16.mxu0 0
        %2662 = vmatpush1.bf16.msra.mxu0 0
        %2663 = vmatprep.subr.bf16.mxu0 0
        %2664 = vmatpush1.bf16.msra.mxu0 0
        %2665 = vmatprep.mubr.bf16.mxu0 0
        %2666 = vmatmul.mubr.bf16.gmra.mrb[0].mxu0 %v2628
        %v2667 = vpop.f32.mrb[0].mxu0
        %v2668 = vadd.f32 0.0, %v2667
        %v2669 = vpop.f32.mrb[0].mxu0
        %v2670 = vpop.f32.mrb[0].mxu0
        %v2671 = vpop.f32.mrb[0].mxu0
        %2672 = vdwg.mxu0
        %v2674 = vrot.slane %v2277, 4
        %v2676 = vsel %vm2475, %v2527, 0
        %v2679 = vsel %vm2533, %v2674, 0
        %2681 = vmatprep.subr.bf16.mxu0 0
        %2682 = vmatpush1.bf16.msra.mxu0 %v2679
        %2683 = vmatprep.subr.bf16.mxu0 0
        %2684 = vmatpush1.bf16.msra.mxu0 0
        %2685 = vmatprep.subr.bf16.mxu0 0
        %2686 = vmatpush1.bf16.msra.mxu0 0
        %2687 = vmatprep.subr.bf16.mxu0 0
        %2688 = vmatpush1.bf16.msra.mxu0 0
        %2689 = vmatprep.subr.bf16.mxu0 0
        %2690 = vmatpush1.bf16.msra.mxu0 0
        %2691 = vmatprep.subr.bf16.mxu0 0
        %2692 = vmatpush1.bf16.msra.mxu0 0
        %2693 = vmatprep.subr.bf16.mxu0 0
        %2694 = vmatpush1.bf16.msra.mxu0 0
        %2695 = vmatprep.subr.bf16.mxu0 0
        %2696 = vmatpush1.bf16.msra.mxu0 0
        %2697 = vmatprep.subr.bf16.mxu0 0
        %2698 = vmatpush1.bf16.msra.mxu0 0
        %2699 = vmatprep.subr.bf16.mxu0 0
        %2700 = vmatpush1.bf16.msra.mxu0 0
        %2701 = vmatprep.subr.bf16.mxu0 0
        %2702 = vmatpush1.bf16.msra.mxu0 0
        %2703 = vmatprep.subr.bf16.mxu0 0
        %2704 = vmatpush1.bf16.msra.mxu0 0
        %2705 = vmatprep.subr.bf16.mxu0 0
        %2706 = vmatpush1.bf16.msra.mxu0 0
        %2707 = vmatprep.subr.bf16.mxu0 0
        %2708 = vmatpush1.bf16.msra.mxu0 0
        %2709 = vmatprep.subr.bf16.mxu0 0
        %2710 = vmatpush1.bf16.msra.mxu0 0
        %2711 = vmatprep.subr.bf16.mxu0 0
        %2712 = vmatpush1.bf16.msra.mxu0 0
        %2713 = vmatprep.mubr.bf16.mxu0 0
        %2714 = vmatmul.mubr.bf16.gmra.mrb[0].mxu0 %v2676
        %v2715 = vpop.f32.mrb[0].mxu0
        %v2716 = vadd.f32 0.0, %v2715
        %v2717 = vpop.f32.mrb[0].mxu0
        %v2718 = vpop.f32.mrb[0].mxu0
        %v2719 = vpop.f32.mrb[0].mxu0
        %2720 = vdwg.mxu0
        %v2722 = vrot.slane %v1682, 4
        %v2724 = vsel %vm2280, %v2722, 0
        %v2727 = vsel %vm2280, %v1978, 0
        %2729 = vmatprep.subr.bf16.mxu0 0
        %2730 = vmatpush1.bf16.xpose.msra.mxu0 %v2727
        %2731 = vmatprep.subr.bf16.mxu0 0
        %2732 = vmatpush1.bf16.xpose.msra.mxu0 0
        %2733 = vmatprep.subr.bf16.mxu0 0
        %2734 = vmatpush1.bf16.xpose.msra.mxu0 0
        %2735 = vmatprep.subr.bf16.mxu0 0
        %2736 = vmatpush1.bf16.xpose.msra.mxu0 0
        %2737 = vmatprep.subr.bf16.mxu0 0
        %2738 = vmatpush1.bf16.xpose.msra.mxu0 0
        %2739 = vmatprep.subr.bf16.mxu0 0
        %2740 = vmatpush1.bf16.xpose.msra.mxu0 0
        %2741 = vmatprep.subr.bf16.mxu0 0
        %2742 = vmatpush1.bf16.xpose.msra.mxu0 0
        %2743 = vmatprep.subr.bf16.mxu0 0
        %2744 = vmatpush1.bf16.xpose.msra.mxu0 0
        %2745 = vmatprep.subr.bf16.mxu0 0
        %2746 = vmatpush1.bf16.xpose.msra.mxu0 0
        %2747 = vmatprep.subr.bf16.mxu0 0
        %2748 = vmatpush1.bf16.xpose.msra.mxu0 0
        %2749 = vmatprep.subr.bf16.mxu0 0
        %2750 = vmatpush1.bf16.xpose.msra.mxu0 0
        %2751 = vmatprep.subr.bf16.mxu0 0
        %2752 = vmatpush1.bf16.xpose.msra.mxu0 0
        %2753 = vmatprep.subr.bf16.mxu0 0
        %2754 = vmatpush1.bf16.xpose.msra.mxu0 0
        %2755 = vmatprep.subr.bf16.mxu0 0
        %2756 = vmatpush1.bf16.xpose.msra.mxu0 0
        %2757 = vmatprep.subr.bf16.mxu0 0
        %2758 = vmatpush1.bf16.xpose.msra.mxu0 0
        %2759 = vmatprep.subr.bf16.mxu0 0
        %2760 = vmatpush1.bf16.xpose.msra.mxu0 0
        %2761 = vmatprep.mubr.bf16.mxu0 0
        %2762 = vmatmul.mubr.bf16.gmra.mrb[0].mxu0 %v2724
        %v2763 = vpop.f32.mrb[0].mxu0
        %v2764 = vadd.f32 0.0, %v2763
        %v2765 = vpop.f32.mrb[0].mxu0
        %v2766 = vpop.f32.mrb[0].mxu0
        %v2767 = vpop.f32.mrb[0].mxu0
        %2768 = vdwg.mxu0
        %v2770 = vrot.slane %v1683, 4
        %v2772 = vsel %vm2280, %v2770, 0
        %v2775 = vsel %vm2280, %v1979, 0
        %2777 = vmatprep.subr.bf16.mxu0 0
        %2778 = vmatpush1.bf16.xpose.msra.mxu0 %v2775
        %2779 = vmatprep.subr.bf16.mxu0 0
        %2780 = vmatpush1.bf16.xpose.msra.mxu0 0
        %2781 = vmatprep.subr.bf16.mxu0 0
        %2782 = vmatpush1.bf16.xpose.msra.mxu0 0
        %2783 = vmatprep.subr.bf16.mxu0 0
        %2784 = vmatpush1.bf16.xpose.msra.mxu0 0
        %2785 = vmatprep.subr.bf16.mxu0 0
        %2786 = vmatpush1.bf16.xpose.msra.mxu0 0
        %2787 = vmatprep.subr.bf16.mxu0 0
        %2788 = vmatpush1.bf16.xpose.msra.mxu0 0
        %2789 = vmatprep.subr.bf16.mxu0 0
        %2790 = vmatpush1.bf16.xpose.msra.mxu0 0
        %2791 = vmatprep.subr.bf16.mxu0 0
        %2792 = vmatpush1.bf16.xpose.msra.mxu0 0
        %2793 = vmatprep.subr.bf16.mxu0 0
        %2794 = vmatpush1.bf16.xpose.msra.mxu0 0
        %2795 = vmatprep.subr.bf16.mxu0 0
        %2796 = vmatpush1.bf16.xpose.msra.mxu0 0
        %2797 = vmatprep.subr.bf16.mxu0 0
        %2798 = vmatpush1.bf16.xpose.msra.mxu0 0
        %2799 = vmatprep.subr.bf16.mxu0 0
        %2800 = vmatpush1.bf16.xpose.msra.mxu0 0
        %2801 = vmatprep.subr.bf16.mxu0 0
        %2802 = vmatpush1.bf16.xpose.msra.mxu0 0
        %2803 = vmatprep.subr.bf16.mxu0 0
        %2804 = vmatpush1.bf16.xpose.msra.mxu0 0
        %2805 = vmatprep.subr.bf16.mxu0 0
        %2806 = vmatpush1.bf16.xpose.msra.mxu0 0
        %2807 = vmatprep.subr.bf16.mxu0 0
        %2808 = vmatpush1.bf16.xpose.msra.mxu0 0
        %2809 = vmatprep.mubr.bf16.mxu0 0
        %2810 = vmatmul.mubr.bf16.gmra.mrb[0].mxu0 %v2772
        %v2811 = vpop.f32.mrb[0].mxu0
        %v2812 = vadd.f32 0.0, %v2811
        %v2813 = vpop.f32.mrb[0].mxu0
        %v2814 = vpop.f32.mrb[0].mxu0
        %v2815 = vpop.f32.mrb[0].mxu0
        %2816 = vdwg.mxu0
        %v2818 = vrot.slane %v1684, 4
        %v2820 = vsel %vm2280, %v2818, 0
        %v2823 = vsel %vm2280, %v1980, 0
        %2825 = vmatprep.subr.bf16.mxu0 0
        %2826 = vmatpush1.bf16.xpose.msra.mxu0 %v2823
        %2827 = vmatprep.subr.bf16.mxu0 0
        %2828 = vmatpush1.bf16.xpose.msra.mxu0 0
        %2829 = vmatprep.subr.bf16.mxu0 0
        %2830 = vmatpush1.bf16.xpose.msra.mxu0 0
        %2831 = vmatprep.subr.bf16.mxu0 0
        %2832 = vmatpush1.bf16.xpose.msra.mxu0 0
        %2833 = vmatprep.subr.bf16.mxu0 0
        %2834 = vmatpush1.bf16.xpose.msra.mxu0 0
        %2835 = vmatprep.subr.bf16.mxu0 0
        %2836 = vmatpush1.bf16.xpose.msra.mxu0 0
        %2837 = vmatprep.subr.bf16.mxu0 0
        %2838 = vmatpush1.bf16.xpose.msra.mxu0 0
        %2839 = vmatprep.subr.bf16.mxu0 0
        %2840 = vmatpush1.bf16.xpose.msra.mxu0 0
        %2841 = vmatprep.subr.bf16.mxu0 0
        %2842 = vmatpush1.bf16.xpose.msra.mxu0 0
        %2843 = vmatprep.subr.bf16.mxu0 0
        %2844 = vmatpush1.bf16.xpose.msra.mxu0 0
        %2845 = vmatprep.subr.bf16.mxu0 0
        %2846 = vmatpush1.bf16.xpose.msra.mxu0 0
        %2847 = vmatprep.subr.bf16.mxu0 0
        %2848 = vmatpush1.bf16.xpose.msra.mxu0 0
        %2849 = vmatprep.subr.bf16.mxu0 0
        %2850 = vmatpush1.bf16.xpose.msra.mxu0 0
        %2851 = vmatprep.subr.bf16.mxu0 0
        %2852 = vmatpush1.bf16.xpose.msra.mxu0 0
        %2853 = vmatprep.subr.bf16.mxu0 0
        %2854 = vmatpush1.bf16.xpose.msra.mxu0 0
        %2855 = vmatprep.subr.bf16.mxu0 0
        %2856 = vmatpush1.bf16.xpose.msra.mxu0 0
        %2857 = vmatprep.mubr.bf16.mxu0 0
        %2858 = vmatmul.mubr.bf16.gmra.mrb[0].mxu0 %v2820
        %v2859 = vpop.f32.mrb[0].mxu0
        %v2860 = vadd.f32 0.0, %v2859
        %v2861 = vpop.f32.mrb[0].mxu0
        %v2862 = vpop.f32.mrb[0].mxu0
        %v2863 = vpop.f32.mrb[0].mxu0
        %2864 = vdwg.mxu0
        %v2866 = vrot.slane %v1685, 4
        %v2868 = vsel %vm2280, %v2866, 0
        %v2871 = vsel %vm2280, %v1981, 0
        %2873 = vmatprep.subr.bf16.mxu0 0
        %2874 = vmatpush1.bf16.xpose.msra.mxu0 %v2871
        %2875 = vmatprep.subr.bf16.mxu0 0
        %2876 = vmatpush1.bf16.xpose.msra.mxu0 0
        %2877 = vmatprep.subr.bf16.mxu0 0
        %2878 = vmatpush1.bf16.xpose.msra.mxu0 0
        %2879 = vmatprep.subr.bf16.mxu0 0
        %2880 = vmatpush1.bf16.xpose.msra.mxu0 0
        %2881 = vmatprep.subr.bf16.mxu0 0
        %2882 = vmatpush1.bf16.xpose.msra.mxu0 0
        %2883 = vmatprep.subr.bf16.mxu0 0
        %2884 = vmatpush1.bf16.xpose.msra.mxu0 0
        %2885 = vmatprep.subr.bf16.mxu0 0
        %2886 = vmatpush1.bf16.xpose.msra.mxu0 0
        %2887 = vmatprep.subr.bf16.mxu0 0
        %2888 = vmatpush1.bf16.xpose.msra.mxu0 0
        %2889 = vmatprep.subr.bf16.mxu0 0
        %2890 = vmatpush1.bf16.xpose.msra.mxu0 0
        %2891 = vmatprep.subr.bf16.mxu0 0
        %2892 = vmatpush1.bf16.xpose.msra.mxu0 0
        %2893 = vmatprep.subr.bf16.mxu0 0
        %2894 = vmatpush1.bf16.xpose.msra.mxu0 0
        %2895 = vmatprep.subr.bf16.mxu0 0
        %2896 = vmatpush1.bf16.xpose.msra.mxu0 0
        %2897 = vmatprep.subr.bf16.mxu0 0
        %2898 = vmatpush1.bf16.xpose.msra.mxu0 0
        %2899 = vmatprep.subr.bf16.mxu0 0
        %2900 = vmatpush1.bf16.xpose.msra.mxu0 0
        %2901 = vmatprep.subr.bf16.mxu0 0
        %2902 = vmatpush1.bf16.xpose.msra.mxu0 0
        %2903 = vmatprep.subr.bf16.mxu0 0
        %2904 = vmatpush1.bf16.xpose.msra.mxu0 0
        %2905 = vmatprep.mubr.bf16.mxu0 0
        %2906 = vmatmul.mubr.bf16.gmra.mrb[0].mxu0 %v2868
        %v2907 = vpop.f32.mrb[0].mxu0
        %v2908 = vadd.f32 0.0, %v2907
        %v2909 = vpop.f32.mrb[0].mxu0
        %v2910 = vpop.f32.mrb[0].mxu0
        %v2911 = vpop.f32.mrb[0].mxu0
        %2912 = vdwg.mxu0
        %v2913 = vmul.f32 %v2764, 0.17677669
        %v2914 = vmul.f32 %v2812, 0.17677669
        %v2915 = vmul.f32 %v2860, 0.17677669
        %v2916 = vmul.f32 %v2908, 0.17677669
        %v2917 = vsel %vm2475, %v2913, -inf
        %2918 = vmax.xlane.f32.xlu0 %v2917
        %v2919 = vpop.xlane.xlu0 %2918
        %v2920 = vsel %vm2475, %v2914, -inf
        %2921 = vmax.xlane.f32.xlu0 %v2920
        %v2922 = vpop.xlane.xlu0 %2921
        %v2923 = vsel %vm2475, %v2915, -inf
        %2924 = vmax.xlane.f32.xlu0 %v2923
        %v2925 = vpop.xlane.xlu0 %2924
        %v2926 = vsel %vm2475, %v2916, -inf
        %2927 = vmax.xlane.f32.xlu0 %v2926
        %v2928 = vpop.xlane.xlu0 %2927
        %v2929 = vsub.f32 %v2913, %v2919
        %v2930 = vsub.f32 %v2914, %v2922
        %v2931 = vsub.f32 %v2915, %v2925
        %v2932 = vsub.f32 %v2916, %v2928
        %v2933 = vmul.f32 %v2929, 1.442695
        %v2934 = vpow.pop %v2933
        %v2935 = vmul.f32 %v2930, 1.442695
        %v2936 = vpow.pop %v2935
        %v2937 = vmul.f32 %v2931, 1.442695
        %v2938 = vpow.pop %v2937
        %v2939 = vmul.f32 %v2932, 1.442695
        %v2940 = vpow.pop %v2939
        %v2941 = vsel %vm2475, %v2934, 0.0
        %2942 = vadd.xlane.f32.xlu0 %v2941
        %v2943 = vpop.xlane.xlu0 %2942
        %v2944 = vsel %vm2475, %v2936, 0.0
        %2945 = vadd.xlane.f32.xlu0 %v2944
        %v2946 = vpop.xlane.xlu0 %2945
        %v2947 = vsel %vm2475, %v2938, 0.0
        %2948 = vadd.xlane.f32.xlu0 %v2947
        %v2949 = vpop.xlane.xlu0 %2948
        %v2950 = vsel %vm2475, %v2940, 0.0
        %2951 = vadd.xlane.f32.xlu0 %v2950
        %v2952 = vpop.xlane.xlu0 %2951
        %v2953 = vrcp.pop %v2943
        %v2954 = vrcp.pop %v2946
        %v2955 = vrcp.pop %v2949
        %v2956 = vrcp.pop %v2952
        %v2957 = vmul.f32 %v2934, %v2953
        %v2958 = vmul.f32 %v2936, %v2954
        %v2959 = vmul.f32 %v2938, %v2955
        %v2960 = vmul.f32 %v2940, %v2956
        %2961 = vst.msk [vmem:[%s1014] sm:$0xff] %vm2475, %v2957
        %2962 = vst.msk [vmem:[%s1014 + $0x8] sm:$0xff] %vm2475, %v2958
        %2963 = vst.msk [vmem:[%s1014 + $0x10] sm:$0xff] %vm2475, %v2959
        %2964 = vst.msk [vmem:[%s1014 + $0x18] sm:$0xff] %vm2475, %v2960
        %v2965 = vpack.c.bf16 %v2957, %v2957
        %v2966 = vpack.c.bf16 %v2958, %v2958
        %v2967 = vpack.c.bf16 %v2959, %v2959
        %v2968 = vpack.c.bf16 %v2960, %v2960
        %v2970 = vsel %vm2475, %v2965, 0
        %v2973 = vsel %vm2533, %v2274, 0
        %2975 = vmatprep.subr.bf16.mxu0 0
        %2976 = vmatpush1.bf16.msra.mxu0 %v2973
        %2977 = vmatprep.subr.bf16.mxu0 0
        %2978 = vmatpush1.bf16.msra.mxu0 0
        %2979 = vmatprep.subr.bf16.mxu0 0
        %2980 = vmatpush1.bf16.msra.mxu0 0
        %2981 = vmatprep.subr.bf16.mxu0 0
        %2982 = vmatpush1.bf16.msra.mxu0 0
        %2983 = vmatprep.subr.bf16.mxu0 0
        %2984 = vmatpush1.bf16.msra.mxu0 0
        %2985 = vmatprep.subr.bf16.mxu0 0
        %2986 = vmatpush1.bf16.msra.mxu0 0
        %2987 = vmatprep.subr.bf16.mxu0 0
        %2988 = vmatpush1.bf16.msra.mxu0 0
        %2989 = vmatprep.subr.bf16.mxu0 0
        %2990 = vmatpush1.bf16.msra.mxu0 0
        %2991 = vmatprep.subr.bf16.mxu0 0
        %2992 = vmatpush1.bf16.msra.mxu0 0
        %2993 = vmatprep.subr.bf16.mxu0 0
        %2994 = vmatpush1.bf16.msra.mxu0 0
        %2995 = vmatprep.subr.bf16.mxu0 0
        %2996 = vmatpush1.bf16.msra.mxu0 0
        %2997 = vmatprep.subr.bf16.mxu0 0
        %2998 = vmatpush1.bf16.msra.mxu0 0
        %2999 = vmatprep.subr.bf16.mxu0 0
        %3000 = vmatpush1.bf16.msra.mxu0 0
        %3001 = vmatprep.subr.bf16.mxu0 0
        %3002 = vmatpush1.bf16.msra.mxu0 0
        %3003 = vmatprep.subr.bf16.mxu0 0
        %3004 = vmatpush1.bf16.msra.mxu0 0
        %3005 = vmatprep.subr.bf16.mxu0 0
        %3006 = vmatpush1.bf16.msra.mxu0 0
        %3007 = vmatprep.mubr.bf16.mxu0 0
        %3008 = vmatmul.mubr.bf16.gmra.mrb[0].mxu0 %v2970
        %v3009 = vpop.f32.mrb[0].mxu0
        %v3010 = vadd.f32 0.0, %v3009
        %v3011 = vpop.f32.mrb[0].mxu0
        %v3012 = vpop.f32.mrb[0].mxu0
        %v3013 = vpop.f32.mrb[0].mxu0
        %3014 = vdwg.mxu0
        %v3016 = vsel %vm2475, %v2966, 0
        %v3019 = vsel %vm2533, %v2275, 0
        %3021 = vmatprep.subr.bf16.mxu0 0
        %3022 = vmatpush1.bf16.msra.mxu0 %v3019
        %3023 = vmatprep.subr.bf16.mxu0 0
        %3024 = vmatpush1.bf16.msra.mxu0 0
        %3025 = vmatprep.subr.bf16.mxu0 0
        %3026 = vmatpush1.bf16.msra.mxu0 0
        %3027 = vmatprep.subr.bf16.mxu0 0
        %3028 = vmatpush1.bf16.msra.mxu0 0
        %3029 = vmatprep.subr.bf16.mxu0 0
        %3030 = vmatpush1.bf16.msra.mxu0 0
        %3031 = vmatprep.subr.bf16.mxu0 0
        %3032 = vmatpush1.bf16.msra.mxu0 0
        %3033 = vmatprep.subr.bf16.mxu0 0
        %3034 = vmatpush1.bf16.msra.mxu0 0
        %3035 = vmatprep.subr.bf16.mxu0 0
        %3036 = vmatpush1.bf16.msra.mxu0 0
        %3037 = vmatprep.subr.bf16.mxu0 0
        %3038 = vmatpush1.bf16.msra.mxu0 0
        %3039 = vmatprep.subr.bf16.mxu0 0
        %3040 = vmatpush1.bf16.msra.mxu0 0
        %3041 = vmatprep.subr.bf16.mxu0 0
        %3042 = vmatpush1.bf16.msra.mxu0 0
        %3043 = vmatprep.subr.bf16.mxu0 0
        %3044 = vmatpush1.bf16.msra.mxu0 0
        %3045 = vmatprep.subr.bf16.mxu0 0
        %3046 = vmatpush1.bf16.msra.mxu0 0
        %3047 = vmatprep.subr.bf16.mxu0 0
        %3048 = vmatpush1.bf16.msra.mxu0 0
        %3049 = vmatprep.subr.bf16.mxu0 0
        %3050 = vmatpush1.bf16.msra.mxu0 0
        %3051 = vmatprep.subr.bf16.mxu0 0
        %3052 = vmatpush1.bf16.msra.mxu0 0
        %3053 = vmatprep.mubr.bf16.mxu0 0
        %3054 = vmatmul.mubr.bf16.gmra.mrb[0].mxu0 %v3016
        %v3055 = vpop.f32.mrb[0].mxu0
        %v3056 = vadd.f32 0.0, %v3055
        %v3057 = vpop.f32.mrb[0].mxu0
        %v3058 = vpop.f32.mrb[0].mxu0
        %v3059 = vpop.f32.mrb[0].mxu0
        %3060 = vdwg.mxu0
        %v3062 = vsel %vm2475, %v2967, 0
        %v3065 = vsel %vm2533, %v2276, 0
        %3067 = vmatprep.subr.bf16.mxu0 0
        %3068 = vmatpush1.bf16.msra.mxu0 %v3065
        %3069 = vmatprep.subr.bf16.mxu0 0
        %3070 = vmatpush1.bf16.msra.mxu0 0
        %3071 = vmatprep.subr.bf16.mxu0 0
        %3072 = vmatpush1.bf16.msra.mxu0 0
        %3073 = vmatprep.subr.bf16.mxu0 0
        %3074 = vmatpush1.bf16.msra.mxu0 0
        %3075 = vmatprep.subr.bf16.mxu0 0
        %3076 = vmatpush1.bf16.msra.mxu0 0
        %3077 = vmatprep.subr.bf16.mxu0 0
        %3078 = vmatpush1.bf16.msra.mxu0 0
        %3079 = vmatprep.subr.bf16.mxu0 0
        %3080 = vmatpush1.bf16.msra.mxu0 0
        %3081 = vmatprep.subr.bf16.mxu0 0
        %3082 = vmatpush1.bf16.msra.mxu0 0
        %3083 = vmatprep.subr.bf16.mxu0 0
        %3084 = vmatpush1.bf16.msra.mxu0 0
        %3085 = vmatprep.subr.bf16.mxu0 0
        %3086 = vmatpush1.bf16.msra.mxu0 0
        %3087 = vmatprep.subr.bf16.mxu0 0
        %3088 = vmatpush1.bf16.msra.mxu0 0
        %3089 = vmatprep.subr.bf16.mxu0 0
        %3090 = vmatpush1.bf16.msra.mxu0 0
        %3091 = vmatprep.subr.bf16.mxu0 0
        %3092 = vmatpush1.bf16.msra.mxu0 0
        %3093 = vmatprep.subr.bf16.mxu0 0
        %3094 = vmatpush1.bf16.msra.mxu0 0
        %3095 = vmatprep.subr.bf16.mxu0 0
        %3096 = vmatpush1.bf16.msra.mxu0 0
        %3097 = vmatprep.subr.bf16.mxu0 0
        %3098 = vmatpush1.bf16.msra.mxu0 0
        %3099 = vmatprep.mubr.bf16.mxu0 0
        %3100 = vmatmul.mubr.bf16.gmra.mrb[0].mxu0 %v3062
        %v3101 = vpop.f32.mrb[0].mxu0
        %v3102 = vadd.f32 0.0, %v3101
        %v3103 = vpop.f32.mrb[0].mxu0
        %v3104 = vpop.f32.mrb[0].mxu0
        %v3105 = vpop.f32.mrb[0].mxu0
        %3106 = vdwg.mxu0
        %v3108 = vsel %vm2475, %v2968, 0
        %v3111 = vsel %vm2533, %v2277, 0
        %3113 = vmatprep.subr.bf16.mxu0 0
        %3114 = vmatpush1.bf16.msra.mxu0 %v3111
        %3115 = vmatprep.subr.bf16.mxu0 0
        %3116 = vmatpush1.bf16.msra.mxu0 0
        %3117 = vmatprep.subr.bf16.mxu0 0
        %3118 = vmatpush1.bf16.msra.mxu0 0
        %3119 = vmatprep.subr.bf16.mxu0 0
        %3120 = vmatpush1.bf16.msra.mxu0 0
        %3121 = vmatprep.subr.bf16.mxu0 0
        %3122 = vmatpush1.bf16.msra.mxu0 0
        %3123 = vmatprep.subr.bf16.mxu0 0
        %3124 = vmatpush1.bf16.msra.mxu0 0
        %3125 = vmatprep.subr.bf16.mxu0 0
        %3126 = vmatpush1.bf16.msra.mxu0 0
        %3127 = vmatprep.subr.bf16.mxu0 0
        %3128 = vmatpush1.bf16.msra.mxu0 0
        %3129 = vmatprep.subr.bf16.mxu0 0
        %3130 = vmatpush1.bf16.msra.mxu0 0
        %3131 = vmatprep.subr.bf16.mxu0 0
        %3132 = vmatpush1.bf16.msra.mxu0 0
        %3133 = vmatprep.subr.bf16.mxu0 0
        %3134 = vmatpush1.bf16.msra.mxu0 0
        %3135 = vmatprep.subr.bf16.mxu0 0
        %3136 = vmatpush1.bf16.msra.mxu0 0
        %3137 = vmatprep.subr.bf16.mxu0 0
        %3138 = vmatpush1.bf16.msra.mxu0 0
        %3139 = vmatprep.subr.bf16.mxu0 0
        %3140 = vmatpush1.bf16.msra.mxu0 0
        %3141 = vmatprep.subr.bf16.mxu0 0
        %3142 = vmatpush1.bf16.msra.mxu0 0
        %3143 = vmatprep.subr.bf16.mxu0 0
        %3144 = vmatpush1.bf16.msra.mxu0 0
        %3145 = vmatprep.mubr.bf16.mxu0 0
        %3146 = vmatmul.mubr.bf16.gmra.mrb[0].mxu0 %v3108
        %v3147 = vpop.f32.mrb[0].mxu0
        %v3148 = vadd.f32 0.0, %v3147
        %v3149 = vpop.f32.mrb[0].mxu0
        %v3150 = vpop.f32.mrb[0].mxu0
        %v3151 = vpop.f32.mrb[0].mxu0
        %3152 = vdwg.mxu0
        %v3153 = vcombine.low %v2572, %v2668
        %v3154 = vcombine.high %v2572, %v2668
        %v3156 = vunpack.c.l.s4 1983009808
        %v3157 = vunpack.c.0.s8 %v3156
        %v3158 = vlaneseq
        %v3159 = vshrl.u32 %v3158, 7
        %v3160 = vsub.s32 %v3157, %v3159
        %v3161 = vrot.slane %v3153, %v3160
        %v3163 = vunpack.c.l.s4 1983009808
        %v3164 = vunpack.c.0.s8 %v3163
        %v3165 = vlaneseq
        %v3166 = vshrl.u32 %v3165, 7
        %v3167 = vsub.s32 %v3164, %v3166
        %v3168 = vrot.slane %v3154, %v3167
        %v3169 = vcombine.low %v2620, %v2716
        %v3170 = vcombine.high %v2620, %v2716
        %v3172 = vunpack.c.l.s4 1983009808
        %v3173 = vunpack.c.0.s8 %v3172
        %v3174 = vlaneseq
        %v3175 = vshrl.u32 %v3174, 7
        %v3176 = vsub.s32 %v3173, %v3175
        %v3177 = vrot.slane %v3169, %v3176
        %v3179 = vunpack.c.l.s4 1983009808
        %v3180 = vunpack.c.0.s8 %v3179
        %v3181 = vlaneseq
        %v3182 = vshrl.u32 %v3181, 7
        %v3183 = vsub.s32 %v3180, %v3182
        %v3184 = vrot.slane %v3170, %v3183
        %v3185 = vcombine.low %v3161, %v3177
        %v3186 = vcombine.high %v3161, %v3177
        %v3188 = vunpack.c.l.s4 1934713408
        %v3189 = vunpack.c.0.s8 %v3188
        %v3190 = vlaneseq
        %v3191 = vshrl.u32 %v3190, 7
        %v3192 = vsub.s32 %v3189, %v3191
        %v3193 = vrot.slane %v3185, %v3192
        %v3195 = vunpack.c.l.s4 1934713408
        %v3196 = vunpack.c.0.s8 %v3195
        %v3197 = vlaneseq
        %v3198 = vshrl.u32 %v3197, 7
        %v3199 = vsub.s32 %v3196, %v3198
        %v3200 = vrot.slane %v3186, %v3199
        %v3201 = vcombine.low %v3168, %v3184
        %v3202 = vcombine.high %v3168, %v3184
        %v3204 = vunpack.c.l.s4 1934713408
        %v3205 = vunpack.c.0.s8 %v3204
        %v3206 = vlaneseq
        %v3207 = vshrl.u32 %v3206, 7
        %v3208 = vsub.s32 %v3205, %v3207
        %v3209 = vrot.slane %v3201, %v3208
        %v3211 = vunpack.c.l.s4 1934713408
        %v3212 = vunpack.c.0.s8 %v3211
        %v3213 = vlaneseq
        %v3214 = vshrl.u32 %v3213, 7
        %v3215 = vsub.s32 %v3212, %v3214
        %v3216 = vrot.slane %v3202, %v3215
        %v3217 = vcombine.high %v3193, 0.0
        %v3218 = vcombine.high %v3200, 0.0
        %v3219 = vcombine.high %v3209, 0.0
        %v3220 = vcombine.high %v3216, 0.0
        %v3221 = vcombine.low %v3010, %v3102
        %v3222 = vcombine.high %v3010, %v3102
        %v3224 = vunpack.c.l.s4 1983009808
        %v3225 = vunpack.c.0.s8 %v3224
        %v3226 = vlaneseq
        %v3227 = vshrl.u32 %v3226, 7
        %v3228 = vsub.s32 %v3225, %v3227
        %v3229 = vrot.slane %v3221, %v3228
        %v3231 = vunpack.c.l.s4 1983009808
        %v3232 = vunpack.c.0.s8 %v3231
        %v3233 = vlaneseq
        %v3234 = vshrl.u32 %v3233, 7
        %v3235 = vsub.s32 %v3232, %v3234
        %v3236 = vrot.slane %v3222, %v3235
        %v3237 = vcombine.low %v3056, %v3148
        %v3238 = vcombine.high %v3056, %v3148
        %v3240 = vunpack.c.l.s4 1983009808
        %v3241 = vunpack.c.0.s8 %v3240
        %v3242 = vlaneseq
        %v3243 = vshrl.u32 %v3242, 7
        %v3244 = vsub.s32 %v3241, %v3243
        %v3245 = vrot.slane %v3237, %v3244
        %v3247 = vunpack.c.l.s4 1983009808
        %v3248 = vunpack.c.0.s8 %v3247
        %v3249 = vlaneseq
        %v3250 = vshrl.u32 %v3249, 7
        %v3251 = vsub.s32 %v3248, %v3250
        %v3252 = vrot.slane %v3238, %v3251
        %v3253 = vcombine.low %v3229, %v3245
        %v3254 = vcombine.high %v3229, %v3245
        %v3256 = vunpack.c.l.s4 1934713408
        %v3257 = vunpack.c.0.s8 %v3256
        %v3258 = vlaneseq
        %v3259 = vshrl.u32 %v3258, 7
        %v3260 = vsub.s32 %v3257, %v3259
        %v3261 = vrot.slane %v3253, %v3260
        %v3263 = vunpack.c.l.s4 1934713408
        %v3264 = vunpack.c.0.s8 %v3263
        %v3265 = vlaneseq
        %v3266 = vshrl.u32 %v3265, 7
        %v3267 = vsub.s32 %v3264, %v3266
        %v3268 = vrot.slane %v3254, %v3267
        %v3269 = vcombine.low %v3236, %v3252
        %v3270 = vcombine.high %v3236, %v3252
        %v3272 = vunpack.c.l.s4 1934713408
        %v3273 = vunpack.c.0.s8 %v3272
        %v3274 = vlaneseq
        %v3275 = vshrl.u32 %v3274, 7
        %v3276 = vsub.s32 %v3273, %v3275
        %v3277 = vrot.slane %v3269, %v3276
        %v3279 = vunpack.c.l.s4 1934713408
        %v3280 = vunpack.c.0.s8 %v3279
        %v3281 = vlaneseq
        %v3282 = vshrl.u32 %v3281, 7
        %v3283 = vsub.s32 %v3280, %v3282
        %v3284 = vrot.slane %v3270, %v3283
        %v3285 = vcombine.high %v3261, 0.0
        %v3286 = vcombine.high %v3268, 0.0
        %v3287 = vcombine.high %v3277, 0.0
        %v3288 = vcombine.high %v3284, 0.0
        %v3289 = vcombine.low %v3193, %v3200
        %v3291 = vunpack.c.l.s4 1983009808
        %v3292 = vunpack.c.0.s8 %v3291
        %v3293 = vlaneseq
        %v3294 = vshrl.u32 %v3293, 7
        %v3295 = vsub.s32 %v3292, %v3294
        %v3296 = vrot.slane %v3289, %v3295
        %v3297 = vcombine.low %v3217, %v3218
        %v3299 = vunpack.c.l.s4 1983009808
        %v3300 = vunpack.c.0.s8 %v3299
        %v3301 = vlaneseq
        %v3302 = vshrl.u32 %v3301, 7
        %v3303 = vsub.s32 %v3300, %v3302
        %v3304 = vrot.slane %v3297, %v3303
        %v3305 = vcombine.low %v3209, %v3216
        %v3307 = vunpack.c.l.s4 1983009808
        %v3308 = vunpack.c.0.s8 %v3307
        %v3309 = vlaneseq
        %v3310 = vshrl.u32 %v3309, 7
        %v3311 = vsub.s32 %v3308, %v3310
        %v3312 = vrot.slane %v3305, %v3311
        %v3313 = vcombine.low %v3219, %v3220
        %v3315 = vunpack.c.l.s4 1983009808
        %v3316 = vunpack.c.0.s8 %v3315
        %v3317 = vlaneseq
        %v3318 = vshrl.u32 %v3317, 7
        %v3319 = vsub.s32 %v3316, %v3318
        %v3320 = vrot.slane %v3313, %v3319
        %v3321 = vcombine.low %v3296, %v3304
        %v3322 = vcombine.high %v3296, %v3304
        %v3324 = vunpack.c.l.s4 1934713408
        %v3325 = vunpack.c.0.s8 %v3324
        %v3326 = vlaneseq
        %v3327 = vshrl.u32 %v3326, 7
        %v3328 = vsub.s32 %v3325, %v3327
        %v3329 = vrot.slane %v3321, %v3328
        %v3331 = vunpack.c.l.s4 1934713408
        %v3332 = vunpack.c.0.s8 %v3331
        %v3333 = vlaneseq
        %v3334 = vshrl.u32 %v3333, 7
        %v3335 = vsub.s32 %v3332, %v3334
        %v3336 = vrot.slane %v3322, %v3335
        %v3337 = vcombine.low %v3312, %v3320
        %v3338 = vcombine.high %v3312, %v3320
        %v3340 = vunpack.c.l.s4 1934713408
        %v3341 = vunpack.c.0.s8 %v3340
        %v3342 = vlaneseq
        %v3343 = vshrl.u32 %v3342, 7
        %v3344 = vsub.s32 %v3341, %v3343
        %v3345 = vrot.slane %v3337, %v3344
        %v3347 = vunpack.c.l.s4 1934713408
        %v3348 = vunpack.c.0.s8 %v3347
        %v3349 = vlaneseq
        %v3350 = vshrl.u32 %v3349, 7
        %v3351 = vsub.s32 %v3348, %v3350
        %v3352 = vrot.slane %v3338, %v3351
        %v3353 = vcombine.low %v3329, %v3345
        %v3354 = vcombine.high %v3329, %v3345
        %v3355 = vcombine.low %v3336, %v3352
        %v3356 = vcombine.high %v3336, %v3352
        %v3357 = vcombine.low %v3261, %v3268
        %v3359 = vunpack.c.l.s4 1983009808
        %v3360 = vunpack.c.0.s8 %v3359
        %v3361 = vlaneseq
        %v3362 = vshrl.u32 %v3361, 7
        %v3363 = vsub.s32 %v3360, %v3362
        %v3364 = vrot.slane %v3357, %v3363
        %v3365 = vcombine.low %v3285, %v3286
        %v3367 = vunpack.c.l.s4 1983009808
        %v3368 = vunpack.c.0.s8 %v3367
        %v3369 = vlaneseq
        %v3370 = vshrl.u32 %v3369, 7
        %v3371 = vsub.s32 %v3368, %v3370
        %v3372 = vrot.slane %v3365, %v3371
        %v3373 = vcombine.low %v3277, %v3284
        %v3375 = vunpack.c.l.s4 1983009808
        %v3376 = vunpack.c.0.s8 %v3375
        %v3377 = vlaneseq
        %v3378 = vshrl.u32 %v3377, 7
        %v3379 = vsub.s32 %v3376, %v3378
        %v3380 = vrot.slane %v3373, %v3379
        %v3381 = vcombine.low %v3287, %v3288
        %v3383 = vunpack.c.l.s4 1983009808
        %v3384 = vunpack.c.0.s8 %v3383
        %v3385 = vlaneseq
        %v3386 = vshrl.u32 %v3385, 7
        %v3387 = vsub.s32 %v3384, %v3386
        %v3388 = vrot.slane %v3381, %v3387
        %v3389 = vcombine.low %v3364, %v3372
        %v3390 = vcombine.high %v3364, %v3372
        %v3392 = vunpack.c.l.s4 1934713408
        %v3393 = vunpack.c.0.s8 %v3392
        %v3394 = vlaneseq
        %v3395 = vshrl.u32 %v3394, 7
        %v3396 = vsub.s32 %v3393, %v3395
        %v3397 = vrot.slane %v3389, %v3396
        %v3399 = vunpack.c.l.s4 1934713408
        %v3400 = vunpack.c.0.s8 %v3399
        %v3401 = vlaneseq
        %v3402 = vshrl.u32 %v3401, 7
        %v3403 = vsub.s32 %v3400, %v3402
        %v3404 = vrot.slane %v3390, %v3403
        %v3405 = vcombine.low %v3380, %v3388
        %v3406 = vcombine.high %v3380, %v3388
        %v3408 = vunpack.c.l.s4 1934713408
        %v3409 = vunpack.c.0.s8 %v3408
        %v3410 = vlaneseq
        %v3411 = vshrl.u32 %v3410, 7
        %v3412 = vsub.s32 %v3409, %v3411
        %v3413 = vrot.slane %v3405, %v3412
        %v3415 = vunpack.c.l.s4 1934713408
        %v3416 = vunpack.c.0.s8 %v3415
        %v3417 = vlaneseq
        %v3418 = vshrl.u32 %v3417, 7
        %v3419 = vsub.s32 %v3416, %v3418
        %v3420 = vrot.slane %v3406, %v3419
        %v3421 = vcombine.low %v3397, %v3413
        %v3422 = vcombine.high %v3397, %v3413
        %v3423 = vcombine.low %v3404, %v3420
        %v3424 = vcombine.high %v3404, %v3420
        %3427 = vrot.lane.b32.xlu0 %v3354, 32
        %v3428 = vpop.permute.xlu0 %3427
        %3429 = vrot.lane.b32.xlu0 %v3422, 32
        %v3430 = vpop.permute.xlu0 %3429
        %3435 = vrot.lane.b32.xlu0 %v3355, 64
        %v3436 = vpop.permute.xlu0 %3435
        %3437 = vrot.lane.b32.xlu0 %v3423, 64
        %v3438 = vpop.permute.xlu0 %3437
        %3443 = vrot.lane.b32.xlu0 %v3356, 96
        %v3444 = vpop.permute.xlu0 %3443
        %3445 = vrot.lane.b32.xlu0 %v3424, 96
        %v3446 = vpop.permute.xlu0 %3445
        %v3449 = vsel %vm2280, %v3353, %v3428
        %v3450 = vsel %vm2280, %v3421, %v3430
        %vm3451 = vcmask 523264
        %v3452 = vsel %vm3451, %v3449, %v3436
        %v3453 = vsel %vm3451, %v3450, %v3438
        %vm3454 = vcmask 785408
        %v3455 = vsel %vm3454, %v3452, %v3444
        %v3456 = vsel %vm3454, %v3453, %v3446
        %v3457 = vpack.c.bf16 %v3456, %v3455
        %v3458 = vld [vmem:[#allocation11] sm:$0xf]
        %v3459 = vld [vmem:[#allocation11 + $0x4] sm:$0xf]
        %v3460 = vld [vmem:[#allocation11 + $0x8] sm:$0xf]
        %v3461 = vld [vmem:[#allocation11 + $0xc] sm:$0xf]
        %v3462 = vld [vmem:[#allocation11 + $0x10] sm:$0xf]
        %v3463 = vld [vmem:[#allocation11 + $0x14] sm:$0xf]
        %v3464 = vld [vmem:[#allocation11 + $0x18] sm:$0xf]
        %v3465 = vld [vmem:[#allocation11 + $0x1c] sm:$0xf]
        %v3466 = vld [vmem:[#allocation11 + $0x20] sm:$0xf]
        %v3467 = vld [vmem:[#allocation11 + $0x24] sm:$0xf]
        %v3468 = vld [vmem:[#allocation11 + $0x28] sm:$0xf]
        %v3469 = vld [vmem:[#allocation11 + $0x2c] sm:$0xf]
        %v3470 = vld [vmem:[#allocation11 + $0x30] sm:$0xf]
        %v3471 = vld [vmem:[#allocation11 + $0x34] sm:$0xf]
        %v3472 = vld [vmem:[#allocation11 + $0x38] sm:$0xf]
        %v3473 = vld [vmem:[#allocation11 + $0x3c] sm:$0xf]
        %v3474 = vld [vmem:[%s11] sm:$0x1]
        %v3476 = vlaneseq
        %v3477 = vshrl.u32 %v3476, 7
        %v3478 = vsub.s32 0, %v3477
        %v3479 = vrot.slane %v3474, %v3478
        %v3497 = vunpack.c.l.b16 %v3458
        %v3498 = vunpack.c.l.b16 %v3459
        %v3499 = vunpack.c.l.b16 %v3460
        %v3500 = vunpack.c.l.b16 %v3461
        %v3501 = vunpack.c.l.b16 %v3462
        %v3502 = vunpack.c.l.b16 %v3463
        %v3503 = vunpack.c.l.b16 %v3464
        %v3504 = vunpack.c.l.b16 %v3465
        %v3505 = vunpack.c.l.b16 %v3466
        %v3506 = vunpack.c.l.b16 %v3467
        %v3507 = vunpack.c.l.b16 %v3468
        %v3508 = vunpack.c.l.b16 %v3469
        %v3509 = vunpack.c.l.b16 %v3470
        %v3510 = vunpack.c.l.b16 %v3471
        %v3511 = vunpack.c.l.b16 %v3472
        %v3512 = vunpack.c.l.b16 %v3473
        %v3513 = vpack.c.b16 %v3498, %v3497
        %v3514 = vpack.c.b16 %v3500, %v3499
        %v3515 = vpack.c.b16 %v3502, %v3501
        %v3516 = vpack.c.b16 %v3504, %v3503
        %v3517 = vpack.c.b16 %v3506, %v3505
        %v3518 = vpack.c.b16 %v3508, %v3507
        %v3519 = vpack.c.b16 %v3510, %v3509
        %v3520 = vpack.c.b16 %v3512, %v3511
        %3529 = vmatprep.subr.bf16.mxu0 0
        %3530 = vmatpush1.bf16.msra.mxu0 %v3513
        %3531 = vmatprep.subr.bf16.mxu0 0
        %3532 = vmatpush1.bf16.msra.mxu0 %v3514
        %3533 = vmatprep.subr.bf16.mxu0 0
        %3534 = vmatpush1.bf16.msra.mxu0 %v3515
        %3535 = vmatprep.subr.bf16.mxu0 0
        %3536 = vmatpush1.bf16.msra.mxu0 %v3516
        %3537 = vmatprep.subr.bf16.mxu0 0
        %3538 = vmatpush1.bf16.msra.mxu0 %v3517
        %3539 = vmatprep.subr.bf16.mxu0 0
        %3540 = vmatpush1.bf16.msra.mxu0 %v3518
        %3541 = vmatprep.subr.bf16.mxu0 0
        %3542 = vmatpush1.bf16.msra.mxu0 %v3519
        %3543 = vmatprep.subr.bf16.mxu0 0
        %3544 = vmatpush1.bf16.msra.mxu0 %v3520
        %3545 = vmatprep.subr.bf16.mxu0 0
        %3546 = vmatpush1.bf16.msra.mxu0 0
        %3547 = vmatprep.subr.bf16.mxu0 0
        %3548 = vmatpush1.bf16.msra.mxu0 0
        %3549 = vmatprep.subr.bf16.mxu0 0
        %3550 = vmatpush1.bf16.msra.mxu0 0
        %3551 = vmatprep.subr.bf16.mxu0 0
        %3552 = vmatpush1.bf16.msra.mxu0 0
        %3553 = vmatprep.subr.bf16.mxu0 0
        %3554 = vmatpush1.bf16.msra.mxu0 0
        %3555 = vmatprep.subr.bf16.mxu0 0
        %3556 = vmatpush1.bf16.msra.mxu0 0
        %3557 = vmatprep.subr.bf16.mxu0 0
        %3558 = vmatpush1.bf16.msra.mxu0 0
        %3559 = vmatprep.subr.bf16.mxu0 0
        %3560 = vmatpush1.bf16.msra.mxu0 0
        %3561 = vmatprep.mubr.bf16.mxu0 0
        %3562 = vmatmul.mubr.bf16.gmra.mrb[0].mxu0 %v3457
        %v3563 = vpop.f32.mrb[0].mxu0
        %v3564 = vadd.f32 %v3479, %v3563
        %v3565 = vpop.f32.mrb[0].mxu0
        %v3566 = vpop.f32.mrb[0].mxu0
        %v3567 = vadd.f32 %v3479, %v3566
        %v3568 = vpop.f32.mrb[0].mxu0
        %3569 = vdwg.mxu0
        %v3570 = vadd.f32 %v3564, %v1052
        %v3571 = vadd.f32 %v3567, %v1017
        %3572 = vadd.xlane.f32.xlu0 %v3570
        %v3573 = vpop.xlane.xlu0 %3572
        %3574 = vadd.xlane.f32.xlu0 %v3571
        %v3575 = vpop.xlane.xlu0 %3574
        %v3576 = vmul.f32 %v3573, %v1020
        %v3577 = vmul.f32 %v3575, %v1020
        %v3578 = vsub.f32 %v3570, %v3576
        %v3579 = vsub.f32 %v3571, %v3577
        %v3580 = vmul.f32 %v3578, %v3578
        %v3581 = vmul.f32 %v3579, %v3579
        %3582 = vadd.xlane.f32.xlu0 %v3580
        %v3583 = vpop.xlane.xlu0 %3582
        %3584 = vadd.xlane.f32.xlu0 %v3581
        %v3585 = vpop.xlane.xlu0 %3584
        %v3586 = vmul.f32 %v3583, %v1020
        %v3587 = vmul.f32 %v3585, %v1020
        %v3588 = vadd.f32 %v3586, 1e-12
        %v3589 = vadd.f32 %v3587, 1e-12
        %v3590 = vrsqrt.pop %v3588
        %v3591 = vmul.f32 %v3588, %v3590
        %vm3592 = vcmp.eq.f32.partialorder %v3588, inf
        %v3593 = vsel %vm3592, %v3588, %v3591
        %vm3594 = vcmp.eq.f32.partialorder %v3588, 0.0
        %v3595 = vand.u32 %v3588, 2147483648
        %v3596 = vsel %vm3594, %v3595, %v3593
        %v3597 = vrsqrt.pop %v3589
        %v3598 = vmul.f32 %v3589, %v3597
        %vm3599 = vcmp.eq.f32.partialorder %v3589, inf
        %v3600 = vsel %vm3599, %v3589, %v3598
        %vm3601 = vcmp.eq.f32.partialorder %v3589, 0.0
        %v3602 = vand.u32 %v3589, 2147483648
        %v3603 = vsel %vm3601, %v3602, %v3600
        %v3604 = vrcp.pop %v3596
        %v3605 = vmul.f32 %v3578, %v3604
        %v3606 = vrcp.pop %v3603
        %v3607 = vmul.f32 %v3579, %v3606
        %v3608 = vld [vmem:[%s12] sm:$0x1]
        %v3610 = vlaneseq
        %v3611 = vshrl.u32 %v3610, 7
        %v3612 = vsub.s32 0, %v3611
        %v3613 = vrot.slane %v3608, %v3612
        %v3615 = vmul.f32 %v3613, %v3605
        %v3616 = vmul.f32 %v3613, %v3607
        %v3617 = vld [vmem:[%s13] sm:$0x1]
        %v3619 = vlaneseq
        %v3620 = vshrl.u32 %v3619, 7
        %v3621 = vsub.s32 0, %v3620
        %v3622 = vrot.slane %v3617, %v3621
        %v3624 = vadd.f32 %v3615, %v3622
        %v3625 = vadd.f32 %v3616, %v3622
        %v3626 = vadd.f32 %v1052, %v3624
        %3627 = vadd.xlane.f32.xlu0 %v3626
        %v3628 = vpop.xlane.xlu0 %3627
        %v3629 = vmul.f32 %v3628, %v1020
        %v3630 = vsub.f32 %v3626, %v3629
        %v3631 = vmul.f32 %v3630, %v3630
        %3632 = vadd.xlane.f32.xlu0 %v3631
        %v3633 = vpop.xlane.xlu0 %3632
        %v3634 = vmul.f32 %v3633, %v1020
        %v3635 = vadd.f32 %v3634, 1e-12
        %v3636 = vrsqrt.pop %v3635
        %v3637 = vmul.f32 %v3635, %v3636
        %vm3638 = vcmp.eq.f32.partialorder %v3635, inf
        %v3639 = vsel %vm3638, %v3635, %v3637
        %vm3640 = vcmp.eq.f32.partialorder %v3635, 0.0
        %v3641 = vand.u32 %v3635, 2147483648
        %v3642 = vsel %vm3640, %v3641, %v3639
        %v3643 = vrcp.pop %v3642
        %v3644 = vmul.f32 %v3630, %v3643
        %v3645 = vld [vmem:[%s2] sm:$0x1]
        %v3647 = vlaneseq
        %v3648 = vshrl.u32 %v3647, 7
        %v3649 = vsub.s32 0, %v3648
        %v3650 = vrot.slane %v3645, %v3649
        %v3652 = vmul.f32 %v3650, %v3644
        %v3653 = vld [vmem:[%s3] sm:$0x1]
        %v3655 = vlaneseq
        %v3656 = vshrl.u32 %v3655, 7
        %v3657 = vsub.s32 0, %v3656
        %v3658 = vrot.slane %v3653, %v3657
        %v3660 = vadd.f32 %v3652, %v3658
        %v3661 = vpack.c.bf16 %v3660, %v3660
        %v3662 = vld [vmem:[#allocation16] sm:$0xff]
        %v3663 = vld [vmem:[#allocation16 + $0x8] sm:$0xff]
        %v3664 = vld [vmem:[#allocation16 + $0x10] sm:$0xff]
        %v3665 = vld [vmem:[#allocation16 + $0x18] sm:$0xff]
        %v3666 = vld [vmem:[#allocation16 + $0x20] sm:$0xff]
        %v3667 = vld [vmem:[#allocation16 + $0x28] sm:$0xff]
        %v3668 = vld [vmem:[#allocation16 + $0x30] sm:$0xff]
        %v3669 = vld [vmem:[#allocation16 + $0x38] sm:$0xff]
        %v3670 = vld [vmem:[#allocation16 + $0x40] sm:$0xff]
        %v3671 = vld [vmem:[#allocation16 + $0x48] sm:$0xff]
        %v3672 = vld [vmem:[#allocation16 + $0x50] sm:$0xff]
        %v3673 = vld [vmem:[#allocation16 + $0x58] sm:$0xff]
        %v3674 = vld [vmem:[#allocation16 + $0x60] sm:$0xff]
        %v3675 = vld [vmem:[#allocation16 + $0x68] sm:$0xff]
        %v3676 = vld [vmem:[#allocation16 + $0x70] sm:$0xff]
        %v3677 = vld [vmem:[#allocation16 + $0x78] sm:$0xff]
        %v3678 = vld [vmem:[%s21] sm:$0x3]
        %v3680 = vlaneseq
        %v3681 = vshrl.u32 %v3680, 7
        %v3682 = vsub.s32 0, %v3681
        %v3683 = vrot.slane %v3678, %v3682
        %v3684 = vlaneseq
        %v3685 = vshrl.u32 %v3684, 7
        %v3686 = vsub.s32 1, %v3685
        %v3687 = vrot.slane %v3678, %v3686
        %v3706 = vunpack.c.l.b16 %v3662
        %v3707 = vunpack.c.h.b16 %v3662
        %v3708 = vunpack.c.l.b16 %v3663
        %v3709 = vunpack.c.h.b16 %v3663
        %v3710 = vunpack.c.l.b16 %v3664
        %v3711 = vunpack.c.h.b16 %v3664
        %v3712 = vunpack.c.l.b16 %v3665
        %v3713 = vunpack.c.h.b16 %v3665
        %v3714 = vunpack.c.l.b16 %v3666
        %v3715 = vunpack.c.h.b16 %v3666
        %v3716 = vunpack.c.l.b16 %v3667
        %v3717 = vunpack.c.h.b16 %v3667
        %v3718 = vunpack.c.l.b16 %v3668
        %v3719 = vunpack.c.h.b16 %v3668
        %v3720 = vunpack.c.l.b16 %v3669
        %v3721 = vunpack.c.h.b16 %v3669
        %v3722 = vunpack.c.l.b16 %v3670
        %v3723 = vunpack.c.h.b16 %v3670
        %v3724 = vunpack.c.l.b16 %v3671
        %v3725 = vunpack.c.h.b16 %v3671
        %v3726 = vunpack.c.l.b16 %v3672
        %v3727 = vunpack.c.h.b16 %v3672
        %v3728 = vunpack.c.l.b16 %v3673
        %v3729 = vunpack.c.h.b16 %v3673
        %v3730 = vunpack.c.l.b16 %v3674
        %v3731 = vunpack.c.h.b16 %v3674
        %v3732 = vunpack.c.l.b16 %v3675
        %v3733 = vunpack.c.h.b16 %v3675
        %v3734 = vunpack.c.l.b16 %v3676
        %v3735 = vunpack.c.h.b16 %v3676
        %v3736 = vunpack.c.l.b16 %v3677
        %v3737 = vunpack.c.h.b16 %v3677
        %v3738 = vpack.c.b16 %v3708, %v3706
        %v3739 = vpack.c.b16 %v3709, %v3707
        %v3740 = vpack.c.b16 %v3712, %v3710
        %v3741 = vpack.c.b16 %v3713, %v3711
        %v3742 = vpack.c.b16 %v3716, %v3714
        %v3743 = vpack.c.b16 %v3717, %v3715
        %v3744 = vpack.c.b16 %v3720, %v3718
        %v3745 = vpack.c.b16 %v3721, %v3719
        %v3746 = vpack.c.b16 %v3724, %v3722
        %v3747 = vpack.c.b16 %v3725, %v3723
        %v3748 = vpack.c.b16 %v3728, %v3726
        %v3749 = vpack.c.b16 %v3729, %v3727
        %v3750 = vpack.c.b16 %v3732, %v3730
        %v3751 = vpack.c.b16 %v3733, %v3731
        %v3752 = vpack.c.b16 %v3736, %v3734
        %v3753 = vpack.c.b16 %v3737, %v3735
        %3770 = vmatprep.subr.bf16.mxu0 %v3739
        %3771 = vmatpush1.bf16.msra.mxu0 %v3738
        %3772 = vmatprep.subr.bf16.mxu0 %v3741
        %3773 = vmatpush1.bf16.msra.mxu0 %v3740
        %3774 = vmatprep.subr.bf16.mxu0 %v3743
        %3775 = vmatpush1.bf16.msra.mxu0 %v3742
        %3776 = vmatprep.subr.bf16.mxu0 %v3745
        %3777 = vmatpush1.bf16.msra.mxu0 %v3744
        %3778 = vmatprep.subr.bf16.mxu0 %v3747
        %3779 = vmatpush1.bf16.msra.mxu0 %v3746
        %3780 = vmatprep.subr.bf16.mxu0 %v3749
        %3781 = vmatpush1.bf16.msra.mxu0 %v3748
        %3782 = vmatprep.subr.bf16.mxu0 %v3751
        %3783 = vmatpush1.bf16.msra.mxu0 %v3750
        %3784 = vmatprep.subr.bf16.mxu0 %v3753
        %3785 = vmatpush1.bf16.msra.mxu0 %v3752
        %3786 = vmatprep.subr.bf16.mxu0 0
        %3787 = vmatpush1.bf16.msra.mxu0 0
        %3788 = vmatprep.subr.bf16.mxu0 0
        %3789 = vmatpush1.bf16.msra.mxu0 0
        %3790 = vmatprep.subr.bf16.mxu0 0
        %3791 = vmatpush1.bf16.msra.mxu0 0
        %3792 = vmatprep.subr.bf16.mxu0 0
        %3793 = vmatpush1.bf16.msra.mxu0 0
        %3794 = vmatprep.subr.bf16.mxu0 0
        %3795 = vmatpush1.bf16.msra.mxu0 0
        %3796 = vmatprep.subr.bf16.mxu0 0
        %3797 = vmatpush1.bf16.msra.mxu0 0
        %3798 = vmatprep.subr.bf16.mxu0 0
        %3799 = vmatpush1.bf16.msra.mxu0 0
        %3800 = vmatprep.subr.bf16.mxu0 0
        %3801 = vmatpush1.bf16.msra.mxu0 0
        %3802 = vmatprep.mubr.bf16.mxu0 0
        %3803 = vmatmul.mubr.bf16.gmra.mrb[0].mxu0 %v3661
        %v3804 = vpop.f32.mrb[0].mxu0
        %v3805 = vadd.f32 %v3683, %v3804
        %v3806 = vpop.f32.mrb[0].mxu0
        %v3807 = vadd.f32 %v3687, %v3806
        %v3808 = vpop.f32.mrb[0].mxu0
        %v3809 = vpop.f32.mrb[0].mxu0
        %3810 = vdwg.mxu0
        %v3811 = vmax.f32 %v3805, 0.0
        %v3812 = vmax.f32 %v3807, 0.0
        %v3813 = vpack.c.bf16 %v3811, %v3811
        %v3814 = vpack.c.bf16 %v3812, %v3812
        %v3815 = vld [vmem:[#allocation17] sm:$0xf]
        %v3816 = vld [vmem:[#allocation17 + $0x4] sm:$0xf]
        %v3817 = vld [vmem:[#allocation17 + $0x8] sm:$0xf]
        %v3818 = vld [vmem:[#allocation17 + $0xc] sm:$0xf]
        %v3819 = vld [vmem:[#allocation17 + $0x10] sm:$0xf]
        %v3820 = vld [vmem:[#allocation17 + $0x14] sm:$0xf]
        %v3821 = vld [vmem:[#allocation17 + $0x18] sm:$0xf]
        %v3822 = vld [vmem:[#allocation17 + $0x1c] sm:$0xf]
        %v3823 = vld [vmem:[#allocation17 + $0x20] sm:$0xf]
        %v3824 = vld [vmem:[#allocation17 + $0x24] sm:$0xf]
        %v3825 = vld [vmem:[#allocation17 + $0x28] sm:$0xf]
        %v3826 = vld [vmem:[#allocation17 + $0x2c] sm:$0xf]
        %v3827 = vld [vmem:[#allocation17 + $0x30] sm:$0xf]
        %v3828 = vld [vmem:[#allocation17 + $0x34] sm:$0xf]
        %v3829 = vld [vmem:[#allocation17 + $0x38] sm:$0xf]
        %v3830 = vld [vmem:[#allocation17 + $0x3c] sm:$0xf]
        %v3831 = vld [vmem:[#allocation17 + $0x40] sm:$0xf]
        %v3832 = vld [vmem:[#allocation17 + $0x44] sm:$0xf]
        %v3833 = vld [vmem:[#allocation17 + $0x48] sm:$0xf]
        %v3834 = vld [vmem:[#allocation17 + $0x4c] sm:$0xf]
        %v3835 = vld [vmem:[#allocation17 + $0x50] sm:$0xf]
        %v3836 = vld [vmem:[#allocation17 + $0x54] sm:$0xf]
        %v3837 = vld [vmem:[#allocation17 + $0x58] sm:$0xf]
        %v3838 = vld [vmem:[#allocation17 + $0x5c] sm:$0xf]
        %v3839 = vld [vmem:[#allocation17 + $0x60] sm:$0xf]
        %v3840 = vld [vmem:[#allocation17 + $0x64] sm:$0xf]
        %v3841 = vld [vmem:[#allocation17 + $0x68] sm:$0xf]
        %v3842 = vld [vmem:[#allocation17 + $0x6c] sm:$0xf]
        %v3843 = vld [vmem:[#allocation17 + $0x70] sm:$0xf]
        %v3844 = vld [vmem:[#allocation17 + $0x74] sm:$0xf]
        %v3845 = vld [vmem:[#allocation17 + $0x78] sm:$0xf]
        %v3846 = vld [vmem:[#allocation17 + $0x7c] sm:$0xf]
        %v3847 = vld [vmem:[%s23] sm:$0x1]
        %v3849 = vlaneseq
        %v3850 = vshrl.u32 %v3849, 7
        %v3851 = vsub.s32 0, %v3850
        %v3852 = vrot.slane %v3847, %v3851
        %v3886 = vunpack.c.l.b16 %v3815
        %v3887 = vunpack.c.l.b16 %v3816
        %v3888 = vunpack.c.l.b16 %v3817
        %v3889 = vunpack.c.l.b16 %v3818
        %v3890 = vunpack.c.l.b16 %v3819
        %v3891 = vunpack.c.l.b16 %v3820
        %v3892 = vunpack.c.l.b16 %v3821
        %v3893 = vunpack.c.l.b16 %v3822
        %v3894 = vunpack.c.l.b16 %v3823
        %v3895 = vunpack.c.l.b16 %v3824
        %v3896 = vunpack.c.l.b16 %v3825
        %v3897 = vunpack.c.l.b16 %v3826
        %v3898 = vunpack.c.l.b16 %v3827
        %v3899 = vunpack.c.l.b16 %v3828
        %v3900 = vunpack.c.l.b16 %v3829
        %v3901 = vunpack.c.l.b16 %v3830
        %v3902 = vunpack.c.l.b16 %v3831
        %v3903 = vunpack.c.l.b16 %v3832
        %v3904 = vunpack.c.l.b16 %v3833
        %v3905 = vunpack.c.l.b16 %v3834
        %v3906 = vunpack.c.l.b16 %v3835
        %v3907 = vunpack.c.l.b16 %v3836
        %v3908 = vunpack.c.l.b16 %v3837
        %v3909 = vunpack.c.l.b16 %v3838
        %v3910 = vunpack.c.l.b16 %v3839
        %v3911 = vunpack.c.l.b16 %v3840
        %v3912 = vunpack.c.l.b16 %v3841
        %v3913 = vunpack.c.l.b16 %v3842
        %v3914 = vunpack.c.l.b16 %v3843
        %v3915 = vunpack.c.l.b16 %v3844
        %v3916 = vunpack.c.l.b16 %v3845
        %v3917 = vunpack.c.l.b16 %v3846
        %v3918 = vpack.c.b16 %v3887, %v3886
        %v3919 = vpack.c.b16 %v3889, %v3888
        %v3920 = vpack.c.b16 %v3891, %v3890
        %v3921 = vpack.c.b16 %v3893, %v3892
        %v3922 = vpack.c.b16 %v3895, %v3894
        %v3923 = vpack.c.b16 %v3897, %v3896
        %v3924 = vpack.c.b16 %v3899, %v3898
        %v3925 = vpack.c.b16 %v3901, %v3900
        %v3926 = vpack.c.b16 %v3903, %v3902
        %v3927 = vpack.c.b16 %v3905, %v3904
        %v3928 = vpack.c.b16 %v3907, %v3906
        %v3929 = vpack.c.b16 %v3909, %v3908
        %v3930 = vpack.c.b16 %v3911, %v3910
        %v3931 = vpack.c.b16 %v3913, %v3912
        %v3932 = vpack.c.b16 %v3915, %v3914
        %v3933 = vpack.c.b16 %v3917, %v3916
        %3950 = vmatprep.subr.bf16.mxu0 0
        %3951 = vmatpush1.bf16.msra.mxu0 %v3918
        %3952 = vmatprep.subr.bf16.mxu0 0
        %3953 = vmatpush1.bf16.msra.mxu0 %v3919
        %3954 = vmatprep.subr.bf16.mxu0 0
        %3955 = vmatpush1.bf16.msra.mxu0 %v3920
        %3956 = vmatprep.subr.bf16.mxu0 0
        %3957 = vmatpush1.bf16.msra.mxu0 %v3921
        %3958 = vmatprep.subr.bf16.mxu0 0
        %3959 = vmatpush1.bf16.msra.mxu0 %v3922
        %3960 = vmatprep.subr.bf16.mxu0 0
        %3961 = vmatpush1.bf16.msra.mxu0 %v3923
        %3962 = vmatprep.subr.bf16.mxu0 0
        %3963 = vmatpush1.bf16.msra.mxu0 %v3924
        %3964 = vmatprep.subr.bf16.mxu0 0
        %3965 = vmatpush1.bf16.msra.mxu0 %v3925
        %3966 = vmatprep.subr.bf16.mxu0 0
        %3967 = vmatpush1.bf16.msra.mxu0 %v3926
        %3968 = vmatprep.subr.bf16.mxu0 0
        %3969 = vmatpush1.bf16.msra.mxu0 %v3927
        %3970 = vmatprep.subr.bf16.mxu0 0
        %3971 = vmatpush1.bf16.msra.mxu0 %v3928
        %3972 = vmatprep.subr.bf16.mxu0 0
        %3973 = vmatpush1.bf16.msra.mxu0 %v3929
        %3974 = vmatprep.subr.bf16.mxu0 0
        %3975 = vmatpush1.bf16.msra.mxu0 %v3930
        %3976 = vmatprep.subr.bf16.mxu0 0
        %3977 = vmatpush1.bf16.msra.mxu0 %v3931
        %3978 = vmatprep.subr.bf16.mxu0 0
        %3979 = vmatpush1.bf16.msra.mxu0 %v3932
        %3980 = vmatprep.subr.bf16.mxu0 0
        %3981 = vmatpush1.bf16.msra.mxu0 %v3933
        %3982 = vmatprep.mubr.bf16.mxu0 %v3814
        %3983 = vmatmul.mubr.bf16.gmra.mrb[0].mxu0 %v3813
        %v3984 = vpop.f32.mrb[0].mxu0
        %v3985 = vadd.f32 %v3852, %v3984
        %v3986 = vpop.f32.mrb[0].mxu0
        %v3987 = vpop.f32.mrb[0].mxu0
        %v3988 = vpop.f32.mrb[0].mxu0
        %3989 = vdwg.mxu0
        %v3990 = vadd.f32 %v3626, %v3985
        %3991 = vst [vmem:[%s993] sm:$0xff] %v3990
        %v3992 = vpack.c.bf16 %v3625, %v3625
        %v3993 = vld [vmem:[#allocation13] sm:$0xff]
        %v3994 = vld [vmem:[#allocation13 + $0x8] sm:$0xff]
        %v3995 = vld [vmem:[#allocation13 + $0x10] sm:$0xff]
        %v3996 = vld [vmem:[#allocation13 + $0x18] sm:$0xff]
        %v3997 = vld [vmem:[#allocation13 + $0x20] sm:$0xff]
        %v3998 = vld [vmem:[#allocation13 + $0x28] sm:$0xff]
        %v3999 = vld [vmem:[#allocation13 + $0x30] sm:$0xff]
        %v4000 = vld [vmem:[#allocation13 + $0x38] sm:$0xff]
        %v4001 = vld [vmem:[#allocation13 + $0x40] sm:$0xff]
        %v4002 = vld [vmem:[#allocation13 + $0x48] sm:$0xff]
        %v4003 = vld [vmem:[#allocation13 + $0x50] sm:$0xff]
        %v4004 = vld [vmem:[#allocation13 + $0x58] sm:$0xff]
        %v4005 = vld [vmem:[#allocation13 + $0x60] sm:$0xff]
        %v4006 = vld [vmem:[#allocation13 + $0x68] sm:$0xff]
        %v4007 = vld [vmem:[#allocation13 + $0x70] sm:$0xff]
        %v4008 = vld [vmem:[#allocation13 + $0x78] sm:$0xff]
        %v4009 = vld [vmem:[%s15] sm:$0x3]
        %v4011 = vlaneseq
        %v4012 = vshrl.u32 %v4011, 7
        %v4013 = vsub.s32 0, %v4012
        %v4014 = vrot.slane %v4009, %v4013
        %v4015 = vlaneseq
        %v4016 = vshrl.u32 %v4015, 7
        %v4017 = vsub.s32 1, %v4016
        %v4018 = vrot.slane %v4009, %v4017
        %v4037 = vunpack.c.l.b16 %v3993
        %v4038 = vunpack.c.h.b16 %v3993
        %v4039 = vunpack.c.l.b16 %v3994
        %v4040 = vunpack.c.h.b16 %v3994
        %v4041 = vunpack.c.l.b16 %v3995
        %v4042 = vunpack.c.h.b16 %v3995
        %v4043 = vunpack.c.l.b16 %v3996
        %v4044 = vunpack.c.h.b16 %v3996
        %v4045 = vunpack.c.l.b16 %v3997
        %v4046 = vunpack.c.h.b16 %v3997
        %v4047 = vunpack.c.l.b16 %v3998
        %v4048 = vunpack.c.h.b16 %v3998
        %v4049 = vunpack.c.l.b16 %v3999
        %v4050 = vunpack.c.h.b16 %v3999
        %v4051 = vunpack.c.l.b16 %v4000
        %v4052 = vunpack.c.h.b16 %v4000
        %v4053 = vunpack.c.l.b16 %v4001
        %v4054 = vunpack.c.h.b16 %v4001
        %v4055 = vunpack.c.l.b16 %v4002
        %v4056 = vunpack.c.h.b16 %v4002
        %v4057 = vunpack.c.l.b16 %v4003
        %v4058 = vunpack.c.h.b16 %v4003
        %v4059 = vunpack.c.l.b16 %v4004
        %v4060 = vunpack.c.h.b16 %v4004
        %v4061 = vunpack.c.l.b16 %v4005
        %v4062 = vunpack.c.h.b16 %v4005
        %v4063 = vunpack.c.l.b16 %v4006
        %v4064 = vunpack.c.h.b16 %v4006
        %v4065 = vunpack.c.l.b16 %v4007
        %v4066 = vunpack.c.h.b16 %v4007
        %v4067 = vunpack.c.l.b16 %v4008
        %v4068 = vunpack.c.h.b16 %v4008
        %v4069 = vpack.c.b16 %v4039, %v4037
        %v4070 = vpack.c.b16 %v4040, %v4038
        %v4071 = vpack.c.b16 %v4043, %v4041
        %v4072 = vpack.c.b16 %v4044, %v4042
        %v4073 = vpack.c.b16 %v4047, %v4045
        %v4074 = vpack.c.b16 %v4048, %v4046
        %v4075 = vpack.c.b16 %v4051, %v4049
        %v4076 = vpack.c.b16 %v4052, %v4050
        %v4077 = vpack.c.b16 %v4055, %v4053
        %v4078 = vpack.c.b16 %v4056, %v4054
        %v4079 = vpack.c.b16 %v4059, %v4057
        %v4080 = vpack.c.b16 %v4060, %v4058
        %v4081 = vpack.c.b16 %v4063, %v4061
        %v4082 = vpack.c.b16 %v4064, %v4062
        %v4083 = vpack.c.b16 %v4067, %v4065
        %v4084 = vpack.c.b16 %v4068, %v4066
        %4101 = vmatprep.subr.bf16.mxu0 %v4070
        %4102 = vmatpush1.bf16.msra.mxu0 %v4069
        %4103 = vmatprep.subr.bf16.mxu0 %v4072
        %4104 = vmatpush1.bf16.msra.mxu0 %v4071
        %4105 = vmatprep.subr.bf16.mxu0 %v4074
        %4106 = vmatpush1.bf16.msra.mxu0 %v4073
        %4107 = vmatprep.subr.bf16.mxu0 %v4076
        %4108 = vmatpush1.bf16.msra.mxu0 %v4075
        %4109 = vmatprep.subr.bf16.mxu0 %v4078
        %4110 = vmatpush1.bf16.msra.mxu0 %v4077
        %4111 = vmatprep.subr.bf16.mxu0 %v4080
        %4112 = vmatpush1.bf16.msra.mxu0 %v4079
        %4113 = vmatprep.subr.bf16.mxu0 %v4082
        %4114 = vmatpush1.bf16.msra.mxu0 %v4081
        %4115 = vmatprep.subr.bf16.mxu0 %v4084
        %4116 = vmatpush1.bf16.msra.mxu0 %v4083
        %4117 = vmatprep.subr.bf16.mxu0 0
        %4118 = vmatpush1.bf16.msra.mxu0 0
        %4119 = vmatprep.subr.bf16.mxu0 0
        %4120 = vmatpush1.bf16.msra.mxu0 0
        %4121 = vmatprep.subr.bf16.mxu0 0
        %4122 = vmatpush1.bf16.msra.mxu0 0
        %4123 = vmatprep.subr.bf16.mxu0 0
        %4124 = vmatpush1.bf16.msra.mxu0 0
        %4125 = vmatprep.subr.bf16.mxu0 0
        %4126 = vmatpush1.bf16.msra.mxu0 0
        %4127 = vmatprep.subr.bf16.mxu0 0
        %4128 = vmatpush1.bf16.msra.mxu0 0
        %4129 = vmatprep.subr.bf16.mxu0 0
        %4130 = vmatpush1.bf16.msra.mxu0 0
        %4131 = vmatprep.subr.bf16.mxu0 0
        %4132 = vmatpush1.bf16.msra.mxu0 0
        %4133 = vmatprep.mubr.bf16.mxu0 0
        %4134 = vmatmul.mubr.bf16.gmra.mrb[0].mxu0 %v3992
        %v4135 = vpop.f32.mrb[0].mxu0
        %v4136 = vadd.f32 %v4014, %v4135
        %v4137 = vpop.f32.mrb[0].mxu0
        %v4138 = vadd.f32 %v4018, %v4137
        %v4139 = vpop.f32.mrb[0].mxu0
        %v4140 = vpop.f32.mrb[0].mxu0
        %4141 = vdwg.mxu0
        %v4142 = vmax.f32 %v4136, 0.0
        %v4143 = vmax.f32 %v4138, 0.0
        %v4144 = vpack.c.bf16 %v4142, %v4142
        %v4145 = vpack.c.bf16 %v4143, %v4143
        %v4146 = vld [vmem:[#allocation14] sm:$0xf]
        %v4147 = vld [vmem:[#allocation14 + $0x4] sm:$0xf]
        %v4148 = vld [vmem:[#allocation14 + $0x8] sm:$0xf]
        %v4149 = vld [vmem:[#allocation14 + $0xc] sm:$0xf]
        %v4150 = vld [vmem:[#allocation14 + $0x10] sm:$0xf]
        %v4151 = vld [vmem:[#allocation14 + $0x14] sm:$0xf]
        %v4152 = vld [vmem:[#allocation14 + $0x18] sm:$0xf]
        %v4153 = vld [vmem:[#allocation14 + $0x1c] sm:$0xf]
        %v4154 = vld [vmem:[#allocation14 + $0x20] sm:$0xf]
        %v4155 = vld [vmem:[#allocation14 + $0x24] sm:$0xf]
        %v4156 = vld [vmem:[#allocation14 + $0x28] sm:$0xf]
        %v4157 = vld [vmem:[#allocation14 + $0x2c] sm:$0xf]
        %v4158 = vld [vmem:[#allocation14 + $0x30] sm:$0xf]
        %v4159 = vld [vmem:[#allocation14 + $0x34] sm:$0xf]
        %v4160 = vld [vmem:[#allocation14 + $0x38] sm:$0xf]
        %v4161 = vld [vmem:[#allocation14 + $0x3c] sm:$0xf]
        %v4162 = vld [vmem:[#allocation14 + $0x40] sm:$0xf]
        %v4163 = vld [vmem:[#allocation14 + $0x44] sm:$0xf]
        %v4164 = vld [vmem:[#allocation14 + $0x48] sm:$0xf]
        %v4165 = vld [vmem:[#allocation14 + $0x4c] sm:$0xf]
        %v4166 = vld [vmem:[#allocation14 + $0x50] sm:$0xf]
        %v4167 = vld [vmem:[#allocation14 + $0x54] sm:$0xf]
        %v4168 = vld [vmem:[#allocation14 + $0x58] sm:$0xf]
        %v4169 = vld [vmem:[#allocation14 + $0x5c] sm:$0xf]
        %v4170 = vld [vmem:[#allocation14 + $0x60] sm:$0xf]
        %v4171 = vld [vmem:[#allocation14 + $0x64] sm:$0xf]
        %v4172 = vld [vmem:[#allocation14 + $0x68] sm:$0xf]
        %v4173 = vld [vmem:[#allocation14 + $0x6c] sm:$0xf]
        %v4174 = vld [vmem:[#allocation14 + $0x70] sm:$0xf]
        %v4175 = vld [vmem:[#allocation14 + $0x74] sm:$0xf]
        %v4176 = vld [vmem:[#allocation14 + $0x78] sm:$0xf]
        %v4177 = vld [vmem:[#allocation14 + $0x7c] sm:$0xf]
        %v4178 = vld [vmem:[%s17] sm:$0x1]
        %v4180 = vlaneseq
        %v4181 = vshrl.u32 %v4180, 7
        %v4182 = vsub.s32 0, %v4181
        %v4183 = vrot.slane %v4178, %v4182
        %v4217 = vunpack.c.l.b16 %v4146
        %v4218 = vunpack.c.l.b16 %v4147
        %v4219 = vunpack.c.l.b16 %v4148
        %v4220 = vunpack.c.l.b16 %v4149
        %v4221 = vunpack.c.l.b16 %v4150
        %v4222 = vunpack.c.l.b16 %v4151
        %v4223 = vunpack.c.l.b16 %v4152
        %v4224 = vunpack.c.l.b16 %v4153
        %v4225 = vunpack.c.l.b16 %v4154
        %v4226 = vunpack.c.l.b16 %v4155
        %v4227 = vunpack.c.l.b16 %v4156
        %v4228 = vunpack.c.l.b16 %v4157
        %v4229 = vunpack.c.l.b16 %v4158
        %v4230 = vunpack.c.l.b16 %v4159
        %v4231 = vunpack.c.l.b16 %v4160
        %v4232 = vunpack.c.l.b16 %v4161
        %v4233 = vunpack.c.l.b16 %v4162
        %v4234 = vunpack.c.l.b16 %v4163
        %v4235 = vunpack.c.l.b16 %v4164
        %v4236 = vunpack.c.l.b16 %v4165
        %v4237 = vunpack.c.l.b16 %v4166
        %v4238 = vunpack.c.l.b16 %v4167
        %v4239 = vunpack.c.l.b16 %v4168
        %v4240 = vunpack.c.l.b16 %v4169
        %v4241 = vunpack.c.l.b16 %v4170
        %v4242 = vunpack.c.l.b16 %v4171
        %v4243 = vunpack.c.l.b16 %v4172
        %v4244 = vunpack.c.l.b16 %v4173
        %v4245 = vunpack.c.l.b16 %v4174
        %v4246 = vunpack.c.l.b16 %v4175
        %v4247 = vunpack.c.l.b16 %v4176
        %v4248 = vunpack.c.l.b16 %v4177
        %v4249 = vpack.c.b16 %v4218, %v4217
        %v4250 = vpack.c.b16 %v4220, %v4219
        %v4251 = vpack.c.b16 %v4222, %v4221
        %v4252 = vpack.c.b16 %v4224, %v4223
        %v4253 = vpack.c.b16 %v4226, %v4225
        %v4254 = vpack.c.b16 %v4228, %v4227
        %v4255 = vpack.c.b16 %v4230, %v4229
        %v4256 = vpack.c.b16 %v4232, %v4231
        %v4257 = vpack.c.b16 %v4234, %v4233
        %v4258 = vpack.c.b16 %v4236, %v4235
        %v4259 = vpack.c.b16 %v4238, %v4237
        %v4260 = vpack.c.b16 %v4240, %v4239
        %v4261 = vpack.c.b16 %v4242, %v4241
        %v4262 = vpack.c.b16 %v4244, %v4243
        %v4263 = vpack.c.b16 %v4246, %v4245
        %v4264 = vpack.c.b16 %v4248, %v4247
        %4281 = vmatprep.subr.bf16.mxu0 0
        %4282 = vmatpush1.bf16.msra.mxu0 %v4249
        %4283 = vmatprep.subr.bf16.mxu0 0
        %4284 = vmatpush1.bf16.msra.mxu0 %v4250
        %4285 = vmatprep.subr.bf16.mxu0 0
        %4286 = vmatpush1.bf16.msra.mxu0 %v4251
        %4287 = vmatprep.subr.bf16.mxu0 0
        %4288 = vmatpush1.bf16.msra.mxu0 %v4252
        %4289 = vmatprep.subr.bf16.mxu0 0
        %4290 = vmatpush1.bf16.msra.mxu0 %v4253
        %4291 = vmatprep.subr.bf16.mxu0 0
        %4292 = vmatpush1.bf16.msra.mxu0 %v4254
        %4293 = vmatprep.subr.bf16.mxu0 0
        %4294 = vmatpush1.bf16.msra.mxu0 %v4255
        %4295 = vmatprep.subr.bf16.mxu0 0
        %4296 = vmatpush1.bf16.msra.mxu0 %v4256
        %4297 = vmatprep.subr.bf16.mxu0 0
        %4298 = vmatpush1.bf16.msra.mxu0 %v4257
        %4299 = vmatprep.subr.bf16.mxu0 0
        %4300 = vmatpush1.bf16.msra.mxu0 %v4258
        %4301 = vmatprep.subr.bf16.mxu0 0
        %4302 = vmatpush1.bf16.msra.mxu0 %v4259
        %4303 = vmatprep.subr.bf16.mxu0 0
        %4304 = vmatpush1.bf16.msra.mxu0 %v4260
        %4305 = vmatprep.subr.bf16.mxu0 0
        %4306 = vmatpush1.bf16.msra.mxu0 %v4261
        %4307 = vmatprep.subr.bf16.mxu0 0
        %4308 = vmatpush1.bf16.msra.mxu0 %v4262
        %4309 = vmatprep.subr.bf16.mxu0 0
        %4310 = vmatpush1.bf16.msra.mxu0 %v4263
        %4311 = vmatprep.subr.bf16.mxu0 0
        %4312 = vmatpush1.bf16.msra.mxu0 %v4264
        %4313 = vmatprep.mubr.bf16.mxu0 %v4145
        %4314 = vmatmul.mubr.bf16.gmra.mrb[0].mxu0 %v4144
        %v4315 = vpop.f32.mrb[0].mxu0
        %v4316 = vadd.f32 %v4183, %v4315
        %v4317 = vpop.f32.mrb[0].mxu0
        %v4318 = vpop.f32.mrb[0].mxu0
        %v4319 = vpop.f32.mrb[0].mxu0
        %4320 = vdwg.mxu0
        %v4321 = vadd.f32 %v4316, %v3625
        %4322 = vadd.xlane.f32.xlu0 %v4321
        %v4323 = vpop.xlane.xlu0 %4322
        %v4324 = vmul.f32 %v4323, %v1020
        %v4325 = vsub.f32 %v4321, %v4324
        %v4326 = vmul.f32 %v4325, %v4325
        %4327 = vadd.xlane.f32.xlu0 %v4326
        %v4328 = vpop.xlane.xlu0 %4327
        %v4329 = vmul.f32 %v4328, %v1020
        %v4330 = vadd.f32 %v4329, 1e-12
        %v4331 = vrsqrt.pop %v4330
        %v4332 = vmul.f32 %v4330, %v4331
        %vm4333 = vcmp.eq.f32.partialorder %v4330, inf
        %v4334 = vsel %vm4333, %v4330, %v4332
        %vm4335 = vcmp.eq.f32.partialorder %v4330, 0.0
        %v4336 = vand.u32 %v4330, 2147483648
        %v4337 = vsel %vm4335, %v4336, %v4334
        %v4338 = vrcp.pop %v4337
        %v4339 = vmul.f32 %v4325, %v4338
        %v4340 = vld [vmem:[%s18] sm:$0x1]
        %v4342 = vlaneseq
        %v4343 = vshrl.u32 %v4342, 7
        %v4344 = vsub.s32 0, %v4343
        %v4345 = vrot.slane %v4340, %v4344
        %v4347 = vmul.f32 %v4345, %v4339
        %v4348 = vld [vmem:[%s19] sm:$0x1]
        %v4350 = vlaneseq
        %v4351 = vshrl.u32 %v4350, 7
        %v4352 = vsub.s32 0, %v4351
        %v4353 = vrot.slane %v4348, %v4352
        %v4355 = vadd.f32 %v4347, %v4353
        %4356 = vst [vmem:[%s1000] sm:$0xff] %v4355
        %s4357 = sand.u32 %s580, 1
        %s4358 = scalar_lea.sflag [#allocation4], %s4357
        %s4359 = sand.u32 %s580, 1
        %s4360 = smul.addr %s4359, 8
        %s4361 = scalar_lea.vmem [#allocation19], %s4360
        %s4362 = sand.u32 %s58, 1
        %s4363 = scalar_lea.sflag [#allocation21], %s4362
        %s4364 = sand.u32 %s606, 1
        %s4365 = smul.addr %s4364, 8
        %s4366 = scalar_lea.vmem [#allocation20], %s4365
        %s4367 = sand.u32 %s58, 1
        %s4368 = scalar_lea.sflag [#allocation21], %s4367
        %s4369 = sand.u32 %s632, 1
        %s4370 = smul.addr %s4369, 32
        %s4371 = scalar_lea.vmem [#allocation22], %s4370
        %s4372 = sand.u32 %s658, 1
        %s4373 = scalar_lea.sflag [#allocation24], %s4372
        %s4374 = sand.u32 %s658, 1
        %s4375 = smul.addr %s4374, 32
        %s4376 = scalar_lea.vmem [#allocation23], %s4375
        // Predicated region
        $region157: #{tpu_custom_call.1} parent=115 // pred_check
          %p4377 = pneg %p590
        $region158: #{tpu_custom_call.1} parent=115 // pred_check_branch
          %4379 = sbr.rel (%p4377) target = $region160
        $region159: #{tpu_custom_call.1} parent=115 // pred_region
          %s4381 = ssub.s32 128, 128
          %4382 = vsyncadd %s4358, %s4381
          %s4383 = smul.addr %s58, 128
          %s4384 = scalar_lea.hbm %s24, %s4383
          %s4386 = sshll.u32 %s4361, 4
          %s4387 = int_to_ptr.vmem [resolvable:$true] %s4386
          %4389 = dma.vmem_to_hbm [thread:$0]  %s4387, 128, %s4384, %s4358
        $region160: #{tpu_custom_call.1} parent=115 // pred_fallthru
          _
        // Predicated region
        $region161: #{tpu_custom_call.1} parent=115 // pred_check
          %p4390 = pneg %p616
        $region162: #{tpu_custom_call.1} parent=115 // pred_check_branch
          %4392 = sbr.rel (%p4390) target = $region164
        $region163: #{tpu_custom_call.1} parent=115 // pred_region
          %s4394 = ssub.s32 128, 128
          %4395 = vsyncadd %s4363, %s4394
          %s4396 = smul.addr %s58, 128
          %s4397 = scalar_lea.hbm %s25, %s4396
          %s4399 = sshll.u32 %s4366, 4
          %s4400 = int_to_ptr.vmem [resolvable:$true] %s4399
          %4402 = dma.vmem_to_hbm [thread:$0]  %s4400, 128, %s4397, %s4363
        $region164: #{tpu_custom_call.1} parent=115 // pred_fallthru
          _
        // Predicated region
        $region165: #{tpu_custom_call.1} parent=115 // pred_check
          %p4403 = pneg %p642
        $region166: #{tpu_custom_call.1} parent=115 // pred_check_branch
          %4405 = sbr.rel (%p4403) target = $region168
        $region167: #{tpu_custom_call.1} parent=115 // pred_region
          %s4407 = ssub.s32 512, 512
          %4408 = vsyncadd %s4368, %s4407
          %s4409 = smul.addr %s58, 4
          %s4410 = smul.addr %s4409, 128
          %s4411 = scalar_lea.hbm %s26, %s4410
          %s4412 = sshll.u32 %s4371, 4
          %s4413 = int_to_ptr.vmem [resolvable:$true] %s4412
          %4418 = dma.vmem_to_hbm [thread:$0]  %s4413, 512, %s4411, %s4368, 128, 128, 8
        $region168: #{tpu_custom_call.1} parent=115 // pred_fallthru
          _
        // Predicated region
        $region169: #{tpu_custom_call.1} parent=115 // pred_check
          %p4419 = pneg %p668
        $region170: #{tpu_custom_call.1} parent=115 // pred_check_branch
          %4421 = sbr.rel (%p4419) target = $region172
        $region171: #{tpu_custom_call.1} parent=115 // pred_region
          %s4423 = ssub.s32 512, 512
          %4424 = vsyncadd %s4373, %s4423
          %s4425 = smul.addr %s58, 4
          %s4426 = smul.addr %s4425, 128
          %s4427 = scalar_lea.hbm %s27, %s4426
          %s4428 = sshll.u32 %s4376, 4
          %s4429 = int_to_ptr.vmem [resolvable:$true] %s4428
          %4434 = dma.vmem_to_hbm [thread:$0]  %s4429, 512, %s4427, %s4373, 128, 128, 8
        $region172: #{tpu_custom_call.1} parent=115 // pred_fallthru
          _
      $region116: #{tpu_custom_call.1} parent=5 // pred_fallthru
        _
      %p4435 = scmp.le.s32.totalorder 2, %s53
      // Predicated region
      $region173: #{tpu_custom_call.1} parent=5 // pred_check
        %p4436 = pneg %p4435
      $region174: #{tpu_custom_call.1} parent=5 // pred_check_branch
        %4438 = sbr.rel (%p4436) target = $region176
      $region175: #{tpu_custom_call.1} parent=5 // pred_region
        %s4439 = ssub.s32 %s53, 2
        // Predicated region
        $region177: #{tpu_custom_call.1} parent=175 // pred_check
          %p4440 = pneg %p596
        $region178: #{tpu_custom_call.1} parent=175 // pred_check_branch
          %4442 = sbr.rel (%p4440) target = $region180
        $region179: #{tpu_custom_call.1} parent=175 // pred_region
          %s4443 = sand.u32 %s581, 1
          %s4444 = scalar_lea.sflag [#allocation4], %s4443
          %s4445 = sand.u32 %s581, 1
          %s4446 = smul.addr %s4445, 8
          %s4447 = scalar_lea.vmem [#allocation19], %s4446
          %4448 = dma.done %s4444, 128
        $region180: #{tpu_custom_call.1} parent=175 // pred_fallthru
          _
        // Predicated region
        $region181: #{tpu_custom_call.1} parent=175 // pred_check
          %p4449 = pneg %p622
        $region182: #{tpu_custom_call.1} parent=175 // pred_check_branch
          %4451 = sbr.rel (%p4449) target = $region184
        $region183: #{tpu_custom_call.1} parent=175 // pred_region
          %s4452 = sand.u32 %s59, 1
          %s4453 = scalar_lea.sflag [#allocation21], %s4452
          %s4454 = sand.u32 %s607, 1
          %s4455 = smul.addr %s4454, 8
          %s4456 = scalar_lea.vmem [#allocation20], %s4455
          %4457 = dma.done %s4453, 128
        $region184: #{tpu_custom_call.1} parent=175 // pred_fallthru
          _
        // Predicated region
        $region185: #{tpu_custom_call.1} parent=175 // pred_check
          %p4458 = pneg %p648
        $region186: #{tpu_custom_call.1} parent=175 // pred_check_branch
          %4460 = sbr.rel (%p4458) target = $region188
        $region187: #{tpu_custom_call.1} parent=175 // pred_region
          %s4461 = sand.u32 %s59, 1
          %s4462 = scalar_lea.sflag [#allocation21], %s4461
          %s4463 = sand.u32 %s633, 1
          %s4464 = smul.addr %s4463, 32
          %s4465 = scalar_lea.vmem [#allocation22], %s4464
          %4466 = dma.done %s4462, 512
        $region188: #{tpu_custom_call.1} parent=175 // pred_fallthru
          _
        // Predicated region
        $region189: #{tpu_custom_call.1} parent=175 // pred_check
          %p4467 = pneg %p674
        $region190: #{tpu_custom_call.1} parent=175 // pred_check_branch
          %4469 = sbr.rel (%p4467) target = $region192
        $region191: #{tpu_custom_call.1} parent=175 // pred_region
          %s4470 = sand.u32 %s659, 1
          %s4471 = scalar_lea.sflag [#allocation24], %s4470
          %s4472 = sand.u32 %s659, 1
          %s4473 = smul.addr %s4472, 32
          %s4474 = scalar_lea.vmem [#allocation23], %s4473
          %4475 = dma.done %s4471, 512
        $region192: #{tpu_custom_call.1} parent=175 // pred_fallthru
          _
      $region176: #{tpu_custom_call.1} parent=5 // pred_fallthru
        _
    $region6: #{tpu_custom_call.1} parent=1 // loop_footer
      %s57 = sadd.s32 1, %s53
    $region7: #{tpu_custom_call.1} parent=1 // loop_footer_branch
      %52 = sbr.rel target = $region3
    $region8: #{tpu_custom_call.1} parent=1 // loop_exit
      _
    %4476 = vsyncpa [#allocation3], 1
    %s4477 = scalar_lea.sflag [#allocation3], 1
    %4478 = vsyncpa %s4477, 1
    %4479 = vsyncpa [#allocation6], 1
    %s4480 = scalar_lea.sflag [#allocation6], 1
    %4481 = vsyncpa %s4480, 1
    %4482 = vsyncpa [#allocation9], 1
    %4483 = vsyncpa [#allocation12], 1
    %4484 = vsyncpa [#allocation15], 1
    %4485 = vsyncpa [#allocation18], 1
    %4486 = vsyncpa [#allocation4], 1
    %s4487 = scalar_lea.sflag [#allocation4], 1
    %4488 = vsyncpa %s4487, 1
    %4489 = vsyncpa [#allocation21], 1
    %s4490 = scalar_lea.sflag [#allocation21], 1
    %4491 = vsyncpa %s4490, 1
    %4492 = vsyncpa [#allocation24], 1
    %s4493 = scalar_lea.sflag [#allocation24], 1
    %4494 = vsyncpa %s4493, 1

</llo_original>
